<compile_context>
chip_gen: v5e
topology: v5e:2x2
jax: 0.10.0
libtpu: 0.0.40
codegen_flags: <defaults>
</compile_context>

<pallas_src>
import functools

import jax
import jax.numpy as jnp
from jax.experimental import pallas as pl
from jax.experimental.pallas import tpu as pltpu

_BN_EPS = 1e-5
# Explicit scoped-VMEM budget: v5e's default is only 16 MiB; 32 MiB also leaves
# headroom on v7x (64 MiB physical).
_VMEM_LIMIT = 32 * 1024 * 1024


# ----------------------------------------------------------------------------
# Pass 1: BatchNorm batch statistics for BN1 and BN2 (tiled over NHW rows).
# ----------------------------------------------------------------------------
def _bn_stats_kernel(x_ref, g1_ref, be1_ref, w1_ref, b1_ref,
                     s1_ref, q1_ref, s2_ref, q2_ref, *, inv_rows, eps):
    phase = pl.program_id(0)
    row_tile = pl.program_id(1)

    @pl.when(jnp.logical_and(phase == 0, row_tile == 0))
    def _init():
        s1_ref[...] = jnp.zeros_like(s1_ref)
        q1_ref[...] = jnp.zeros_like(q1_ref)
        s2_ref[...] = jnp.zeros_like(s2_ref)
        q2_ref[...] = jnp.zeros_like(q2_ref)

    x = x_ref[...]                                   # (TILE, Cin) f32

    @pl.when(phase == 0)
    def _bn1_stats():
        # Single-pass statistics: per-channel sum and sum-of-squares (f32).
        s1_ref[...] += jnp.sum(x, axis=0, keepdims=True)
        q1_ref[...] += jnp.sum(x * x, axis=0, keepdims=True)

    @pl.when(phase == 1)
    def _bn2_stats():
        # Fold BN1 batch stats (complete after phase 0) into scale/shift.
        mu1 = s1_ref[...] * inv_rows
        var1 = q1_ref[...] * inv_rows - mu1 * mu1
        scale1 = g1_ref[...] * jax.lax.rsqrt(var1 + eps)
        shift1 = be1_ref[...] - mu1 * scale1
        a1 = jnp.maximum(x * scale1 + shift1, 0.0)
        # 1x1 conv on the MXU: bf16 operands, f32 accumulation.  y1 is only
        # needed for its statistics here -> recomputed, never written to HBM.
        y1 = jnp.dot(a1.astype(jnp.bfloat16), w1_ref[...],
                     preferred_element_type=jnp.float32) + b1_ref[...]
        s2_ref[...] += jnp.sum(y1, axis=0, keepdims=True)
        q2_ref[...] += jnp.sum(y1 * y1, axis=0, keepdims=True)


# ----------------------------------------------------------------------------
# Pass 2: fully fused BN1->ReLU->Conv1x1->BN2->ReLU->Conv3x3 + channel concat.
# ----------------------------------------------------------------------------
def _dense_layer_fused_kernel(x_ref, x_chw_ref, s1_ref, t1_ref, w1_ref,
                              s2_ref, t2_ref, w2t_ref, b2_ref,
                              o_ref, a2p_ref, *, width):
    hw, cin = x_ref.shape
    cmid = w1_ref.shape[1]
    pad = (a2p_ref.shape[0] - hw) // 2               # sublane-aligned, >= W+1

    # Fused channel concat: stream the input channels straight into the NCHW
    # output slab (lane-dense (Cin, HW) rows).  Removes the wrapper-side
    # jnp.concatenate (one full read+write of the output through HBM).
    o_ref[:cin, :] = x_chw_ref[...]

    x = x_ref[...]                                   # (HW, Cin) f32

    # BN1 (pre-folded scale/shift) + ReLU, then 1x1 conv on the MXU.
    a1 = jnp.maximum(x * s1_ref[...] + t1_ref[...], 0.0)
    # conv1 bias is folded into the BN2 shift (t2) in the wrapper -> no +b1.
    y1 = jnp.dot(a1.astype(jnp.bfloat16), w1_ref[...],
                 preferred_element_type=jnp.float32)

    # BN2 (pre-folded scale/shift, includes conv1 bias) + ReLU.
    a2 = jnp.maximum(y1 * s2_ref[...] + t2_ref[...], 0.0)   # (HW, Cmid) f32

    # Zero-padded VMEM copy of the activation: only the pad rows are zeroed
    # (the middle is fully overwritten by a2).  The y-boundary of the 3x3 conv
    # is handled by the zero rows; the x-boundary wrap is masked below.
    zeros_pad = jnp.zeros((pad, cmid), jnp.float32)
    a2p_ref[:pad, :] = zeros_pad
    a2p_ref[pad + hw:, :] = zeros_pad
    a2p_ref[pad:pad + hw, :] = a2

    col = jax.lax.broadcasted_iota(jnp.int32, (hw, 1), 0) % width
    has_left = col > 0
    has_right = col < (width - 1)

    # 3x3 conv (padding=1): nine statically shifted row windows ("im2col
    # taps"), one MXU matmul each (bf16 in, f32 accumulate).  Each tap matmul
    # is (G,Cmid)·(HW,Cmid)^T -> (G,HW)  (the q·k^T pattern), so the new
    # features land with HW on the lane axis: the output store is lane-dense
    # and no in-kernel transpose is needed.
    acc = None
    tap_idx = 0
    for dy in (-1, 0, 1):
        for dx in (-1, 0, 1):
            start = pad + dy * width + dx            # static sublane offset
            tap = a2p_ref[start:start + hw, :]
            if dx == -1:
                tap = jnp.where(has_left, tap, 0.0)
            elif dx == 1:
                tap = jnp.where(has_right, tap, 0.0)
            part = jax.lax.dot_general(
                w2t_ref[tap_idx], tap.astype(jnp.bfloat16),
                dimension_numbers=(((1,), (1,)), ((), ())),
                preferred_element_type=jnp.float32)
            acc = part if acc is None else acc + part
            tap_idx += 1

    o_ref[cin:, :] = acc + b2_ref[...]               # (G, HW) new features


def init_dense_layer_params(key, input_feature, growth_rate):
    """Deterministic synthetic parameters (shapes match the PyTorch module)."""
    cmid = 4 * growth_rate
    k1, k2, k3, k4 = jax.random.split(key, 4)
    return {
        # BatchNorm2d(input_feature): gamma=1, beta=0 (PyTorch default init)
        "bn1_gamma": jnp.ones((1, input_feature), jnp.float32),
        "bn1_beta": jnp.zeros((1, input_feature), jnp.float32),
        # Conv2d(input_feature, 4*growth, 1) as a (Cin, Cmid) matmul weight
        "w1": (0.1 * jax.random.normal(k1, (input_feature, cmid))).astype(jnp.float32),
        "b1": (0.1 * jax.random.normal(k2, (1, cmid))).astype(jnp.float32),
        # BatchNorm2d(4*growth)
        "bn2_gamma": jnp.ones((1, cmid), jnp.float32),
        "bn2_beta": jnp.zeros((1, cmid), jnp.float32),
        # Conv2d(4*growth, growth, 3, padding=1) stored HWIO (3,3,Cmid,G)
        "w2": (0.1 * jax.random.normal(k3, (3, 3, cmid, growth_rate))).astype(jnp.float32),
        "b2": (0.1 * jax.random.normal(k4, (1, growth_rate))).astype(jnp.float32),
    }


@functools.partial(jax.jit, static_argnames=("growth_rate",))
def dense_layer_forward(x_nchw, params, *, growth_rate):
    """DenseLayer.forward: concat([x, block(x)], dim=1) with training-mode BN."""
    n, cin, h, w = x_nchw.shape
    cmid = 4 * growth_rate
    cout = cin + growth_rate
    hw = h * w
    nhw = n * hw

    x_f32 = x_nchw.astype(jnp.float32)
    # NCHW -> NHWC (channels on the lane axis) for the matmul path; the NCHW
    # reshape below is free (no copy) and feeds the fused concat pass-through.
    x_nhwc = jnp.transpose(x_f32, (0, 2, 3, 1))
    x_img = x_nhwc.reshape(n, hw, cin)
    x_flat = x_nhwc.reshape(nhw, cin)
    x_chw = x_f32.reshape(n, cin, hw)

    # bf16 weights feed the MXU (f32 accumulation); halves weight traffic.
    w1_bf = params["w1"].astype(jnp.bfloat16)
    # 3x3 weights pre-transposed to (9, G, Cmid) for the NT tap matmuls.
    w2t_bf = jnp.transpose(params["w2"].reshape(9, cmid, growth_rate),
                           (0, 2, 1)).astype(jnp.bfloat16)
    b2_col = params["b2"].reshape(growth_rate, 1)

    # ---- pass 1: tiled, pipelined BatchNorm statistics (BN1 then BN2) ----
    row_tile = nhw
    for t in (2048, 1024, 512, 256, 128):            # biggest tile that divides
        if nhw % t == 0:
            row_tile = t
            break
    n_tiles = nhw // row_tile
    small = lambda shape: jax.ShapeDtypeStruct(shape, jnp.float32)
    s1, q1, s2, q2 = pl.pallas_call(
        functools.partial(_bn_stats_kernel, inv_rows=1.0 / nhw, eps=_BN_EPS),
        out_shape=(small((1, cin)), small((1, cin)),
                   small((1, cmid)), small((1, cmid))),
        grid_spec=pltpu.PrefetchScalarGridSpec(
            num_scalar_prefetch=0,
            grid=(2, n_tiles),
            in_specs=[
                pl.BlockSpec((row_tile, cin), lambda p, i: (i, 0)),
                pl.BlockSpec((1, cin), lambda p, i: (0, 0)),
                pl.BlockSpec((1, cin), lambda p, i: (0, 0)),
                pl.BlockSpec((cin, cmid), lambda p, i: (0, 0)),
                pl.BlockSpec((1, cmid), lambda p, i: (0, 0)),
            ],
            out_specs=[
                pl.BlockSpec((1, cin), lambda p, i: (0, 0)),
                pl.BlockSpec((1, cin), lambda p, i: (0, 0)),
                pl.BlockSpec((1, cmid), lambda p, i: (0, 0)),
                pl.BlockSpec((1, cmid), lambda p, i: (0, 0)),
            ]),
        compiler_params=pltpu.CompilerParams(
            # phase 1 needs all of phase 0; both axes accumulate into shared
            # resident outputs -> sequential on both axes.
            dimension_semantics=("arbitrary", "arbitrary"),
            vmem_limit_bytes=_VMEM_LIMIT),
    )(x_flat, params["bn1_gamma"], params["bn1_beta"], w1_bf, params["b1"])

    # Fold batch statistics into per-channel scale/shift (tiny O(C) glue, f32).
    inv_rows = 1.0 / nhw
    mu1 = s1 * inv_rows
    var1 = q1 * inv_rows - mu1 * mu1
    scale1 = params["bn1_gamma"] * jax.lax.rsqrt(var1 + _BN_EPS)
    shift1 = params["bn1_beta"] - mu1 * scale1
    mu2 = s2 * inv_rows
    var2 = q2 * inv_rows - mu2 * mu2
    scale2 = params["bn2_gamma"] * jax.lax.rsqrt(var2 + _BN_EPS)
    # Fold the conv1 bias into the BN2 shift (exact in f32):
    #   (y + b1 - mu2) * scale2 + beta2 == y*scale2 + (beta2 - mu2*scale2 + b1*scale2)
    shift2 = params["bn2_beta"] - mu2 * scale2 + params["b1"] * scale2

    # ---- pass 2: fused layer + fused concat, grid over images ----
    pad = ((w + 1 + 7) // 8) * 8                     # aligned row padding >= W+1
    out = pl.pallas_call(
        functools.partial(_dense_layer_fused_kernel, width=w),
        out_shape=jax.ShapeDtypeStruct((n, cout, hw), jnp.float32),
        grid_spec=pltpu.PrefetchScalarGridSpec(
            num_scalar_prefetch=0,
            grid=(n,),
            in_specs=[
                pl.BlockSpec((None, hw, cin), lambda b: (b, 0, 0)),   # NHWC view
                pl.BlockSpec((None, cin, hw), lambda b: (b, 0, 0)),   # NCHW view
                pl.BlockSpec((1, cin), lambda b: (0, 0)),
                pl.BlockSpec((1, cin), lambda b: (0, 0)),
                pl.BlockSpec((cin, cmid), lambda b: (0, 0)),
                pl.BlockSpec((1, cmid), lambda b: (0, 0)),
                pl.BlockSpec((1, cmid), lambda b: (0, 0)),
                pl.BlockSpec((9, growth_rate, cmid), lambda b: (0, 0, 0)),
                pl.BlockSpec((growth_rate, 1), lambda b: (0, 0)),
            ],
            out_specs=pl.BlockSpec((None, cout, hw), lambda b: (b, 0, 0)),
            scratch_shapes=[pltpu.VMEM((hw + 2 * pad, cmid), jnp.float32)]),
        compiler_params=pltpu.CompilerParams(
            dimension_semantics=("parallel",),
            vmem_limit_bytes=_VMEM_LIMIT),
    )(x_img, x_chw, scale1, shift1, w1_bf, scale2, shift2, w2t_bf, b2_col)

    # Kernel output is already channel-major: just reshape to NCHW.
    return out.reshape(n, cout, h, w)


def _reference_forward(x_nchw, params, growth_rate):
    """Pure-JAX reference mirroring the kernel's bf16 matmul inputs."""
    n, cin, h, w = x_nchw.shape
    cmid = 4 * growth_rate
    xf = jnp.transpose(x_nchw, (0, 2, 3, 1)).astype(jnp.float32).reshape(-1, cin)
    mu1 = jnp.mean(xf, axis=0, keepdims=True)
    var1 = jnp.mean((xf - mu1) ** 2, axis=0, keepdims=True)
    a1 = jnp.maximum((xf - mu1) * jax.lax.rsqrt(var1 + _BN_EPS)
                     * params["bn1_gamma"] + params["bn1_beta"], 0.0)
    y1 = jnp.dot(a1.astype(jnp.bfloat16), params["w1"].astype(jnp.bfloat16),
                 preferred_element_type=jnp.float32) + params["b1"]
    mu2 = jnp.mean(y1, axis=0, keepdims=True)
    var2 = jnp.mean((y1 - mu2) ** 2, axis=0, keepdims=True)
    a2 = jnp.maximum((y1 - mu2) * jax.lax.rsqrt(var2 + _BN_EPS)
                     * params["bn2_gamma"] + params["bn2_beta"], 0.0)
    a2 = a2.reshape(n, h, w, cmid)
    a2p = jnp.pad(a2, ((0, 0), (1, 1), (1, 1), (0, 0)))
    w2 = params["w2"].astype(jnp.bfloat16)           # (3, 3, Cmid, G) HWIO
    new = jnp.zeros((n, h, w, growth_rate), jnp.float32)
    for ky in range(3):
        for kx in range(3):
            tap = a2p[:, ky:ky + h, kx:kx + w, :].astype(jnp.bfloat16)
            new = new + jnp.einsum("nhwc,cg->nhwg", tap, w2[ky, kx],
                                   preferred_element_type=jnp.float32)
    new = new + params["b2"]
    new_nchw = jnp.transpose(new, (0, 3, 1, 2))
    return jnp.concatenate([x_nchw.astype(jnp.float32), new_nchw], axis=1)


if __name__ == "__main__":
    key = jax.random.PRNGKey(0)
    k_x, k_p = jax.random.split(key)

    # Small shapes consistent with the module: batch=2, channels=4, spatial=16.
    N, C_IN, H, W = 2, 4, 16, 16
    GROWTH = 4

    x = jax.random.normal(k_x, (N, C_IN, H, W), dtype=jnp.float32)
    params = init_dense_layer_params(k_p, C_IN, GROWTH)

    out = dense_layer_forward(x, params, growth_rate=GROWTH)
    out = jax.block_until_ready(out)

    assert out.shape == (N, C_IN + GROWTH, H, W), out.shape
    # The concat carries the input through unchanged on the first C_IN channels.
    assert bool(jnp.allclose(out[:, :C_IN], x, atol=0.0))
    assert bool(jnp.all(jnp.isfinite(out)))

    # Numerical check against a pure-JAX reference (bf16 matmul inputs, f32 BN).
    ref = _reference_forward(x, params, GROWTH)
    max_err = float(jnp.max(jnp.abs(out - ref)))
    assert bool(jnp.allclose(out, ref, rtol=1e-2, atol=1e-2)), max_err

    print("KERNEL_OK")
</pallas_src>

<mosaic_0001>
module attributes {stable_mosaic.version = 11 : i64} {
  func.func @_bn_stats_kernel(%arg0: i32, %arg1: i32, %arg2: memref<512x4xf32, #tpu.memory_space<vmem>>, %arg3: memref<1x4xf32, #tpu.memory_space<vmem>>, %arg4: memref<1x4xf32, #tpu.memory_space<vmem>>, %arg5: memref<4x16xbf16, #tpu.memory_space<vmem>>, %arg6: memref<1x16xf32, #tpu.memory_space<vmem>>, %arg7: memref<1x4xf32, #tpu.memory_space<vmem>>, %arg8: memref<1x4xf32, #tpu.memory_space<vmem>>, %arg9: memref<1x16xf32, #tpu.memory_space<vmem>>, %arg10: memref<1x16xf32, #tpu.memory_space<vmem>>) attributes {dimension_semantics = [#tpu.dimension_semantics<arbitrary>, #tpu.dimension_semantics<arbitrary>], iteration_bounds = array<i64: 2, 1>, scalar_prefetch = 0 : i64, scratch_operands = 0 : i64, tpu.core_type = #tpu.core_type<tc>, window_params = [{transform_indices = @transform_0, window_bounds = array<i64: 512, 4>}, {pipeline_mode = #tpu.pipeline_mode<synchronous>, transform_indices = @transform_1, window_bounds = array<i64: 1, 4>}, {pipeline_mode = #tpu.pipeline_mode<synchronous>, transform_indices = @transform_2, window_bounds = array<i64: 1, 4>}, {pipeline_mode = #tpu.pipeline_mode<synchronous>, transform_indices = @transform_3, window_bounds = array<i64: 4, 16>}, {pipeline_mode = #tpu.pipeline_mode<synchronous>, transform_indices = @transform_4, window_bounds = array<i64: 1, 16>}, {pipeline_mode = #tpu.pipeline_mode<synchronous>, transform_indices = @transform_5, window_bounds = array<i64: 1, 4>}, {pipeline_mode = #tpu.pipeline_mode<synchronous>, transform_indices = @transform_6, window_bounds = array<i64: 1, 4>}, {pipeline_mode = #tpu.pipeline_mode<synchronous>, transform_indices = @transform_7, window_bounds = array<i64: 1, 16>}, {pipeline_mode = #tpu.pipeline_mode<synchronous>, transform_indices = @transform_8, window_bounds = array<i64: 1, 16>}]} {
    %c0_i32 = arith.constant 0 : i32
    %0 = arith.cmpi eq, %arg0, %c0_i32 : i32
    %c0_i32_0 = arith.constant 0 : i32
    %1 = arith.cmpi eq, %arg1, %c0_i32_0 : i32
    %2 = arith.andi %0, %1 : i1
    %3 = arith.extui %2 : i1 to i32
    %c0_i32_1 = arith.constant 0 : i32
    %4 = arith.cmpi ne, %3, %c0_i32_1 : i32
    scf.if %4 {
      %cst = arith.constant 0.000000e+00 : f32
      %12 = vector.broadcast %cst : f32 to vector<1x4xf32>
      %c0_6 = arith.constant 0 : index
      %c0_7 = arith.constant 0 : index
      %13 = vector.load %arg7[%c0_6, %c0_7] : memref<1x4xf32, #tpu.memory_space<vmem>>, vector<1x4xf32>
      tpu.vector_store %arg7[%c0_6, %c0_7], %12 {strides = array<i32>} : memref<1x4xf32, #tpu.memory_space<vmem>>, vector<1x4xf32>,
      %cst_8 = arith.constant 0.000000e+00 : f32
      %14 = vector.broadcast %cst_8 : f32 to vector<1x4xf32>
      %c0_9 = arith.constant 0 : index
      %c0_10 = arith.constant 0 : index
      %15 = vector.load %arg8[%c0_9, %c0_10] : memref<1x4xf32, #tpu.memory_space<vmem>>, vector<1x4xf32>
      tpu.vector_store %arg8[%c0_9, %c0_10], %14 {strides = array<i32>} : memref<1x4xf32, #tpu.memory_space<vmem>>, vector<1x4xf32>,
      %cst_11 = arith.constant 0.000000e+00 : f32
      %16 = vector.broadcast %cst_11 : f32 to vector<1x16xf32>
      %c0_12 = arith.constant 0 : index
      %c0_13 = arith.constant 0 : index
      %17 = vector.load %arg9[%c0_12, %c0_13] : memref<1x16xf32, #tpu.memory_space<vmem>>, vector<1x16xf32>
      tpu.vector_store %arg9[%c0_12, %c0_13], %16 {strides = array<i32>} : memref<1x16xf32, #tpu.memory_space<vmem>>, vector<1x16xf32>,
      %cst_14 = arith.constant 0.000000e+00 : f32
      %18 = vector.broadcast %cst_14 : f32 to vector<1x16xf32>
      %c0_15 = arith.constant 0 : index
      %c0_16 = arith.constant 0 : index
      %19 = vector.load %arg10[%c0_15, %c0_16] : memref<1x16xf32, #tpu.memory_space<vmem>>, vector<1x16xf32>
      tpu.vector_store %arg10[%c0_15, %c0_16], %18 {strides = array<i32>} : memref<1x16xf32, #tpu.memory_space<vmem>>, vector<1x16xf32>,
    } else {
    }
    %c0 = arith.constant 0 : index
    %c0_2 = arith.constant 0 : index
    %5 = vector.load %arg2[%c0, %c0_2] : memref<512x4xf32, #tpu.memory_space<vmem>>, vector<512x4xf32>
    %c0_i32_3 = arith.constant 0 : i32
    %6 = arith.cmpi eq, %arg0, %c0_i32_3 : i32
    %7 = arith.extui %6 : i1 to i32
    %c0_i32_4 = arith.constant 0 : i32
    %8 = arith.cmpi ne, %7, %c0_i32_4 : i32
    scf.if %8 {
      %c0_6 = arith.constant 0 : index
      %c0_7 = arith.constant 0 : index
      %12 = vector.load %arg7[%c0_6, %c0_7] : memref<1x4xf32, #tpu.memory_space<vmem>>, vector<1x4xf32>
      %cst = arith.constant dense<0.000000e+00> : vector<4xf32>
      %13 = vector.multi_reduction <add>, %5, %cst [0] : vector<512x4xf32> to vector<4xf32>
      %14 = vector.shape_cast %13 : vector<4xf32> to vector<1x4xf32>
      %15 = arith.addf %12, %14 : vector<1x4xf32>
      %c0_8 = arith.constant 0 : index
      %c0_9 = arith.constant 0 : index
      %16 = vector.load %arg7[%c0_8, %c0_9] : memref<1x4xf32, #tpu.memory_space<vmem>>, vector<1x4xf32>
      tpu.vector_store %arg7[%c0_8, %c0_9], %15 {strides = array<i32>} : memref<1x4xf32, #tpu.memory_space<vmem>>, vector<1x4xf32>,
      %c0_10 = arith.constant 0 : index
      %c0_11 = arith.constant 0 : index
      %17 = vector.load %arg8[%c0_10, %c0_11] : memref<1x4xf32, #tpu.memory_space<vmem>>, vector<1x4xf32>
      %18 = arith.mulf %5, %5 : vector<512x4xf32>
      %cst_12 = arith.constant dense<0.000000e+00> : vector<4xf32>
      %19 = vector.multi_reduction <add>, %18, %cst_12 [0] : vector<512x4xf32> to vector<4xf32>
      %20 = vector.shape_cast %19 : vector<4xf32> to vector<1x4xf32>
      %21 = arith.addf %17, %20 : vector<1x4xf32>
      %c0_13 = arith.constant 0 : index
      %c0_14 = arith.constant 0 : index
      %22 = vector.load %arg8[%c0_13, %c0_14] : memref<1x4xf32, #tpu.memory_space<vmem>>, vector<1x4xf32>
      tpu.vector_store %arg8[%c0_13, %c0_14], %21 {strides = array<i32>} : memref<1x4xf32, #tpu.memory_space<vmem>>, vector<1x4xf32>,
    } else {
    }
    %c1_i32 = arith.constant 1 : i32
    %9 = arith.cmpi eq, %arg0, %c1_i32 : i32
    %10 = arith.extui %9 : i1 to i32
    %c0_i32_5 = arith.constant 0 : i32
    %11 = arith.cmpi ne, %10, %c0_i32_5 : i32
    scf.if %11 {
      %c0_6 = arith.constant 0 : index
      %c0_7 = arith.constant 0 : index
      %12 = vector.load %arg7[%c0_6, %c0_7] : memref<1x4xf32, #tpu.memory_space<vmem>>, vector<1x4xf32>
      %cst = arith.constant 0.001953125 : f32
      %13 = vector.broadcast %cst : f32 to vector<1x4xf32>
      %14 = arith.mulf %12, %13 : vector<1x4xf32>
      %c0_8 = arith.constant 0 : index
      %c0_9 = arith.constant 0 : index
      %15 = vector.load %arg8[%c0_8, %c0_9] : memref<1x4xf32, #tpu.memory_space<vmem>>, vector<1x4xf32>
      %cst_10 = arith.constant 0.001953125 : f32
      %16 = vector.broadcast %cst_10 : f32 to vector<1x4xf32>
      %17 = arith.mulf %15, %16 : vector<1x4xf32>
      %18 = arith.mulf %14, %14 : vector<1x4xf32>
      %19 = arith.subf %17, %18 : vector<1x4xf32>
      %c0_11 = arith.constant 0 : index
      %c0_12 = arith.constant 0 : index
      %20 = vector.load %arg3[%c0_11, %c0_12] : memref<1x4xf32, #tpu.memory_space<vmem>>, vector<1x4xf32>
      %cst_13 = arith.constant 9.99999974E-6 : f32
      %21 = vector.broadcast %cst_13 : f32 to vector<1x4xf32>
      %22 = arith.addf %19, %21 : vector<1x4xf32>
      %23 = math.rsqrt %22 : vector<1x4xf32>
      %24 = arith.mulf %20, %23 : vector<1x4xf32>
      %c0_14 = arith.constant 0 : index
      %c0_15 = arith.constant 0 : index
      %25 = vector.load %arg4[%c0_14, %c0_15] : memref<1x4xf32, #tpu.memory_space<vmem>>, vector<1x4xf32>
      %26 = arith.mulf %14, %24 : vector<1x4xf32>
      %27 = arith.subf %25, %26 : vector<1x4xf32>
      %28 = vector.broadcast %24 : vector<1x4xf32> to vector<512x4xf32>
      %29 = arith.mulf %5, %28 : vector<512x4xf32>
      %30 = vector.broadcast %27 : vector<1x4xf32> to vector<512x4xf32>
      %31 = arith.addf %29, %30 : vector<512x4xf32>
      %cst_16 = arith.constant 0.000000e+00 : f32
      %32 = vector.broadcast %cst_16 : f32 to vector<512x4xf32>
      %33 = arith.maximumf %31, %32 : vector<512x4xf32>
      %34 = arith.truncf %33 : vector<512x4xf32> to vector<512x4xbf16>
      %c0_17 = arith.constant 0 : index
      %c0_18 = arith.constant 0 : index
      %35 = vector.load %arg5[%c0_17, %c0_18] : memref<4x16xbf16, #tpu.memory_space<vmem>>, vector<4x16xbf16>
      %cst_19 = arith.constant dense<0.000000e+00> : vector<512x16xf32>
      %36 = tpu.matmul %34, %35, %cst_19 {dimension_numbers = #tpu.dot_dimension_numbers<[1], [0], [0], [1], [0, 0, 1, 1], [], []>} : vector<512x4xbf16>, vector<4x16xbf16>, vector<512x16xf32> -> vector<512x16xf32>
      %c0_20 = arith.constant 0 : index
      %c0_21 = arith.constant 0 : index
      %37 = vector.load %arg6[%c0_20, %c0_21] : memref<1x16xf32, #tpu.memory_space<vmem>>, vector<1x16xf32>
      %38 = vector.broadcast %37 : vector<1x16xf32> to vector<512x16xf32>
      %39 = arith.addf %36, %38 : vector<512x16xf32>
      %c0_22 = arith.constant 0 : index
      %c0_23 = arith.constant 0 : index
      %40 = vector.load %arg9[%c0_22, %c0_23] : memref<1x16xf32, #tpu.memory_space<vmem>>, vector<1x16xf32>
      %cst_24 = arith.constant dense<0.000000e+00> : vector<16xf32>
      %41 = vector.multi_reduction <add>, %39, %cst_24 [0] : vector<512x16xf32> to vector<16xf32>
      %42 = vector.shape_cast %41 : vector<16xf32> to vector<1x16xf32>
      %43 = arith.addf %40, %42 : vector<1x16xf32>
      %c0_25 = arith.constant 0 : index
      %c0_26 = arith.constant 0 : index
      %44 = vector.load %arg9[%c0_25, %c0_26] : memref<1x16xf32, #tpu.memory_space<vmem>>, vector<1x16xf32>
      tpu.vector_store %arg9[%c0_25, %c0_26], %43 {strides = array<i32>} : memref<1x16xf32, #tpu.memory_space<vmem>>, vector<1x16xf32>,
      %c0_27 = arith.constant 0 : index
      %c0_28 = arith.constant 0 : index
      %45 = vector.load %arg10[%c0_27, %c0_28] : memref<1x16xf32, #tpu.memory_space<vmem>>, vector<1x16xf32>
      %46 = arith.mulf %39, %39 : vector<512x16xf32>
      %cst_29 = arith.constant dense<0.000000e+00> : vector<16xf32>
      %47 = vector.multi_reduction <add>, %46, %cst_29 [0] : vector<512x16xf32> to vector<16xf32>
      %48 = vector.shape_cast %47 : vector<16xf32> to vector<1x16xf32>
      %49 = arith.addf %45, %48 : vector<1x16xf32>
      %c0_30 = arith.constant 0 : index
      %c0_31 = arith.constant 0 : index
      %50 = vector.load %arg10[%c0_30, %c0_31] : memref<1x16xf32, #tpu.memory_space<vmem>>, vector<1x16xf32>
      tpu.vector_store %arg10[%c0_30, %c0_31], %49 {strides = array<i32>} : memref<1x16xf32, #tpu.memory_space<vmem>>, vector<1x16xf32>,
    } else {
    }
    return
  }
  func.func @transform_0(%arg0: i32, %arg1: i32) -> (i32, i32) {
    %c0_i32 = arith.constant 0 : i32
    %c0_i32_0 = arith.constant 0 : i32
    return %arg1, %c0_i32 : i32, i32
  }
  func.func @transform_1(%arg0: i32, %arg1: i32) -> (i32, i32) {
    %c0_i32 = arith.constant 0 : i32
    %c0_i32_0 = arith.constant 0 : i32
    %c0_i32_1 = arith.constant 0 : i32
    return %c0_i32, %c0_i32_0 : i32, i32
  }
  func.func @transform_2(%arg0: i32, %arg1: i32) -> (i32, i32) {
    %c0_i32 = arith.constant 0 : i32
    %c0_i32_0 = arith.constant 0 : i32
    %c0_i32_1 = arith.constant 0 : i32
    return %c0_i32, %c0_i32_0 : i32, i32
  }
  func.func @transform_3(%arg0: i32, %arg1: i32) -> (i32, i32) {
    %c0_i32 = arith.constant 0 : i32
    %c0_i32_0 = arith.constant 0 : i32
    %c0_i32_1 = arith.constant 0 : i32
    return %c0_i32, %c0_i32_0 : i32, i32
  }
  func.func @transform_4(%arg0: i32, %arg1: i32) -> (i32, i32) {
    %c0_i32 = arith.constant 0 : i32
    %c0_i32_0 = arith.constant 0 : i32
    %c0_i32_1 = arith.constant 0 : i32
    return %c0_i32, %c0_i32_0 : i32, i32
  }
  func.func @transform_5(%arg0: i32, %arg1: i32) -> (i32, i32) {
    %c0_i32 = arith.constant 0 : i32
    %c0_i32_0 = arith.constant 0 : i32
    %c0_i32_1 = arith.constant 0 : i32
    return %c0_i32, %c0_i32_0 : i32, i32
  }
  func.func @transform_6(%arg0: i32, %arg1: i32) -> (i32, i32) {
    %c0_i32 = arith.constant 0 : i32
    %c0_i32_0 = arith.constant 0 : i32
    %c0_i32_1 = arith.constant 0 : i32
    return %c0_i32, %c0_i32_0 : i32, i32
  }
  func.func @transform_7(%arg0: i32, %arg1: i32) -> (i32, i32) {
    %c0_i32 = arith.constant 0 : i32
    %c0_i32_0 = arith.constant 0 : i32
    %c0_i32_1 = arith.constant 0 : i32
    return %c0_i32, %c0_i32_0 : i32, i32
  }
  func.func @transform_8(%arg0: i32, %arg1: i32) -> (i32, i32) {
    %c0_i32 = arith.constant 0 : i32
    %c0_i32_0 = arith.constant 0 : i32
    %c0_i32_1 = arith.constant 0 : i32
    return %c0_i32, %c0_i32_0 : i32, i32
  }
}

module attributes {stable_mosaic.version = 11 : i64} {
  func.func @_dense_layer_fused_kernel(%arg0: i32, %arg1: memref<1x256x4xf32, #tpu.memory_space<vmem>>, %arg2: memref<1x4x256xf32, #tpu.memory_space<vmem>>, %arg3: memref<1x4xf32, #tpu.memory_space<vmem>>, %arg4: memref<1x4xf32, #tpu.memory_space<vmem>>, %arg5: memref<4x16xbf16, #tpu.memory_space<vmem>>, %arg6: memref<1x16xf32, #tpu.memory_space<vmem>>, %arg7: memref<1x16xf32, #tpu.memory_space<vmem>>, %arg8: memref<9x4x16xbf16, #tpu.memory_space<vmem>>, %arg9: memref<4x1xf32, #tpu.memory_space<vmem>>, %arg10: memref<1x8x256xf32, #tpu.memory_space<vmem>>, %arg11: memref<304x16xf32, #tpu.memory_space<vmem>>) attributes {dimension_semantics = [#tpu.dimension_semantics<parallel>], iteration_bounds = array<i64: 2>, scalar_prefetch = 0 : i64, scratch_operands = 1 : i64, tpu.core_type = #tpu.core_type<tc>, window_params = [{transform_indices = @transform_0, window_bounds = array<i64: 1, 256, 4>}, {transform_indices = @transform_1, window_bounds = array<i64: 1, 4, 256>}, {pipeline_mode = #tpu.pipeline_mode<synchronous>, transform_indices = @transform_2, window_bounds = array<i64: 1, 4>}, {pipeline_mode = #tpu.pipeline_mode<synchronous>, transform_indices = @transform_3, window_bounds = array<i64: 1, 4>}, {pipeline_mode = #tpu.pipeline_mode<synchronous>, transform_indices = @transform_4, window_bounds = array<i64: 4, 16>}, {pipeline_mode = #tpu.pipeline_mode<synchronous>, transform_indices = @transform_5, window_bounds = array<i64: 1, 16>}, {pipeline_mode = #tpu.pipeline_mode<synchronous>, transform_indices = @transform_6, window_bounds = array<i64: 1, 16>}, {pipeline_mode = #tpu.pipeline_mode<synchronous>, transform_indices = @transform_7, window_bounds = array<i64: 9, 4, 16>}, {pipeline_mode = #tpu.pipeline_mode<synchronous>, transform_indices = @transform_8, window_bounds = array<i64: 4, 1>}, {transform_indices = @transform_9, window_bounds = array<i64: 1, 8, 256>}]} {
    %c0 = arith.constant 0 : index
    %c0_0 = arith.constant 0 : index
    %c0_1 = arith.constant 0 : index
    %0 = vector.load %arg2[%c0, %c0_0, %c0_1] : memref<1x4x256xf32, #tpu.memory_space<vmem>>, vector<1x4x256xf32>
    %1 = vector.shape_cast %0 : vector<1x4x256xf32> to vector<4x256xf32>
    %c0_2 = arith.constant 0 : index
    %c0_3 = arith.constant 0 : index
    %c0_4 = arith.constant 0 : index
    %2 = vector.load %arg10[%c0_2, %c0_3, %c0_4] : memref<1x8x256xf32, #tpu.memory_space<vmem>>, vector<1x4x256xf32>
    %3 = vector.shape_cast %2 : vector<1x4x256xf32> to vector<4x256xf32>
    %4 = vector.shape_cast %1 : vector<4x256xf32> to vector<1x4x256xf32>
    tpu.vector_store %arg10[%c0_2, %c0_3, %c0_4], %4 {strides = array<i32>} : memref<1x8x256xf32, #tpu.memory_space<vmem>>, vector<1x4x256xf32>,
    %c0_5 = arith.constant 0 : index
    %c0_6 = arith.constant 0 : index
    %c0_7 = arith.constant 0 : index
    %5 = vector.load %arg1[%c0_5, %c0_6, %c0_7] : memref<1x256x4xf32, #tpu.memory_space<vmem>>, vector<1x256x4xf32>
    %6 = vector.shape_cast %5 : vector<1x256x4xf32> to vector<256x4xf32>
    %c0_8 = arith.constant 0 : index
    %c0_9 = arith.constant 0 : index
    %7 = vector.load %arg3[%c0_8, %c0_9] : memref<1x4xf32, #tpu.memory_space<vmem>>, vector<1x4xf32>
    %8 = vector.broadcast %7 : vector<1x4xf32> to vector<256x4xf32>
    %9 = arith.mulf %6, %8 : vector<256x4xf32>
    %c0_10 = arith.constant 0 : index
    %c0_11 = arith.constant 0 : index
    %10 = vector.load %arg4[%c0_10, %c0_11] : memref<1x4xf32, #tpu.memory_space<vmem>>, vector<1x4xf32>
    %11 = vector.broadcast %10 : vector<1x4xf32> to vector<256x4xf32>
    %12 = arith.addf %9, %11 : vector<256x4xf32>
    %cst = arith.constant 0.000000e+00 : f32
    %13 = vector.broadcast %cst : f32 to vector<256x4xf32>
    %14 = arith.maximumf %12, %13 : vector<256x4xf32>
    %15 = arith.truncf %14 : vector<256x4xf32> to vector<256x4xbf16>
    %c0_12 = arith.constant 0 : index
    %c0_13 = arith.constant 0 : index
    %16 = vector.load %arg5[%c0_12, %c0_13] : memref<4x16xbf16, #tpu.memory_space<vmem>>, vector<4x16xbf16>
    %cst_14 = arith.constant dense<0.000000e+00> : vector<256x16xf32>
    %17 = tpu.matmul %15, %16, %cst_14 {dimension_numbers = #tpu.dot_dimension_numbers<[1], [0], [0], [1], [0, 0, 1, 1], [], []>} : vector<256x4xbf16>, vector<4x16xbf16>, vector<256x16xf32> -> vector<256x16xf32>
    %c0_15 = arith.constant 0 : index
    %c0_16 = arith.constant 0 : index
    %18 = vector.load %arg6[%c0_15, %c0_16] : memref<1x16xf32, #tpu.memory_space<vmem>>, vector<1x16xf32>
    %19 = vector.broadcast %18 : vector<1x16xf32> to vector<256x16xf32>
    %20 = arith.mulf %17, %19 : vector<256x16xf32>
    %c0_17 = arith.constant 0 : index
    %c0_18 = arith.constant 0 : index
    %21 = vector.load %arg7[%c0_17, %c0_18] : memref<1x16xf32, #tpu.memory_space<vmem>>, vector<1x16xf32>
    %22 = vector.broadcast %21 : vector<1x16xf32> to vector<256x16xf32>
    %23 = arith.addf %20, %22 : vector<256x16xf32>
    %cst_19 = arith.constant 0.000000e+00 : f32
    %24 = vector.broadcast %cst_19 : f32 to vector<256x16xf32>
    %25 = arith.maximumf %23, %24 : vector<256x16xf32>
    %cst_20 = arith.constant 0.000000e+00 : f32
    %26 = vector.broadcast %cst_20 : f32 to vector<24x16xf32>
    %c0_21 = arith.constant 0 : index
    %c0_22 = arith.constant 0 : index
    %27 = vector.load %arg11[%c0_21, %c0_22] : memref<304x16xf32, #tpu.memory_space<vmem>>, vector<24x16xf32>
    tpu.vector_store %arg11[%c0_21, %c0_22], %26 {strides = array<i32>} : memref<304x16xf32, #tpu.memory_space<vmem>>, vector<24x16xf32>,
    %c280 = arith.constant 280 : index
    %c0_23 = arith.constant 0 : index
    %28 = vector.load %arg11[%c280, %c0_23] : memref<304x16xf32, #tpu.memory_space<vmem>>, vector<24x16xf32>
    tpu.vector_store %arg11[%c280, %c0_23], %26 {strides = array<i32>} : memref<304x16xf32, #tpu.memory_space<vmem>>, vector<24x16xf32>,
    %c24 = arith.constant 24 : index
    %c0_24 = arith.constant 0 : index
    %29 = vector.load %arg11[%c24, %c0_24] : memref<304x16xf32, #tpu.memory_space<vmem>>, vector<256x16xf32>
    tpu.vector_store %arg11[%c24, %c0_24], %25 {strides = array<i32>} : memref<304x16xf32, #tpu.memory_space<vmem>>, vector<256x16xf32>,
    %30 = tpu.iota {dimensions = array<i32: 0>} : vector<256x1xi32>
    %c16_i32 = arith.constant 16 : i32
    %c0_i32 = arith.constant 0 : i32
    %31 = arith.cmpi eq, %c16_i32, %c0_i32 : i32
    %c1_i32 = arith.constant 1 : i32
    %32 = arith.select %31, %c1_i32, %c16_i32 : i32
    %33 = vector.broadcast %32 : i32 to vector<256x1xi32>
    %34 = arith.remsi %30, %33 : vector<256x1xi32>
    %c0_i32_25 = arith.constant 0 : i32
    %35 = vector.broadcast %c0_i32_25 : i32 to vector<256x1xi32>
    %36 = arith.cmpi ne, %34, %35 : vector<256x1xi32>
    %c0_i32_26 = arith.constant 0 : i32
    %37 = vector.broadcast %c0_i32_26 : i32 to vector<256x1xi32>
    %38 = arith.cmpi slt, %34, %37 : vector<256x1xi32>
    %c0_i32_27 = arith.constant 0 : i32
    %39 = arith.cmpi slt, %32, %c0_i32_27 : i32
    %40 = vector.broadcast %39 : i1 to vector<256x1xi1>
    %41 = vector.broadcast %40 : vector<256x1xi1> to vector<256x1xi1>
    %42 = arith.xori %38, %41 : vector<256x1xi1>
    %43 = arith.andi %42, %36 : vector<256x1xi1>
    %44 = vector.broadcast %32 : i32 to vector<256x1xi32>
    %45 = arith.addi %34, %44 : vector<256x1xi32>
    %46 = arith.select %43, %45, %34 : vector<256x1xi1>, vector<256x1xi32>
    %c0_i32_28 = arith.constant 0 : i32
    %47 = vector.broadcast %c0_i32_28 : i32 to vector<256x1xi32>
    %48 = arith.cmpi sgt, %46, %47 : vector<256x1xi32>
    %c15_i32 = arith.constant 15 : i32
    %49 = vector.broadcast %c15_i32 : i32 to vector<256x1xi32>
    %50 = arith.cmpi slt, %46, %49 : vector<256x1xi32>
    %c7 = arith.constant 7 : index
    %c0_29 = arith.constant 0 : index
    %51 = vector.load %arg11[%c7, %c0_29] : memref<304x16xf32, #tpu.memory_space<vmem>>, vector<256x16xf32>
    %cst_30 = arith.constant 0.000000e+00 : f32
    %52 = vector.shape_cast %48 : vector<256x1xi1> to vector<256x1xi1>
    %53 = vector.broadcast %52 : vector<256x1xi1> to vector<256x16xi1>
    %54 = vector.broadcast %cst_30 : f32 to vector<256x16xf32>
    %55 = arith.select %53, %51, %54 : vector<256x16xi1>, vector<256x16xf32>
    %c0_31 = arith.constant 0 : index
    %c0_32 = arith.constant 0 : index
    %c0_33 = arith.constant 0 : index
    %56 = vector.load %arg8[%c0_31, %c0_32, %c0_33] : memref<9x4x16xbf16, #tpu.memory_space<vmem>>, vector<1x4x16xbf16>
    %57 = vector.shape_cast %56 : vector<1x4x16xbf16> to vector<4x16xbf16>
    %58 = arith.truncf %55 : vector<256x16xf32> to vector<256x16xbf16>
    %cst_34 = arith.constant dense<0.000000e+00> : vector<4x256xf32>
    %59 = tpu.matmul %57, %58, %cst_34 {dimension_numbers = #tpu.dot_dimension_numbers<[1], [1], [0], [0], [0, 0, 1, 0], [], []>} : vector<4x16xbf16>, vector<256x16xbf16>, vector<4x256xf32> -> vector<4x256xf32>
    %c8 = arith.constant 8 : index
    %c0_35 = arith.constant 0 : index
    %60 = vector.load %arg11[%c8, %c0_35] : memref<304x16xf32, #tpu.memory_space<vmem>>, vector<256x16xf32>
    %c1 = arith.constant 1 : index
    %c0_36 = arith.constant 0 : index
    %c0_37 = arith.constant 0 : index
    %61 = vector.load %arg8[%c1, %c0_36, %c0_37] : memref<9x4x16xbf16, #tpu.memory_space<vmem>>, vector<1x4x16xbf16>
    %62 = vector.shape_cast %61 : vector<1x4x16xbf16> to vector<4x16xbf16>
    %63 = arith.truncf %60 : vector<256x16xf32> to vector<256x16xbf16>
    %cst_38 = arith.constant dense<0.000000e+00> : vector<4x256xf32>
    %64 = tpu.matmul %62, %63, %cst_38 {dimension_numbers = #tpu.dot_dimension_numbers<[1], [1], [0], [0], [0, 0, 1, 0], [], []>} : vector<4x16xbf16>, vector<256x16xbf16>, vector<4x256xf32> -> vector<4x256xf32>
    %65 = arith.addf %59, %64 : vector<4x256xf32>
    %c9 = arith.constant 9 : index
    %c0_39 = arith.constant 0 : index
    %66 = vector.load %arg11[%c9, %c0_39] : memref<304x16xf32, #tpu.memory_space<vmem>>, vector<256x16xf32>
    %cst_40 = arith.constant 0.000000e+00 : f32
    %67 = vector.shape_cast %50 : vector<256x1xi1> to vector<256x1xi1>
    %68 = vector.broadcast %67 : vector<256x1xi1> to vector<256x16xi1>
    %69 = vector.broadcast %cst_40 : f32 to vector<256x16xf32>
    %70 = arith.select %68, %66, %69 : vector<256x16xi1>, vector<256x16xf32>
    %c2 = arith.constant 2 : index
    %c0_41 = arith.constant 0 : index
    %c0_42 = arith.constant 0 : index
    %71 = vector.load %arg8[%c2, %c0_41, %c0_42] : memref<9x4x16xbf16, #tpu.memory_space<vmem>>, vector<1x4x16xbf16>
    %72 = vector.shape_cast %71 : vector<1x4x16xbf16> to vector<4x16xbf16>
    %73 = arith.truncf %70 : vector<256x16xf32> to vector<256x16xbf16>
    %cst_43 = arith.constant dense<0.000000e+00> : vector<4x256xf32>
    %74 = tpu.matmul %72, %73, %cst_43 {dimension_numbers = #tpu.dot_dimension_numbers<[1], [1], [0], [0], [0, 0, 1, 0], [], []>} : vector<4x16xbf16>, vector<256x16xbf16>, vector<4x256xf32> -> vector<4x256xf32>
    %75 = arith.addf %65, %74 : vector<4x256xf32>
    %c23 = arith.constant 23 : index
    %c0_44 = arith.constant 0 : index
    %76 = vector.load %arg11[%c23, %c0_44] : memref<304x16xf32, #tpu.memory_space<vmem>>, vector<256x16xf32>
    %cst_45 = arith.constant 0.000000e+00 : f32
    %77 = vector.shape_cast %48 : vector<256x1xi1> to vector<256x1xi1>
    %78 = vector.broadcast %77 : vector<256x1xi1> to vector<256x16xi1>
    %79 = vector.broadcast %cst_45 : f32 to vector<256x16xf32>
    %80 = arith.select %78, %76, %79 : vector<256x16xi1>, vector<256x16xf32>
    %c3 = arith.constant 3 : index
    %c0_46 = arith.constant 0 : index
    %c0_47 = arith.constant 0 : index
    %81 = vector.load %arg8[%c3, %c0_46, %c0_47] : memref<9x4x16xbf16, #tpu.memory_space<vmem>>, vector<1x4x16xbf16>
    %82 = vector.shape_cast %81 : vector<1x4x16xbf16> to vector<4x16xbf16>
    %83 = arith.truncf %80 : vector<256x16xf32> to vector<256x16xbf16>
    %cst_48 = arith.constant dense<0.000000e+00> : vector<4x256xf32>
    %84 = tpu.matmul %82, %83, %cst_48 {dimension_numbers = #tpu.dot_dimension_numbers<[1], [1], [0], [0], [0, 0, 1, 0], [], []>} : vector<4x16xbf16>, vector<256x16xbf16>, vector<4x256xf32> -> vector<4x256xf32>
    %85 = arith.addf %75, %84 : vector<4x256xf32>
    %c24_49 = arith.constant 24 : index
    %c0_50 = arith.constant 0 : index
    %86 = vector.load %arg11[%c24_49, %c0_50] : memref<304x16xf32, #tpu.memory_space<vmem>>, vector<256x16xf32>
    %c4 = arith.constant 4 : index
    %c0_51 = arith.constant 0 : index
    %c0_52 = arith.constant 0 : index
    %87 = vector.load %arg8[%c4, %c0_51, %c0_52] : memref<9x4x16xbf16, #tpu.memory_space<vmem>>, vector<1x4x16xbf16>
    %88 = vector.shape_cast %87 : vector<1x4x16xbf16> to vector<4x16xbf16>
    %89 = arith.truncf %86 : vector<256x16xf32> to vector<256x16xbf16>
    %cst_53 = arith.constant dense<0.000000e+00> : vector<4x256xf32>
    %90 = tpu.matmul %88, %89, %cst_53 {dimension_numbers = #tpu.dot_dimension_numbers<[1], [1], [0], [0], [0, 0, 1, 0], [], []>} : vector<4x16xbf16>, vector<256x16xbf16>, vector<4x256xf32> -> vector<4x256xf32>
    %91 = arith.addf %85, %90 : vector<4x256xf32>
    %c25 = arith.constant 25 : index
    %c0_54 = arith.constant 0 : index
    %92 = vector.load %arg11[%c25, %c0_54] : memref<304x16xf32, #tpu.memory_space<vmem>>, vector<256x16xf32>
    %cst_55 = arith.constant 0.000000e+00 : f32
    %93 = vector.shape_cast %50 : vector<256x1xi1> to vector<256x1xi1>
    %94 = vector.broadcast %93 : vector<256x1xi1> to vector<256x16xi1>
    %95 = vector.broadcast %cst_55 : f32 to vector<256x16xf32>
    %96 = arith.select %94, %92, %95 : vector<256x16xi1>, vector<256x16xf32>
    %c5 = arith.constant 5 : index
    %c0_56 = arith.constant 0 : index
    %c0_57 = arith.constant 0 : index
    %97 = vector.load %arg8[%c5, %c0_56, %c0_57] : memref<9x4x16xbf16, #tpu.memory_space<vmem>>, vector<1x4x16xbf16>
    %98 = vector.shape_cast %97 : vector<1x4x16xbf16> to vector<4x16xbf16>
    %99 = arith.truncf %96 : vector<256x16xf32> to vector<256x16xbf16>
    %cst_58 = arith.constant dense<0.000000e+00> : vector<4x256xf32>
    %100 = tpu.matmul %98, %99, %cst_58 {dimension_numbers = #tpu.dot_dimension_numbers<[1], [1], [0], [0], [0, 0, 1, 0], [], []>} : vector<4x16xbf16>, vector<256x16xbf16>, vector<4x256xf32> -> vector<4x256xf32>
    %101 = arith.addf %91, %100 : vector<4x256xf32>
    %c39 = arith.constant 39 : index
    %c0_59 = arith.constant 0 : index
    %102 = vector.load %arg11[%c39, %c0_59] : memref<304x16xf32, #tpu.memory_space<vmem>>, vector<256x16xf32>
    %cst_60 = arith.constant 0.000000e+00 : f32
    %103 = vector.shape_cast %48 : vector<256x1xi1> to vector<256x1xi1>
    %104 = vector.broadcast %103 : vector<256x1xi1> to vector<256x16xi1>
    %105 = vector.broadcast %cst_60 : f32 to vector<256x16xf32>
    %106 = arith.select %104, %102, %105 : vector<256x16xi1>, vector<256x16xf32>
    %c6 = arith.constant 6 : index
    %c0_61 = arith.constant 0 : index
    %c0_62 = arith.constant 0 : index
    %107 = vector.load %arg8[%c6, %c0_61, %c0_62] : memref<9x4x16xbf16, #tpu.memory_space<vmem>>, vector<1x4x16xbf16>
    %108 = vector.shape_cast %107 : vector<1x4x16xbf16> to vector<4x16xbf16>
    %109 = arith.truncf %106 : vector<256x16xf32> to vector<256x16xbf16>
    %cst_63 = arith.constant dense<0.000000e+00> : vector<4x256xf32>
    %110 = tpu.matmul %108, %109, %cst_63 {dimension_numbers = #tpu.dot_dimension_numbers<[1], [1], [0], [0], [0, 0, 1, 0], [], []>} : vector<4x16xbf16>, vector<256x16xbf16>, vector<4x256xf32> -> vector<4x256xf32>
    %111 = arith.addf %101, %110 : vector<4x256xf32>
    %c40 = arith.constant 40 : index
    %c0_64 = arith.constant 0 : index
    %112 = vector.load %arg11[%c40, %c0_64] : memref<304x16xf32, #tpu.memory_space<vmem>>, vector<256x16xf32>
    %c7_65 = arith.constant 7 : index
    %c0_66 = arith.constant 0 : index
    %c0_67 = arith.constant 0 : index
    %113 = vector.load %arg8[%c7_65, %c0_66, %c0_67] : memref<9x4x16xbf16, #tpu.memory_space<vmem>>, vector<1x4x16xbf16>
    %114 = vector.shape_cast %113 : vector<1x4x16xbf16> to vector<4x16xbf16>
    %115 = arith.truncf %112 : vector<256x16xf32> to vector<256x16xbf16>
    %cst_68 = arith.constant dense<0.000000e+00> : vector<4x256xf32>
    %116 = tpu.matmul %114, %115, %cst_68 {dimension_numbers = #tpu.dot_dimension_numbers<[1], [1], [0], [0], [0, 0, 1, 0], [], []>} : vector<4x16xbf16>, vector<256x16xbf16>, vector<4x256xf32> -> vector<4x256xf32>
    %117 = arith.addf %111, %116 : vector<4x256xf32>
    %c41 = arith.constant 41 : index
    %c0_69 = arith.constant 0 : index
    %118 = vector.load %arg11[%c41, %c0_69] : memref<304x16xf32, #tpu.memory_space<vmem>>, vector<256x16xf32>
    %cst_70 = arith.constant 0.000000e+00 : f32
    %119 = vector.shape_cast %50 : vector<256x1xi1> to vector<256x1xi1>
    %120 = vector.broadcast %119 : vector<256x1xi1> to vector<256x16xi1>
    %121 = vector.broadcast %cst_70 : f32 to vector<256x16xf32>
    %122 = arith.select %120, %118, %121 : vector<256x16xi1>, vector<256x16xf32>
    %c8_71 = arith.constant 8 : index
    %c0_72 = arith.constant 0 : index
    %c0_73 = arith.constant 0 : index
    %123 = vector.load %arg8[%c8_71, %c0_72, %c0_73] : memref<9x4x16xbf16, #tpu.memory_space<vmem>>, vector<1x4x16xbf16>
    %124 = vector.shape_cast %123 : vector<1x4x16xbf16> to vector<4x16xbf16>
    %125 = arith.truncf %122 : vector<256x16xf32> to vector<256x16xbf16>
    %cst_74 = arith.constant dense<0.000000e+00> : vector<4x256xf32>
    %126 = tpu.matmul %124, %125, %cst_74 {dimension_numbers = #tpu.dot_dimension_numbers<[1], [1], [0], [0], [0, 0, 1, 0], [], []>} : vector<4x16xbf16>, vector<256x16xbf16>, vector<4x256xf32> -> vector<4x256xf32>
    %127 = arith.addf %117, %126 : vector<4x256xf32>
    %c0_75 = arith.constant 0 : index
    %c0_76 = arith.constant 0 : index
    %128 = vector.load %arg9[%c0_75, %c0_76] : memref<4x1xf32, #tpu.memory_space<vmem>>, vector<4x1xf32>
    %129 = vector.broadcast %128 : vector<4x1xf32> to vector<4x256xf32>
    %130 = arith.addf %127, %129 : vector<4x256xf32>
    %c0_77 = arith.constant 0 : index
    %c4_78 = arith.constant 4 : index
    %c0_79 = arith.constant 0 : index
    %131 = vector.load %arg10[%c0_77, %c4_78, %c0_79] : memref<1x8x256xf32, #tpu.memory_space<vmem>>, vector<1x4x256xf32>
    %132 = vector.shape_cast %131 : vector<1x4x256xf32> to vector<4x256xf32>
    %133 = vector.shape_cast %130 : vector<4x256xf32> to vector<1x4x256xf32>
    tpu.vector_store %arg10[%c0_77, %c4_78, %c0_79], %133 {strides = array<i32>} : memref<1x8x256xf32, #tpu.memory_space<vmem>>, vector<1x4x256xf32>,
    return
  }
  func.func @transform_0(%arg0: i32) -> (i32, i32, i32) {
    %c0_i32 = arith.constant 0 : i32
    %c0_i32_0 = arith.constant 0 : i32
    %c0_i32_1 = arith.constant 0 : i32
    return %arg0, %c0_i32, %c0_i32_0 : i32, i32, i32
  }
  func.func @transform_1(%arg0: i32) -> (i32, i32, i32) {
    %c0_i32 = arith.constant 0 : i32
    %c0_i32_0 = arith.constant 0 : i32
    %c0_i32_1 = arith.constant 0 : i32
    return %arg0, %c0_i32, %c0_i32_0 : i32, i32, i32
  }
  func.func @transform_2(%arg0: i32) -> (i32, i32) {
    %c0_i32 = arith.constant 0 : i32
    %c0_i32_0 = arith.constant 0 : i32
    %c0_i32_1 = arith.constant 0 : i32
    return %c0_i32, %c0_i32_0 : i32, i32
  }
  func.func @transform_3(%arg0: i32) -> (i32, i32) {
    %c0_i32 = arith.constant 0 : i32
    %c0_i32_0 = arith.constant 0 : i32
    %c0_i32_1 = arith.constant 0 : i32
    return %c0_i32, %c0_i32_0 : i32, i32
  }
  func.func @transform_4(%arg0: i32) -> (i32, i32) {
    %c0_i32 = arith.constant 0 : i32
    %c0_i32_0 = arith.constant 0 : i32
    %c0_i32_1 = arith.constant 0 : i32
    return %c0_i32, %c0_i32_0 : i32, i32
  }
  func.func @transform_5(%arg0: i32) -> (i32, i32) {
    %c0_i32 = arith.constant 0 : i32
    %c0_i32_0 = arith.constant 0 : i32
    %c0_i32_1 = arith.constant 0 : i32
    return %c0_i32, %c0_i32_0 : i32, i32
  }
  func.func @transform_6(%arg0: i32) -> (i32, i32) {
    %c0_i32 = arith.constant 0 : i32
    %c0_i32_0 = arith.constant 0 : i32
    %c0_i32_1 = arith.constant 0 : i32
    return %c0_i32, %c0_i32_0 : i32, i32
  }
  func.func @transform_7(%arg0: i32) -> (i32, i32, i32) {
    %c0_i32 = arith.constant 0 : i32
    %c0_i32_0 = arith.constant 0 : i32
    %c0_i32_1 = arith.constant 0 : i32
    %c0_i32_2 = arith.constant 0 : i32
    return %c0_i32, %c0_i32_0, %c0_i32_1 : i32, i32, i32
  }
  func.func @transform_8(%arg0: i32) -> (i32, i32) {
    %c0_i32 = arith.constant 0 : i32
    %c0_i32_0 = arith.constant 0 : i32
    %c0_i32_1 = arith.constant 0 : i32
    return %c0_i32, %c0_i32_0 : i32, i32
  }
  func.func @transform_9(%arg0: i32) -> (i32, i32, i32) {
    %c0_i32 = arith.constant 0 : i32
    %c0_i32_0 = arith.constant 0 : i32
    %c0_i32_1 = arith.constant 0 : i32
    return %arg0, %c0_i32, %c0_i32_0 : i32, i32, i32
  }
}

</mosaic_0001>

<llo_original>
// kernel: dense_layer_forward.2
$region0: #{dense_layer_forward.2}
  #allocation0 [shape = 'u32[]', space=smem, size = 0x4, offset = 0x4, fixed_abs, tag = 'smem constant byte address 0x4 - core index']
  #allocation1 [shape = 'u32[72,128]{1,0:T(1,128)}', space=vmem, size = 0x9000, scoped, tag = 'internal scratch']
  %s0 = inlined_call_operand.vmem [shape: f32[512,4], index: 0, kind: input, shape index: {}]
  %s1 = inlined_call_operand.vmem [shape: f32[1,4], index: 1, kind: input, shape index: {}]
  %s2 = inlined_call_operand.vmem [shape: f32[1,4], index: 2, kind: input, shape index: {}]
  %s3 = inlined_call_operand.vmem [shape: bf16[4,16], index: 3, kind: input, shape index: {}]
  %s4 = inlined_call_operand.vmem [shape: f32[1,16], index: 4, kind: input, shape index: {}]
  %s5 = inlined_call_operand.vmem [shape: f32[1,4], index: 5, kind: output, shape index: {0}]
  %s6 = inlined_call_operand.vmem [shape: f32[1,4], index: 6, kind: output, shape index: {1}]
  %s7 = inlined_call_operand.vmem [shape: f32[1,16], index: 7, kind: output, shape index: {2}]
  %s8 = inlined_call_operand.vmem [shape: f32[1,16], index: 8, kind: output, shape index: {3}]
  %9 = xla_tuple %s5, %s6, %s7, %s8
  %s10 = sld [smem:[#allocation0]]
  $region89: #{dense_layer_forward.2} parent=0
    _
  %s12 = ssub.s32 1, %s10
  %s13 = scalar_select 0, %s12, %s10
  loop: start=0, step=1, limit=4
  $region2: #{dense_layer_forward.2} parent=0 // loop_pre_header
    _
  $region3: #{dense_layer_forward.2} parent=0 // loop_header
    %s15 = sphi 0, %s19
    %p16 = scmp.ge.s32.totalorder %s15, 4
    %s22 = sphi 0, %s34
    %s23 = sphi 0, %s30
    %s24 = sphi 0, %s22
    %s25 = sphi 0, %s23
    %s26 = sphi 0, %s24
    %s27 = sphi 0, %s25
    %s37 = sphi 0, %s39
    %s40 = sphi 0, %s37
    %s41 = sphi 0, %s40
    %s57 = sphi 0, %s41
    %s61 = sphi 0, %s61
    %s63 = sphi 0, %s61
    %s64 = sphi 0, %s63
    %s78 = sphi 0, %s64
    %s82 = sphi 0, %s82
    %s84 = sphi 0, %s82
    %s85 = sphi 0, %s84
    %s99 = sphi 0, %s85
    %s103 = sphi 0, %s103
    %s105 = sphi 0, %s103
    %s106 = sphi 0, %s105
    %s120 = sphi 0, %s106
    %s124 = sphi 0, %s124
    %s126 = sphi 0, %s124
    %s127 = sphi 0, %s126
    %s141 = sphi 0, %s127
    %s145 = sphi 0, %s145
    %s147 = sphi 0, %s145
    %s148 = sphi 0, %s147
    %s162 = sphi 0, %s148
    %s166 = sphi 0, %s166
    %s168 = sphi 0, %s166
    %s169 = sphi 0, %s168
    %s183 = sphi 0, %s169
    %s187 = sphi 0, %s187
    %s189 = sphi 0, %s187
    %s190 = sphi 0, %s189
    %s204 = sphi 0, %s190
    %s208 = sphi 0, %s208
    %s210 = sphi 0, %s208
    %s211 = sphi 0, %s210
    %s225 = sphi 0, %s211
  $region4: #{dense_layer_forward.2} parent=0 // loop_header_branch
    %18 = sbr.rel (%p16) target = $region8
  $region5: #{dense_layer_forward.2} parent=0 // loop_body
    %s20 = ssub.s32 %s15, 1
    %s21 = ssub.s32 %s15, 2
    %s28 = sadd.s32 1, %s23
    %p29 = scmp.ge.s32.totalorder %s28, 1
    %s30 = scalar_select %p29, 0, %s28
    %s31 = sadd.s32 1, %s22
    %s32 = scalar_select %p29, %s31, %s22
    %p33 = scmp.ge.s32.totalorder %s32, 2
    %s34 = scalar_select %p33, 0, %s32
    %s35 = ssub.s32 %s23, %s30
    %p36 = scmp.eq.s32.totalorder %s35, 0
    %s38 = sadd.s32 %s37, 1
    %s39 = scalar_select %p36, %s37, %s38
    %p42 = pneg %p36
    %p43 = scmp.eq.s32.totalorder %s15, 1
    %p44 = por %p42, %p43
    %p45 = scmp.ne.s32.totalorder %s37, %s40
    %p46 = scmp.eq.s32.totalorder %s15, 0
    %p47 = por %p45, %p46
    %p48 = scmp.ne.s32.totalorder %s37, %s40
    %p49 = scmp.eq.s32.totalorder %s20, 1
    %p50 = por %p48, %p49
    %p51 = scmp.ne.s32.totalorder %s40, %s41
    %p52 = scmp.eq.s32.totalorder %s20, 0
    %p53 = por %p51, %p52
    %p54 = scmp.ne.s32.totalorder %s40, %s41
    %p55 = scmp.eq.s32.totalorder %s21, 1
    %p56 = por %p54, %p55
    %p58 = scmp.ne.s32.totalorder %s41, %s57
    %p59 = scmp.eq.s32.totalorder %s21, 0
    %p60 = por %p58, %p59
    %s62 = sadd.s32 %s61, 1
    %p65 = scmp.eq.s32.totalorder %s15, 1
    %p66 = scmp.ne.s32.totalorder %s61, %s63
    %p67 = scmp.eq.s32.totalorder %s15, 0
    %p68 = por %p66, %p67
    %p69 = scmp.ne.s32.totalorder %s61, %s63
    %p70 = scmp.eq.s32.totalorder %s20, 1
    %p71 = por %p69, %p70
    %p72 = scmp.ne.s32.totalorder %s63, %s64
    %p73 = scmp.eq.s32.totalorder %s20, 0
    %p74 = por %p72, %p73
    %p75 = scmp.ne.s32.totalorder %s63, %s64
    %p76 = scmp.eq.s32.totalorder %s21, 1
    %p77 = por %p75, %p76
    %p79 = scmp.ne.s32.totalorder %s64, %s78
    %p80 = scmp.eq.s32.totalorder %s21, 0
    %p81 = por %p79, %p80
    %s83 = sadd.s32 %s82, 1
    %p86 = scmp.eq.s32.totalorder %s15, 1
    %p87 = scmp.ne.s32.totalorder %s82, %s84
    %p88 = scmp.eq.s32.totalorder %s15, 0
    %p89 = por %p87, %p88
    %p90 = scmp.ne.s32.totalorder %s82, %s84
    %p91 = scmp.eq.s32.totalorder %s20, 1
    %p92 = por %p90, %p91
    %p93 = scmp.ne.s32.totalorder %s84, %s85
    %p94 = scmp.eq.s32.totalorder %s20, 0
    %p95 = por %p93, %p94
    %p96 = scmp.ne.s32.totalorder %s84, %s85
    %p97 = scmp.eq.s32.totalorder %s21, 1
    %p98 = por %p96, %p97
    %p100 = scmp.ne.s32.totalorder %s85, %s99
    %p101 = scmp.eq.s32.totalorder %s21, 0
    %p102 = por %p100, %p101
    %s104 = sadd.s32 %s103, 1
    %p107 = scmp.eq.s32.totalorder %s15, 1
    %p108 = scmp.ne.s32.totalorder %s103, %s105
    %p109 = scmp.eq.s32.totalorder %s15, 0
    %p110 = por %p108, %p109
    %p111 = scmp.ne.s32.totalorder %s103, %s105
    %p112 = scmp.eq.s32.totalorder %s20, 1
    %p113 = por %p111, %p112
    %p114 = scmp.ne.s32.totalorder %s105, %s106
    %p115 = scmp.eq.s32.totalorder %s20, 0
    %p116 = por %p114, %p115
    %p117 = scmp.ne.s32.totalorder %s105, %s106
    %p118 = scmp.eq.s32.totalorder %s21, 1
    %p119 = por %p117, %p118
    %p121 = scmp.ne.s32.totalorder %s106, %s120
    %p122 = scmp.eq.s32.totalorder %s21, 0
    %p123 = por %p121, %p122
    %s125 = sadd.s32 %s124, 1
    %p128 = scmp.eq.s32.totalorder %s15, 1
    %p129 = scmp.ne.s32.totalorder %s124, %s126
    %p130 = scmp.eq.s32.totalorder %s15, 0
    %p131 = por %p129, %p130
    %p132 = scmp.ne.s32.totalorder %s124, %s126
    %p133 = scmp.eq.s32.totalorder %s20, 1
    %p134 = por %p132, %p133
    %p135 = scmp.ne.s32.totalorder %s126, %s127
    %p136 = scmp.eq.s32.totalorder %s20, 0
    %p137 = por %p135, %p136
    %p138 = scmp.ne.s32.totalorder %s126, %s127
    %p139 = scmp.eq.s32.totalorder %s21, 1
    %p140 = por %p138, %p139
    %p142 = scmp.ne.s32.totalorder %s127, %s141
    %p143 = scmp.eq.s32.totalorder %s21, 0
    %p144 = por %p142, %p143
    %s146 = sadd.s32 %s145, 1
    %p149 = scmp.eq.s32.totalorder %s15, 1
    %p150 = scmp.ne.s32.totalorder %s145, %s147
    %p151 = scmp.eq.s32.totalorder %s15, 0
    %p152 = por %p150, %p151
    %p153 = scmp.ne.s32.totalorder %s145, %s147
    %p154 = scmp.eq.s32.totalorder %s20, 1
    %p155 = por %p153, %p154
    %p156 = scmp.ne.s32.totalorder %s147, %s148
    %p157 = scmp.eq.s32.totalorder %s20, 0
    %p158 = por %p156, %p157
    %p159 = scmp.ne.s32.totalorder %s147, %s148
    %p160 = scmp.eq.s32.totalorder %s21, 1
    %p161 = por %p159, %p160
    %p163 = scmp.ne.s32.totalorder %s148, %s162
    %p164 = scmp.eq.s32.totalorder %s21, 0
    %p165 = por %p163, %p164
    %s167 = sadd.s32 %s166, 1
    %p170 = scmp.eq.s32.totalorder %s15, 1
    %p171 = scmp.ne.s32.totalorder %s166, %s168
    %p172 = scmp.eq.s32.totalorder %s15, 0
    %p173 = por %p171, %p172
    %p174 = scmp.ne.s32.totalorder %s166, %s168
    %p175 = scmp.eq.s32.totalorder %s20, 1
    %p176 = por %p174, %p175
    %p177 = scmp.ne.s32.totalorder %s168, %s169
    %p178 = scmp.eq.s32.totalorder %s20, 0
    %p179 = por %p177, %p178
    %p180 = scmp.ne.s32.totalorder %s168, %s169
    %p181 = scmp.eq.s32.totalorder %s21, 1
    %p182 = por %p180, %p181
    %p184 = scmp.ne.s32.totalorder %s169, %s183
    %p185 = scmp.eq.s32.totalorder %s21, 0
    %p186 = por %p184, %p185
    %s188 = sadd.s32 %s187, 1
    %p191 = scmp.eq.s32.totalorder %s15, 1
    %p192 = scmp.ne.s32.totalorder %s187, %s189
    %p193 = scmp.eq.s32.totalorder %s15, 0
    %p194 = por %p192, %p193
    %p195 = scmp.ne.s32.totalorder %s187, %s189
    %p196 = scmp.eq.s32.totalorder %s20, 1
    %p197 = por %p195, %p196
    %p198 = scmp.ne.s32.totalorder %s189, %s190
    %p199 = scmp.eq.s32.totalorder %s20, 0
    %p200 = por %p198, %p199
    %p201 = scmp.ne.s32.totalorder %s189, %s190
    %p202 = scmp.eq.s32.totalorder %s21, 1
    %p203 = por %p201, %p202
    %p205 = scmp.ne.s32.totalorder %s190, %s204
    %p206 = scmp.eq.s32.totalorder %s21, 0
    %p207 = por %p205, %p206
    %s209 = sadd.s32 %s208, 1
    %p212 = scmp.eq.s32.totalorder %s15, 1
    %p213 = scmp.ne.s32.totalorder %s208, %s210
    %p214 = scmp.eq.s32.totalorder %s15, 0
    %p215 = por %p213, %p214
    %p216 = scmp.ne.s32.totalorder %s208, %s210
    %p217 = scmp.eq.s32.totalorder %s20, 1
    %p218 = por %p216, %p217
    %p219 = scmp.ne.s32.totalorder %s210, %s211
    %p220 = scmp.eq.s32.totalorder %s20, 0
    %p221 = por %p219, %p220
    %p222 = scmp.ne.s32.totalorder %s210, %s211
    %p223 = scmp.eq.s32.totalorder %s21, 1
    %p224 = por %p222, %p223
    %p226 = scmp.ne.s32.totalorder %s211, %s225
    %p227 = scmp.eq.s32.totalorder %s21, 0
    %p228 = por %p226, %p227
    %p229 = scmp.le.s32.totalorder 1, %s15
    %p230 = scmp.lt.s32.totalorder %s15, 3
    %p231 = pnand %p229, %p230
    %p232 = pneg %p231
    // Predicated region
    $region9: #{dense_layer_forward.2} parent=5 // pred_check
      _
    $region10: #{dense_layer_forward.2} parent=5 // pred_check_branch
      %234 = sbr.rel (%p231) target = $region12
    $region11: #{dense_layer_forward.2} parent=5 // pred_region
      %s235 = ssub.s32 %s15, 1
      // Predicated region
      $region13: #{dense_layer_forward.2} parent=11 // pred_check
        %p236 = pneg %p53
      $region14: #{dense_layer_forward.2} parent=11 // pred_check_branch
        %238 = sbr.rel (%p236) target = $region16
      $region15: #{dense_layer_forward.2} parent=11 // pred_region
        %s239 = smul.u32 64, %s25
        %p240 = scmp.lt.s32.totalorder %s239, 63
        %s241 = scalar_select %p240, %s239, 63
        %s242 = smul.addr %s241, 8
        %s243 = scalar_lea.vmem %s0, %s242
        %s244 = smul.u32 64, %s25
      $region16: #{dense_layer_forward.2} parent=11 // pred_fallthru
        _
      // Predicated region
      $region17: #{dense_layer_forward.2} parent=11 // pred_check
        %p245 = pneg %p74
      $region18: #{dense_layer_forward.2} parent=11 // pred_check_branch
        %247 = sbr.rel (%p245) target = $region20
      $region19: #{dense_layer_forward.2} parent=11 // pred_region
        _
      $region20: #{dense_layer_forward.2} parent=11 // pred_fallthru
        _
      // Predicated region
      $region21: #{dense_layer_forward.2} parent=11 // pred_check
        %p248 = pneg %p95
      $region22: #{dense_layer_forward.2} parent=11 // pred_check_branch
        %250 = sbr.rel (%p248) target = $region24
      $region23: #{dense_layer_forward.2} parent=11 // pred_region
        _
      $region24: #{dense_layer_forward.2} parent=11 // pred_fallthru
        _
      // Predicated region
      $region25: #{dense_layer_forward.2} parent=11 // pred_check
        %p251 = pneg %p116
      $region26: #{dense_layer_forward.2} parent=11 // pred_check_branch
        %253 = sbr.rel (%p251) target = $region28
      $region27: #{dense_layer_forward.2} parent=11 // pred_region
        _
      $region28: #{dense_layer_forward.2} parent=11 // pred_fallthru
        _
      // Predicated region
      $region29: #{dense_layer_forward.2} parent=11 // pred_check
        %p254 = pneg %p137
      $region30: #{dense_layer_forward.2} parent=11 // pred_check_branch
        %256 = sbr.rel (%p254) target = $region32
      $region31: #{dense_layer_forward.2} parent=11 // pred_region
        _
      $region32: #{dense_layer_forward.2} parent=11 // pred_fallthru
        _
    $region12: #{dense_layer_forward.2} parent=5 // pred_fallthru
      _
    %p257 = scmp.lt.s32.totalorder %s15, 2
    // Predicated region
    $region33: #{dense_layer_forward.2} parent=5 // pred_check
      %p258 = pneg %p257
    $region34: #{dense_layer_forward.2} parent=5 // pred_check_branch
      %260 = sbr.rel (%p258) target = $region36
    $region35: #{dense_layer_forward.2} parent=5 // pred_region
      _
    $region36: #{dense_layer_forward.2} parent=5 // pred_fallthru
      _
    %p261 = scmp.le.s32.totalorder 1, %s15
    %p262 = scmp.lt.s32.totalorder %s15, 3
    %p263 = pnand %p261, %p262
    %p264 = pneg %p263
    // Predicated region
    $region37: #{dense_layer_forward.2} parent=5 // pred_check
      _
    $region38: #{dense_layer_forward.2} parent=5 // pred_check_branch
      %266 = sbr.rel (%p263) target = $region40
    $region39: #{dense_layer_forward.2} parent=5 // pred_region
      %s267 = ssub.s32 %s15, 1
      %s268 = smul.u32 64, %s25
      %p269 = scmp.lt.s32.totalorder %s268, 63
      %s270 = scalar_select %p269, %s268, 63
      %s271 = smul.addr %s270, 8
      %s272 = scalar_lea.vmem %s0, %s271
      %p273 = pneg %p53
      %p274 = pneg %p50
      %p275 = pneg %p74
      %p276 = pneg %p71
      %p277 = pneg %p95
      %p278 = pneg %p92
      %p279 = pneg %p116
      %p280 = pneg %p113
      %p281 = pneg %p137
      %p282 = pneg %p134
      %p283 = pneg %p158
      %p284 = pneg %p155
      %p285 = pneg %p179
      %p286 = pneg %p176
      %p287 = pneg %p200
      %p288 = pneg %p197
      %p289 = pneg %p221
      %p290 = pneg %p218
      %s291 = smul.u32 64, %s25
      %p292 = scmp.lt.s32.totalorder %s291, 63
      %s293 = scalar_select %p292, %s291, 63
      %s294 = smul.addr %s293, 8
      %s295 = scalar_lea.vmem %s0, %s294
      %s296 = smul.u32 64, %s25
      %p298 = scmp.eq.s32.totalorder %s24, 0
      %p299 = scmp.eq.s32.totalorder %s25, 0
      %p300 = pnand %p298, %p299
      %p301 = pneg %p300
      // Predicated region
      $region41: #{dense_layer_forward.2} parent=39 // pred_check
        _
      $region42: #{dense_layer_forward.2} parent=39 // pred_check_branch
        %303 = sbr.rel (%p300) target = $region44
      $region43: #{dense_layer_forward.2} parent=39 // pred_region
        %vm304 = vcmask 24576
        %305 = vst.msk [vmem:[%s5] sm:$0x1] %vm304, 0.0
        %306 = vst.msk [vmem:[%s6] sm:$0x1] %vm304, 0.0
        %vm307 = vcmask 122880
        %308 = vst.msk [vmem:[%s7] sm:$0x1] %vm307, 0.0
        %309 = vst.msk [vmem:[%s8] sm:$0x1] %vm307, 0.0
      $region44: #{dense_layer_forward.2} parent=39 // pred_fallthru
        _
      %v310 = vld [vmem:[%s295] sm:$0xff]
      %v311 = vld [vmem:[%s295 + $0x8] sm:$0xff]
      %v312 = vld [vmem:[%s295 + $0x10] sm:$0xff]
      %v313 = vld [vmem:[%s295 + $0x18] sm:$0xff]
      %v314 = vld [vmem:[%s295 + $0x20] sm:$0xff]
      %v315 = vld [vmem:[%s295 + $0x28] sm:$0xff]
      %v316 = vld [vmem:[%s295 + $0x30] sm:$0xff]
      %v317 = vld [vmem:[%s295 + $0x38] sm:$0xff]
      %v318 = vld [vmem:[%s295 + $0x40] sm:$0xff]
      %v319 = vld [vmem:[%s295 + $0x48] sm:$0xff]
      %v320 = vld [vmem:[%s295 + $0x50] sm:$0xff]
      %v321 = vld [vmem:[%s295 + $0x58] sm:$0xff]
      %v322 = vld [vmem:[%s295 + $0x60] sm:$0xff]
      %v323 = vld [vmem:[%s295 + $0x68] sm:$0xff]
      %v324 = vld [vmem:[%s295 + $0x70] sm:$0xff]
      %v325 = vld [vmem:[%s295 + $0x78] sm:$0xff]
      %v326 = vld [vmem:[%s295 + $0x80] sm:$0xff]
      %v327 = vld [vmem:[%s295 + $0x88] sm:$0xff]
      %v328 = vld [vmem:[%s295 + $0x90] sm:$0xff]
      %v329 = vld [vmem:[%s295 + $0x98] sm:$0xff]
      %v330 = vld [vmem:[%s295 + $0xa0] sm:$0xff]
      %v331 = vld [vmem:[%s295 + $0xa8] sm:$0xff]
      %v332 = vld [vmem:[%s295 + $0xb0] sm:$0xff]
      %v333 = vld [vmem:[%s295 + $0xb8] sm:$0xff]
      %v334 = vld [vmem:[%s295 + $0xc0] sm:$0xff]
      %v335 = vld [vmem:[%s295 + $0xc8] sm:$0xff]
      %v336 = vld [vmem:[%s295 + $0xd0] sm:$0xff]
      %v337 = vld [vmem:[%s295 + $0xd8] sm:$0xff]
      %v338 = vld [vmem:[%s295 + $0xe0] sm:$0xff]
      %v339 = vld [vmem:[%s295 + $0xe8] sm:$0xff]
      %v340 = vld [vmem:[%s295 + $0xf0] sm:$0xff]
      %v341 = vld [vmem:[%s295 + $0xf8] sm:$0xff]
      %v342 = vld [vmem:[%s295 + $0x100] sm:$0xff]
      %v343 = vld [vmem:[%s295 + $0x108] sm:$0xff]
      %v344 = vld [vmem:[%s295 + $0x110] sm:$0xff]
      %v345 = vld [vmem:[%s295 + $0x118] sm:$0xff]
      %v346 = vld [vmem:[%s295 + $0x120] sm:$0xff]
      %v347 = vld [vmem:[%s295 + $0x128] sm:$0xff]
      %v348 = vld [vmem:[%s295 + $0x130] sm:$0xff]
      %v349 = vld [vmem:[%s295 + $0x138] sm:$0xff]
      %v350 = vld [vmem:[%s295 + $0x140] sm:$0xff]
      %v351 = vld [vmem:[%s295 + $0x148] sm:$0xff]
      %v352 = vld [vmem:[%s295 + $0x150] sm:$0xff]
      %v353 = vld [vmem:[%s295 + $0x158] sm:$0xff]
      %v354 = vld [vmem:[%s295 + $0x160] sm:$0xff]
      %v355 = vld [vmem:[%s295 + $0x168] sm:$0xff]
      %v356 = vld [vmem:[%s295 + $0x170] sm:$0xff]
      %v357 = vld [vmem:[%s295 + $0x178] sm:$0xff]
      %v358 = vld [vmem:[%s295 + $0x180] sm:$0xff]
      %v359 = vld [vmem:[%s295 + $0x188] sm:$0xff]
      %v360 = vld [vmem:[%s295 + $0x190] sm:$0xff]
      %v361 = vld [vmem:[%s295 + $0x198] sm:$0xff]
      %v362 = vld [vmem:[%s295 + $0x1a0] sm:$0xff]
      %v363 = vld [vmem:[%s295 + $0x1a8] sm:$0xff]
      %v364 = vld [vmem:[%s295 + $0x1b0] sm:$0xff]
      %v365 = vld [vmem:[%s295 + $0x1b8] sm:$0xff]
      %v366 = vld [vmem:[%s295 + $0x1c0] sm:$0xff]
      %v367 = vld [vmem:[%s295 + $0x1c8] sm:$0xff]
      %v368 = vld [vmem:[%s295 + $0x1d0] sm:$0xff]
      %v369 = vld [vmem:[%s295 + $0x1d8] sm:$0xff]
      %v370 = vld [vmem:[%s295 + $0x1e0] sm:$0xff]
      %v371 = vld [vmem:[%s295 + $0x1e8] sm:$0xff]
      %v372 = vld [vmem:[%s295 + $0x1f0] sm:$0xff]
      %v373 = vld [vmem:[%s295 + $0x1f8] sm:$0xff]
      // Predicated region
      $region45: #{dense_layer_forward.2} parent=39 // pred_check
        %p374 = pneg %p298
      $region46: #{dense_layer_forward.2} parent=39 // pred_check_branch
        %376 = sbr.rel (%p374) target = $region48
      $region47: #{dense_layer_forward.2} parent=39 // pred_region
        %v377 = vld [vmem:[%s5] sm:$0x1]
        %vm378 = vcmask 31744
        %v379 = vsel %vm378, %v310, 0.0
        %v380 = vsel %vm378, %v311, 0.0
        %v381 = vadd.f32 %v379, %v380
        %v382 = vsel %vm378, %v312, 0.0
        %v383 = vadd.f32 %v381, %v382
        %v384 = vsel %vm378, %v313, 0.0
        %v385 = vadd.f32 %v383, %v384
        %v386 = vsel %vm378, %v314, 0.0
        %v387 = vadd.f32 %v385, %v386
        %v388 = vsel %vm378, %v315, 0.0
        %v389 = vadd.f32 %v387, %v388
        %v390 = vsel %vm378, %v316, 0.0
        %v391 = vadd.f32 %v389, %v390
        %v392 = vsel %vm378, %v317, 0.0
        %v393 = vadd.f32 %v391, %v392
        %v394 = vsel %vm378, %v318, 0.0
        %v395 = vadd.f32 %v393, %v394
        %v396 = vsel %vm378, %v319, 0.0
        %v397 = vadd.f32 %v395, %v396
        %v398 = vsel %vm378, %v320, 0.0
        %v399 = vadd.f32 %v397, %v398
        %v400 = vsel %vm378, %v321, 0.0
        %v401 = vadd.f32 %v399, %v400
        %v402 = vsel %vm378, %v322, 0.0
        %v403 = vadd.f32 %v401, %v402
        %v404 = vsel %vm378, %v323, 0.0
        %v405 = vadd.f32 %v403, %v404
        %v406 = vsel %vm378, %v324, 0.0
        %v407 = vadd.f32 %v405, %v406
        %v408 = vsel %vm378, %v325, 0.0
        %v409 = vadd.f32 %v407, %v408
        %v410 = vsel %vm378, %v326, 0.0
        %v411 = vadd.f32 %v409, %v410
        %v412 = vsel %vm378, %v327, 0.0
        %v413 = vadd.f32 %v411, %v412
        %v414 = vsel %vm378, %v328, 0.0
        %v415 = vadd.f32 %v413, %v414
        %v416 = vsel %vm378, %v329, 0.0
        %v417 = vadd.f32 %v415, %v416
        %v418 = vsel %vm378, %v330, 0.0
        %v419 = vadd.f32 %v417, %v418
        %v420 = vsel %vm378, %v331, 0.0
        %v421 = vadd.f32 %v419, %v420
        %v422 = vsel %vm378, %v332, 0.0
        %v423 = vadd.f32 %v421, %v422
        %v424 = vsel %vm378, %v333, 0.0
        %v425 = vadd.f32 %v423, %v424
        %v426 = vsel %vm378, %v334, 0.0
        %v427 = vadd.f32 %v425, %v426
        %v428 = vsel %vm378, %v335, 0.0
        %v429 = vadd.f32 %v427, %v428
        %v430 = vsel %vm378, %v336, 0.0
        %v431 = vadd.f32 %v429, %v430
        %v432 = vsel %vm378, %v337, 0.0
        %v433 = vadd.f32 %v431, %v432
        %v434 = vsel %vm378, %v338, 0.0
        %v435 = vadd.f32 %v433, %v434
        %v436 = vsel %vm378, %v339, 0.0
        %v437 = vadd.f32 %v435, %v436
        %v438 = vsel %vm378, %v340, 0.0
        %v439 = vadd.f32 %v437, %v438
        %v440 = vsel %vm378, %v341, 0.0
        %v441 = vadd.f32 %v439, %v440
        %v442 = vsel %vm378, %v342, 0.0
        %v443 = vadd.f32 %v441, %v442
        %v444 = vsel %vm378, %v343, 0.0
        %v445 = vadd.f32 %v443, %v444
        %v446 = vsel %vm378, %v344, 0.0
        %v447 = vadd.f32 %v445, %v446
        %v448 = vsel %vm378, %v345, 0.0
        %v449 = vadd.f32 %v447, %v448
        %v450 = vsel %vm378, %v346, 0.0
        %v451 = vadd.f32 %v449, %v450
        %v452 = vsel %vm378, %v347, 0.0
        %v453 = vadd.f32 %v451, %v452
        %v454 = vsel %vm378, %v348, 0.0
        %v455 = vadd.f32 %v453, %v454
        %v456 = vsel %vm378, %v349, 0.0
        %v457 = vadd.f32 %v455, %v456
        %v458 = vsel %vm378, %v350, 0.0
        %v459 = vadd.f32 %v457, %v458
        %v460 = vsel %vm378, %v351, 0.0
        %v461 = vadd.f32 %v459, %v460
        %v462 = vsel %vm378, %v352, 0.0
        %v463 = vadd.f32 %v461, %v462
        %v464 = vsel %vm378, %v353, 0.0
        %v465 = vadd.f32 %v463, %v464
        %v466 = vsel %vm378, %v354, 0.0
        %v467 = vadd.f32 %v465, %v466
        %v468 = vsel %vm378, %v355, 0.0
        %v469 = vadd.f32 %v467, %v468
        %v470 = vsel %vm378, %v356, 0.0
        %v471 = vadd.f32 %v469, %v470
        %v472 = vsel %vm378, %v357, 0.0
        %v473 = vadd.f32 %v471, %v472
        %v474 = vsel %vm378, %v358, 0.0
        %v475 = vadd.f32 %v473, %v474
        %v476 = vsel %vm378, %v359, 0.0
        %v477 = vadd.f32 %v475, %v476
        %v478 = vsel %vm378, %v360, 0.0
        %v479 = vadd.f32 %v477, %v478
        %v480 = vsel %vm378, %v361, 0.0
        %v481 = vadd.f32 %v479, %v480
        %v482 = vsel %vm378, %v362, 0.0
        %v483 = vadd.f32 %v481, %v482
        %v484 = vsel %vm378, %v363, 0.0
        %v485 = vadd.f32 %v483, %v484
        %v486 = vsel %vm378, %v364, 0.0
        %v487 = vadd.f32 %v485, %v486
        %v488 = vsel %vm378, %v365, 0.0
        %v489 = vadd.f32 %v487, %v488
        %v490 = vsel %vm378, %v366, 0.0
        %v491 = vadd.f32 %v489, %v490
        %v492 = vsel %vm378, %v367, 0.0
        %v493 = vadd.f32 %v491, %v492
        %v494 = vsel %vm378, %v368, 0.0
        %v495 = vadd.f32 %v493, %v494
        %v496 = vsel %vm378, %v369, 0.0
        %v497 = vadd.f32 %v495, %v496
        %v498 = vsel %vm378, %v370, 0.0
        %v499 = vadd.f32 %v497, %v498
        %v500 = vsel %vm378, %v371, 0.0
        %v501 = vadd.f32 %v499, %v500
        %v502 = vsel %vm378, %v372, 0.0
        %v503 = vadd.f32 %v501, %v502
        %v504 = vsel %vm378, %v373, 0.0
        %v505 = vadd.f32 %v503, %v504
        %v506 = vrot.slane %v505, 4
        %v507 = vadd.f32 %v505, %v506
        %v508 = vrot.slane %v507, 2
        %v509 = vadd.f32 %v507, %v508
        %v510 = vrot.slane %v509, 1
        %v511 = vadd.f32 %v509, %v510
        %v512 = vadd.f32 %v377, %v511
        %vm513 = vcmask 24576
        %514 = vst.msk [vmem:[%s5] sm:$0x1] %vm513, %v512
        %v515 = vld [vmem:[%s6] sm:$0x1]
        %v516 = vmul.f32 %v310, %v310
        %v517 = vmul.f32 %v311, %v311
        %v518 = vmul.f32 %v312, %v312
        %v519 = vmul.f32 %v313, %v313
        %v520 = vmul.f32 %v314, %v314
        %v521 = vmul.f32 %v315, %v315
        %v522 = vmul.f32 %v316, %v316
        %v523 = vmul.f32 %v317, %v317
        %v524 = vmul.f32 %v318, %v318
        %v525 = vmul.f32 %v319, %v319
        %v526 = vmul.f32 %v320, %v320
        %v527 = vmul.f32 %v321, %v321
        %v528 = vmul.f32 %v322, %v322
        %v529 = vmul.f32 %v323, %v323
        %v530 = vmul.f32 %v324, %v324
        %v531 = vmul.f32 %v325, %v325
        %v532 = vmul.f32 %v326, %v326
        %v533 = vmul.f32 %v327, %v327
        %v534 = vmul.f32 %v328, %v328
        %v535 = vmul.f32 %v329, %v329
        %v536 = vmul.f32 %v330, %v330
        %v537 = vmul.f32 %v331, %v331
        %v538 = vmul.f32 %v332, %v332
        %v539 = vmul.f32 %v333, %v333
        %v540 = vmul.f32 %v334, %v334
        %v541 = vmul.f32 %v335, %v335
        %v542 = vmul.f32 %v336, %v336
        %v543 = vmul.f32 %v337, %v337
        %v544 = vmul.f32 %v338, %v338
        %v545 = vmul.f32 %v339, %v339
        %v546 = vmul.f32 %v340, %v340
        %v547 = vmul.f32 %v341, %v341
        %v548 = vmul.f32 %v342, %v342
        %v549 = vmul.f32 %v343, %v343
        %v550 = vmul.f32 %v344, %v344
        %v551 = vmul.f32 %v345, %v345
        %v552 = vmul.f32 %v346, %v346
        %v553 = vmul.f32 %v347, %v347
        %v554 = vmul.f32 %v348, %v348
        %v555 = vmul.f32 %v349, %v349
        %v556 = vmul.f32 %v350, %v350
        %v557 = vmul.f32 %v351, %v351
        %v558 = vmul.f32 %v352, %v352
        %v559 = vmul.f32 %v353, %v353
        %v560 = vmul.f32 %v354, %v354
        %v561 = vmul.f32 %v355, %v355
        %v562 = vmul.f32 %v356, %v356
        %v563 = vmul.f32 %v357, %v357
        %v564 = vmul.f32 %v358, %v358
        %v565 = vmul.f32 %v359, %v359
        %v566 = vmul.f32 %v360, %v360
        %v567 = vmul.f32 %v361, %v361
        %v568 = vmul.f32 %v362, %v362
        %v569 = vmul.f32 %v363, %v363
        %v570 = vmul.f32 %v364, %v364
        %v571 = vmul.f32 %v365, %v365
        %v572 = vmul.f32 %v366, %v366
        %v573 = vmul.f32 %v367, %v367
        %v574 = vmul.f32 %v368, %v368
        %v575 = vmul.f32 %v369, %v369
        %v576 = vmul.f32 %v370, %v370
        %v577 = vmul.f32 %v371, %v371
        %v578 = vmul.f32 %v372, %v372
        %v579 = vmul.f32 %v373, %v373
        %v580 = vsel %vm378, %v516, 0.0
        %v581 = vsel %vm378, %v517, 0.0
        %v582 = vadd.f32 %v580, %v581
        %v583 = vsel %vm378, %v518, 0.0
        %v584 = vadd.f32 %v582, %v583
        %v585 = vsel %vm378, %v519, 0.0
        %v586 = vadd.f32 %v584, %v585
        %v587 = vsel %vm378, %v520, 0.0
        %v588 = vadd.f32 %v586, %v587
        %v589 = vsel %vm378, %v521, 0.0
        %v590 = vadd.f32 %v588, %v589
        %v591 = vsel %vm378, %v522, 0.0
        %v592 = vadd.f32 %v590, %v591
        %v593 = vsel %vm378, %v523, 0.0
        %v594 = vadd.f32 %v592, %v593
        %v595 = vsel %vm378, %v524, 0.0
        %v596 = vadd.f32 %v594, %v595
        %v597 = vsel %vm378, %v525, 0.0
        %v598 = vadd.f32 %v596, %v597
        %v599 = vsel %vm378, %v526, 0.0
        %v600 = vadd.f32 %v598, %v599
        %v601 = vsel %vm378, %v527, 0.0
        %v602 = vadd.f32 %v600, %v601
        %v603 = vsel %vm378, %v528, 0.0
        %v604 = vadd.f32 %v602, %v603
        %v605 = vsel %vm378, %v529, 0.0
        %v606 = vadd.f32 %v604, %v605
        %v607 = vsel %vm378, %v530, 0.0
        %v608 = vadd.f32 %v606, %v607
        %v609 = vsel %vm378, %v531, 0.0
        %v610 = vadd.f32 %v608, %v609
        %v611 = vsel %vm378, %v532, 0.0
        %v612 = vadd.f32 %v610, %v611
        %v613 = vsel %vm378, %v533, 0.0
        %v614 = vadd.f32 %v612, %v613
        %v615 = vsel %vm378, %v534, 0.0
        %v616 = vadd.f32 %v614, %v615
        %v617 = vsel %vm378, %v535, 0.0
        %v618 = vadd.f32 %v616, %v617
        %v619 = vsel %vm378, %v536, 0.0
        %v620 = vadd.f32 %v618, %v619
        %v621 = vsel %vm378, %v537, 0.0
        %v622 = vadd.f32 %v620, %v621
        %v623 = vsel %vm378, %v538, 0.0
        %v624 = vadd.f32 %v622, %v623
        %v625 = vsel %vm378, %v539, 0.0
        %v626 = vadd.f32 %v624, %v625
        %v627 = vsel %vm378, %v540, 0.0
        %v628 = vadd.f32 %v626, %v627
        %v629 = vsel %vm378, %v541, 0.0
        %v630 = vadd.f32 %v628, %v629
        %v631 = vsel %vm378, %v542, 0.0
        %v632 = vadd.f32 %v630, %v631
        %v633 = vsel %vm378, %v543, 0.0
        %v634 = vadd.f32 %v632, %v633
        %v635 = vsel %vm378, %v544, 0.0
        %v636 = vadd.f32 %v634, %v635
        %v637 = vsel %vm378, %v545, 0.0
        %v638 = vadd.f32 %v636, %v637
        %v639 = vsel %vm378, %v546, 0.0
        %v640 = vadd.f32 %v638, %v639
        %v641 = vsel %vm378, %v547, 0.0
        %v642 = vadd.f32 %v640, %v641
        %v643 = vsel %vm378, %v548, 0.0
        %v644 = vadd.f32 %v642, %v643
        %v645 = vsel %vm378, %v549, 0.0
        %v646 = vadd.f32 %v644, %v645
        %v647 = vsel %vm378, %v550, 0.0
        %v648 = vadd.f32 %v646, %v647
        %v649 = vsel %vm378, %v551, 0.0
        %v650 = vadd.f32 %v648, %v649
        %v651 = vsel %vm378, %v552, 0.0
        %v652 = vadd.f32 %v650, %v651
        %v653 = vsel %vm378, %v553, 0.0
        %v654 = vadd.f32 %v652, %v653
        %v655 = vsel %vm378, %v554, 0.0
        %v656 = vadd.f32 %v654, %v655
        %v657 = vsel %vm378, %v555, 0.0
        %v658 = vadd.f32 %v656, %v657
        %v659 = vsel %vm378, %v556, 0.0
        %v660 = vadd.f32 %v658, %v659
        %v661 = vsel %vm378, %v557, 0.0
        %v662 = vadd.f32 %v660, %v661
        %v663 = vsel %vm378, %v558, 0.0
        %v664 = vadd.f32 %v662, %v663
        %v665 = vsel %vm378, %v559, 0.0
        %v666 = vadd.f32 %v664, %v665
        %v667 = vsel %vm378, %v560, 0.0
        %v668 = vadd.f32 %v666, %v667
        %v669 = vsel %vm378, %v561, 0.0
        %v670 = vadd.f32 %v668, %v669
        %v671 = vsel %vm378, %v562, 0.0
        %v672 = vadd.f32 %v670, %v671
        %v673 = vsel %vm378, %v563, 0.0
        %v674 = vadd.f32 %v672, %v673
        %v675 = vsel %vm378, %v564, 0.0
        %v676 = vadd.f32 %v674, %v675
        %v677 = vsel %vm378, %v565, 0.0
        %v678 = vadd.f32 %v676, %v677
        %v679 = vsel %vm378, %v566, 0.0
        %v680 = vadd.f32 %v678, %v679
        %v681 = vsel %vm378, %v567, 0.0
        %v682 = vadd.f32 %v680, %v681
        %v683 = vsel %vm378, %v568, 0.0
        %v684 = vadd.f32 %v682, %v683
        %v685 = vsel %vm378, %v569, 0.0
        %v686 = vadd.f32 %v684, %v685
        %v687 = vsel %vm378, %v570, 0.0
        %v688 = vadd.f32 %v686, %v687
        %v689 = vsel %vm378, %v571, 0.0
        %v690 = vadd.f32 %v688, %v689
        %v691 = vsel %vm378, %v572, 0.0
        %v692 = vadd.f32 %v690, %v691
        %v693 = vsel %vm378, %v573, 0.0
        %v694 = vadd.f32 %v692, %v693
        %v695 = vsel %vm378, %v574, 0.0
        %v696 = vadd.f32 %v694, %v695
        %v697 = vsel %vm378, %v575, 0.0
        %v698 = vadd.f32 %v696, %v697
        %v699 = vsel %vm378, %v576, 0.0
        %v700 = vadd.f32 %v698, %v699
        %v701 = vsel %vm378, %v577, 0.0
        %v702 = vadd.f32 %v700, %v701
        %v703 = vsel %vm378, %v578, 0.0
        %v704 = vadd.f32 %v702, %v703
        %v705 = vsel %vm378, %v579, 0.0
        %v706 = vadd.f32 %v704, %v705
        %v707 = vrot.slane %v706, 4
        %v708 = vadd.f32 %v706, %v707
        %v709 = vrot.slane %v708, 2
        %v710 = vadd.f32 %v708, %v709
        %v711 = vrot.slane %v710, 1
        %v712 = vadd.f32 %v710, %v711
        %v713 = vadd.f32 %v515, %v712
        %714 = vst.msk [vmem:[%s6] sm:$0x1] %vm513, %v713
      $region48: #{dense_layer_forward.2} parent=39 // pred_fallthru
        _
      %p715 = scmp.eq.s32.totalorder %s24, 1
      // Predicated region
      $region49: #{dense_layer_forward.2} parent=39 // pred_check
        %p716 = pneg %p715
      $region50: #{dense_layer_forward.2} parent=39 // pred_check_branch
        %718 = sbr.rel (%p716) target = $region52
      $region51: #{dense_layer_forward.2} parent=39 // pred_region
        %v719 = vld [vmem:[%s5] sm:$0x1]
        %v720 = vmul.f32 %v719, 0.001953125
        %v721 = vld [vmem:[%s6] sm:$0x1]
        %v722 = vmul.f32 %v721, 0.001953125
        %v723 = vmul.f32 %v720, %v720
        %v724 = vsub.f32 %v722, %v723
        %v725 = vld [vmem:[%s1] sm:$0x1]
        %v726 = vadd.f32 %v724, 1e-05
        %v727 = vrsqrt.pop %v726
        %v728 = vmul.f32 %v727, %v726
        %v729 = vmul.f32 %v728, %v727
        %v730 = vmul.f32 0.5, %v729
        %v731 = vsub.f32 1.5, %v730
        %v732 = vmul.f32 %v727, %v731
        %vm733 = vweird.f32 %v726
        %vm734 = vweird.f32 %v727
        %vm735 = vmor %vm733, %vm734
        %v736 = vsel %vm735, %v727, %v732
        %v737 = vmul.f32 %v725, %v736
        %v738 = vld [vmem:[%s2] sm:$0x1]
        %v739 = vmul.f32 %v720, %v737
        %v740 = vsub.f32 %v738, %v739
        %v742 = vperm.slane %v737, 0
        %v744 = vmul.f32 %v310, %v742
        %v745 = vmul.f32 %v311, %v742
        %v746 = vmul.f32 %v312, %v742
        %v747 = vmul.f32 %v313, %v742
        %v748 = vmul.f32 %v314, %v742
        %v749 = vmul.f32 %v315, %v742
        %v750 = vmul.f32 %v316, %v742
        %v751 = vmul.f32 %v317, %v742
        %v752 = vmul.f32 %v318, %v742
        %v753 = vmul.f32 %v319, %v742
        %v754 = vmul.f32 %v320, %v742
        %v755 = vmul.f32 %v321, %v742
        %v756 = vmul.f32 %v322, %v742
        %v757 = vmul.f32 %v323, %v742
        %v758 = vmul.f32 %v324, %v742
        %v759 = vmul.f32 %v325, %v742
        %v760 = vmul.f32 %v326, %v742
        %v761 = vmul.f32 %v327, %v742
        %v762 = vmul.f32 %v328, %v742
        %v763 = vmul.f32 %v329, %v742
        %v764 = vmul.f32 %v330, %v742
        %v765 = vmul.f32 %v331, %v742
        %v766 = vmul.f32 %v332, %v742
        %v767 = vmul.f32 %v333, %v742
        %v768 = vmul.f32 %v334, %v742
        %v769 = vmul.f32 %v335, %v742
        %v770 = vmul.f32 %v336, %v742
        %v771 = vmul.f32 %v337, %v742
        %v772 = vmul.f32 %v338, %v742
        %v773 = vmul.f32 %v339, %v742
        %v774 = vmul.f32 %v340, %v742
        %v775 = vmul.f32 %v341, %v742
        %v776 = vmul.f32 %v342, %v742
        %v777 = vmul.f32 %v343, %v742
        %v778 = vmul.f32 %v344, %v742
        %v779 = vmul.f32 %v345, %v742
        %v780 = vmul.f32 %v346, %v742
        %v781 = vmul.f32 %v347, %v742
        %v782 = vmul.f32 %v348, %v742
        %v783 = vmul.f32 %v349, %v742
        %v784 = vmul.f32 %v350, %v742
        %v785 = vmul.f32 %v351, %v742
        %v786 = vmul.f32 %v352, %v742
        %v787 = vmul.f32 %v353, %v742
        %v788 = vmul.f32 %v354, %v742
        %v789 = vmul.f32 %v355, %v742
        %v790 = vmul.f32 %v356, %v742
        %v791 = vmul.f32 %v357, %v742
        %v792 = vmul.f32 %v358, %v742
        %v793 = vmul.f32 %v359, %v742
        %v794 = vmul.f32 %v360, %v742
        %v795 = vmul.f32 %v361, %v742
        %v796 = vmul.f32 %v362, %v742
        %v797 = vmul.f32 %v363, %v742
        %v798 = vmul.f32 %v364, %v742
        %v799 = vmul.f32 %v365, %v742
        %v800 = vmul.f32 %v366, %v742
        %v801 = vmul.f32 %v367, %v742
        %v802 = vmul.f32 %v368, %v742
        %v803 = vmul.f32 %v369, %v742
        %v804 = vmul.f32 %v370, %v742
        %v805 = vmul.f32 %v371, %v742
        %v806 = vmul.f32 %v372, %v742
        %v807 = vmul.f32 %v373, %v742
        %v809 = vperm.slane %v740, 0
        %v811 = vadd.f32 %v744, %v809
        %v812 = vadd.f32 %v745, %v809
        %v813 = vadd.f32 %v746, %v809
        %v814 = vadd.f32 %v747, %v809
        %v815 = vadd.f32 %v748, %v809
        %v816 = vadd.f32 %v749, %v809
        %v817 = vadd.f32 %v750, %v809
        %v818 = vadd.f32 %v751, %v809
        %v819 = vadd.f32 %v752, %v809
        %v820 = vadd.f32 %v753, %v809
        %v821 = vadd.f32 %v754, %v809
        %v822 = vadd.f32 %v755, %v809
        %v823 = vadd.f32 %v756, %v809
        %v824 = vadd.f32 %v757, %v809
        %v825 = vadd.f32 %v758, %v809
        %v826 = vadd.f32 %v759, %v809
        %v827 = vadd.f32 %v760, %v809
        %v828 = vadd.f32 %v761, %v809
        %v829 = vadd.f32 %v762, %v809
        %v830 = vadd.f32 %v763, %v809
        %v831 = vadd.f32 %v764, %v809
        %v832 = vadd.f32 %v765, %v809
        %v833 = vadd.f32 %v766, %v809
        %v834 = vadd.f32 %v767, %v809
        %v835 = vadd.f32 %v768, %v809
        %v836 = vadd.f32 %v769, %v809
        %v837 = vadd.f32 %v770, %v809
        %v838 = vadd.f32 %v771, %v809
        %v839 = vadd.f32 %v772, %v809
        %v840 = vadd.f32 %v773, %v809
        %v841 = vadd.f32 %v774, %v809
        %v842 = vadd.f32 %v775, %v809
        %v843 = vadd.f32 %v776, %v809
        %v844 = vadd.f32 %v777, %v809
        %v845 = vadd.f32 %v778, %v809
        %v846 = vadd.f32 %v779, %v809
        %v847 = vadd.f32 %v780, %v809
        %v848 = vadd.f32 %v781, %v809
        %v849 = vadd.f32 %v782, %v809
        %v850 = vadd.f32 %v783, %v809
        %v851 = vadd.f32 %v784, %v809
        %v852 = vadd.f32 %v785, %v809
        %v853 = vadd.f32 %v786, %v809
        %v854 = vadd.f32 %v787, %v809
        %v855 = vadd.f32 %v788, %v809
        %v856 = vadd.f32 %v789, %v809
        %v857 = vadd.f32 %v790, %v809
        %v858 = vadd.f32 %v791, %v809
        %v859 = vadd.f32 %v792, %v809
        %v860 = vadd.f32 %v793, %v809
        %v861 = vadd.f32 %v794, %v809
        %v862 = vadd.f32 %v795, %v809
        %v863 = vadd.f32 %v796, %v809
        %v864 = vadd.f32 %v797, %v809
        %v865 = vadd.f32 %v798, %v809
        %v866 = vadd.f32 %v799, %v809
        %v867 = vadd.f32 %v800, %v809
        %v868 = vadd.f32 %v801, %v809
        %v869 = vadd.f32 %v802, %v809
        %v870 = vadd.f32 %v803, %v809
        %v871 = vadd.f32 %v804, %v809
        %v872 = vadd.f32 %v805, %v809
        %v873 = vadd.f32 %v806, %v809
        %v874 = vadd.f32 %v807, %v809
        %v875 = vmax.f32 %v811, 0.0
        %v876 = vmax.f32 %v812, 0.0
        %v877 = vmax.f32 %v813, 0.0
        %v878 = vmax.f32 %v814, 0.0
        %v879 = vmax.f32 %v815, 0.0
        %v880 = vmax.f32 %v816, 0.0
        %v881 = vmax.f32 %v817, 0.0
        %v882 = vmax.f32 %v818, 0.0
        %v883 = vmax.f32 %v819, 0.0
        %v884 = vmax.f32 %v820, 0.0
        %v885 = vmax.f32 %v821, 0.0
        %v886 = vmax.f32 %v822, 0.0
        %v887 = vmax.f32 %v823, 0.0
        %v888 = vmax.f32 %v824, 0.0
        %v889 = vmax.f32 %v825, 0.0
        %v890 = vmax.f32 %v826, 0.0
        %v891 = vmax.f32 %v827, 0.0
        %v892 = vmax.f32 %v828, 0.0
        %v893 = vmax.f32 %v829, 0.0
        %v894 = vmax.f32 %v830, 0.0
        %v895 = vmax.f32 %v831, 0.0
        %v896 = vmax.f32 %v832, 0.0
        %v897 = vmax.f32 %v833, 0.0
        %v898 = vmax.f32 %v834, 0.0
        %v899 = vmax.f32 %v835, 0.0
        %v900 = vmax.f32 %v836, 0.0
        %v901 = vmax.f32 %v837, 0.0
        %v902 = vmax.f32 %v838, 0.0
        %v903 = vmax.f32 %v839, 0.0
        %v904 = vmax.f32 %v840, 0.0
        %v905 = vmax.f32 %v841, 0.0
        %v906 = vmax.f32 %v842, 0.0
        %v907 = vmax.f32 %v843, 0.0
        %v908 = vmax.f32 %v844, 0.0
        %v909 = vmax.f32 %v845, 0.0
        %v910 = vmax.f32 %v846, 0.0
        %v911 = vmax.f32 %v847, 0.0
        %v912 = vmax.f32 %v848, 0.0
        %v913 = vmax.f32 %v849, 0.0
        %v914 = vmax.f32 %v850, 0.0
        %v915 = vmax.f32 %v851, 0.0
        %v916 = vmax.f32 %v852, 0.0
        %v917 = vmax.f32 %v853, 0.0
        %v918 = vmax.f32 %v854, 0.0
        %v919 = vmax.f32 %v855, 0.0
        %v920 = vmax.f32 %v856, 0.0
        %v921 = vmax.f32 %v857, 0.0
        %v922 = vmax.f32 %v858, 0.0
        %v923 = vmax.f32 %v859, 0.0
        %v924 = vmax.f32 %v860, 0.0
        %v925 = vmax.f32 %v861, 0.0
        %v926 = vmax.f32 %v862, 0.0
        %v927 = vmax.f32 %v863, 0.0
        %v928 = vmax.f32 %v864, 0.0
        %v929 = vmax.f32 %v865, 0.0
        %v930 = vmax.f32 %v866, 0.0
        %v931 = vmax.f32 %v867, 0.0
        %v932 = vmax.f32 %v868, 0.0
        %v933 = vmax.f32 %v869, 0.0
        %v934 = vmax.f32 %v870, 0.0
        %v935 = vmax.f32 %v871, 0.0
        %v936 = vmax.f32 %v872, 0.0
        %v937 = vmax.f32 %v873, 0.0
        %v938 = vmax.f32 %v874, 0.0
        %v939 = vpack.c.bf16 %v876, %v875
        %v940 = vpack.c.bf16 %v878, %v877
        %v941 = vpack.c.bf16 %v880, %v879
        %v942 = vpack.c.bf16 %v882, %v881
        %v943 = vpack.c.bf16 %v884, %v883
        %v944 = vpack.c.bf16 %v886, %v885
        %v945 = vpack.c.bf16 %v888, %v887
        %v946 = vpack.c.bf16 %v890, %v889
        %v947 = vpack.c.bf16 %v892, %v891
        %v948 = vpack.c.bf16 %v894, %v893
        %v949 = vpack.c.bf16 %v896, %v895
        %v950 = vpack.c.bf16 %v898, %v897
        %v951 = vpack.c.bf16 %v900, %v899
        %v952 = vpack.c.bf16 %v902, %v901
        %v953 = vpack.c.bf16 %v904, %v903
        %v954 = vpack.c.bf16 %v906, %v905
        %v955 = vpack.c.bf16 %v908, %v907
        %v956 = vpack.c.bf16 %v910, %v909
        %v957 = vpack.c.bf16 %v912, %v911
        %v958 = vpack.c.bf16 %v914, %v913
        %v959 = vpack.c.bf16 %v916, %v915
        %v960 = vpack.c.bf16 %v918, %v917
        %v961 = vpack.c.bf16 %v920, %v919
        %v962 = vpack.c.bf16 %v922, %v921
        %v963 = vpack.c.bf16 %v924, %v923
        %v964 = vpack.c.bf16 %v926, %v925
        %v965 = vpack.c.bf16 %v928, %v927
        %v966 = vpack.c.bf16 %v930, %v929
        %v967 = vpack.c.bf16 %v932, %v931
        %v968 = vpack.c.bf16 %v934, %v933
        %v969 = vpack.c.bf16 %v936, %v935
        %v970 = vpack.c.bf16 %v938, %v937
        %v971 = vld [vmem:[%s3] sm:$0x3]
        %v972 = vld [vmem:[%s4] sm:$0x1]
        %v974 = vperm.slane %v972, 0
        %vm976 = vcmask 31744
        %v978 = vsel %vm976, %v939, 0
        %v981 = vsel %vm976, %v940, 0
        %v984 = vsel %vm976, %v941, 0
        %v987 = vsel %vm976, %v942, 0
        %v990 = vsel %vm976, %v943, 0
        %v993 = vsel %vm976, %v944, 0
        %v996 = vsel %vm976, %v945, 0
        %v999 = vsel %vm976, %v946, 0
        %v1002 = vsel %vm976, %v947, 0
        %v1005 = vsel %vm976, %v948, 0
        %v1008 = vsel %vm976, %v949, 0
        %v1011 = vsel %vm976, %v950, 0
        %v1014 = vsel %vm976, %v951, 0
        %v1017 = vsel %vm976, %v952, 0
        %v1020 = vsel %vm976, %v953, 0
        %v1023 = vsel %vm976, %v954, 0
        %v1026 = vsel %vm976, %v955, 0
        %v1029 = vsel %vm976, %v956, 0
        %v1032 = vsel %vm976, %v957, 0
        %v1035 = vsel %vm976, %v958, 0
        %v1038 = vsel %vm976, %v959, 0
        %v1041 = vsel %vm976, %v960, 0
        %v1044 = vsel %vm976, %v961, 0
        %v1047 = vsel %vm976, %v962, 0
        %v1050 = vsel %vm976, %v963, 0
        %v1053 = vsel %vm976, %v964, 0
        %v1056 = vsel %vm976, %v965, 0
        %v1059 = vsel %vm976, %v966, 0
        %v1062 = vsel %vm976, %v967, 0
        %v1065 = vsel %vm976, %v968, 0
        %v1068 = vsel %vm976, %v969, 0
        %v1071 = vsel %vm976, %v970, 0
        %vm1073 = vcmask 1041408
        %v1075 = vsel %vm1073, %v971, 0
        %1077 = vmatpush.bf16.msra.mxu0 0
        %1078 = vmatpush.bf16.msra.mxu0 0
        %1079 = vmatpush.bf16.msra.mxu0 0
        %1080 = vmatpush.bf16.msra.mxu0 0
        %1081 = vmatpush.bf16.msra.mxu0 0
        %1082 = vmatpush.bf16.msra.mxu0 0
        %1083 = vmatpush.bf16.msra.mxu0 0
        %1084 = vmatpush.bf16.msra.mxu0 %v1075
        %1085 = vmatmul.bf16.gmra.mxu0 %v978
        %v1086 = vpop.f32.mrf.mxu0
        %v1087 = vadd.f32 %v974, %v1086
        %v1088 = vpop.f32.mrf.mxu0
        %v1089 = vadd.f32 %v974, %v1088
        %1090 = vmatmul.bf16.gmra.mxu0 %v981
        %v1091 = vpop.f32.mrf.mxu0
        %v1092 = vadd.f32 %v974, %v1091
        %v1093 = vpop.f32.mrf.mxu0
        %v1094 = vadd.f32 %v974, %v1093
        %1095 = vmatmul.bf16.gmra.mxu0 %v984
        %v1096 = vpop.f32.mrf.mxu0
        %v1097 = vadd.f32 %v974, %v1096
        %v1098 = vpop.f32.mrf.mxu0
        %v1099 = vadd.f32 %v974, %v1098
        %1100 = vmatmul.bf16.gmra.mxu0 %v987
        %v1101 = vpop.f32.mrf.mxu0
        %v1102 = vadd.f32 %v974, %v1101
        %v1103 = vpop.f32.mrf.mxu0
        %v1104 = vadd.f32 %v974, %v1103
        %1105 = vmatmul.bf16.gmra.mxu0 %v990
        %v1106 = vpop.f32.mrf.mxu0
        %v1107 = vadd.f32 %v974, %v1106
        %v1108 = vpop.f32.mrf.mxu0
        %v1109 = vadd.f32 %v974, %v1108
        %1110 = vmatmul.bf16.gmra.mxu0 %v993
        %v1111 = vpop.f32.mrf.mxu0
        %v1112 = vadd.f32 %v974, %v1111
        %v1113 = vpop.f32.mrf.mxu0
        %v1114 = vadd.f32 %v974, %v1113
        %1115 = vmatmul.bf16.gmra.mxu0 %v996
        %v1116 = vpop.f32.mrf.mxu0
        %v1117 = vadd.f32 %v974, %v1116
        %v1118 = vpop.f32.mrf.mxu0
        %v1119 = vadd.f32 %v974, %v1118
        %1120 = vmatmul.bf16.gmra.mxu0 %v999
        %v1121 = vpop.f32.mrf.mxu0
        %v1122 = vadd.f32 %v974, %v1121
        %v1123 = vpop.f32.mrf.mxu0
        %v1124 = vadd.f32 %v974, %v1123
        %1125 = vmatmul.bf16.gmra.mxu0 %v1002
        %v1126 = vpop.f32.mrf.mxu0
        %v1127 = vadd.f32 %v974, %v1126
        %v1128 = vpop.f32.mrf.mxu0
        %v1129 = vadd.f32 %v974, %v1128
        %1130 = vmatmul.bf16.gmra.mxu0 %v1005
        %v1131 = vpop.f32.mrf.mxu0
        %v1132 = vadd.f32 %v974, %v1131
        %v1133 = vpop.f32.mrf.mxu0
        %v1134 = vadd.f32 %v974, %v1133
        %1135 = vmatmul.bf16.gmra.mxu0 %v1008
        %v1136 = vpop.f32.mrf.mxu0
        %v1137 = vadd.f32 %v974, %v1136
        %v1138 = vpop.f32.mrf.mxu0
        %v1139 = vadd.f32 %v974, %v1138
        %1140 = vmatmul.bf16.gmra.mxu0 %v1011
        %v1141 = vpop.f32.mrf.mxu0
        %v1142 = vadd.f32 %v974, %v1141
        %v1143 = vpop.f32.mrf.mxu0
        %v1144 = vadd.f32 %v974, %v1143
        %1145 = vmatmul.bf16.gmra.mxu0 %v1014
        %v1146 = vpop.f32.mrf.mxu0
        %v1147 = vadd.f32 %v974, %v1146
        %v1148 = vpop.f32.mrf.mxu0
        %v1149 = vadd.f32 %v974, %v1148
        %1150 = vmatmul.bf16.gmra.mxu0 %v1017
        %v1151 = vpop.f32.mrf.mxu0
        %v1152 = vadd.f32 %v974, %v1151
        %v1153 = vpop.f32.mrf.mxu0
        %v1154 = vadd.f32 %v974, %v1153
        %1155 = vmatmul.bf16.gmra.mxu0 %v1020
        %v1156 = vpop.f32.mrf.mxu0
        %v1157 = vadd.f32 %v974, %v1156
        %v1158 = vpop.f32.mrf.mxu0
        %v1159 = vadd.f32 %v974, %v1158
        %1160 = vmatmul.bf16.gmra.mxu0 %v1023
        %v1161 = vpop.f32.mrf.mxu0
        %v1162 = vadd.f32 %v974, %v1161
        %v1163 = vpop.f32.mrf.mxu0
        %v1164 = vadd.f32 %v974, %v1163
        %1165 = vmatmul.bf16.gmra.mxu0 %v1026
        %v1166 = vpop.f32.mrf.mxu0
        %v1167 = vadd.f32 %v974, %v1166
        %v1168 = vpop.f32.mrf.mxu0
        %v1169 = vadd.f32 %v974, %v1168
        %1170 = vmatmul.bf16.gmra.mxu0 %v1029
        %v1171 = vpop.f32.mrf.mxu0
        %v1172 = vadd.f32 %v974, %v1171
        %v1173 = vpop.f32.mrf.mxu0
        %v1174 = vadd.f32 %v974, %v1173
        %1175 = vmatmul.bf16.gmra.mxu0 %v1032
        %v1176 = vpop.f32.mrf.mxu0
        %v1177 = vadd.f32 %v974, %v1176
        %v1178 = vpop.f32.mrf.mxu0
        %v1179 = vadd.f32 %v974, %v1178
        %1180 = vmatmul.bf16.gmra.mxu0 %v1035
        %v1181 = vpop.f32.mrf.mxu0
        %v1182 = vadd.f32 %v974, %v1181
        %v1183 = vpop.f32.mrf.mxu0
        %v1184 = vadd.f32 %v974, %v1183
        %1185 = vmatmul.bf16.gmra.mxu0 %v1038
        %v1186 = vpop.f32.mrf.mxu0
        %v1187 = vadd.f32 %v974, %v1186
        %v1188 = vpop.f32.mrf.mxu0
        %v1189 = vadd.f32 %v974, %v1188
        %1190 = vmatmul.bf16.gmra.mxu0 %v1041
        %v1191 = vpop.f32.mrf.mxu0
        %v1192 = vadd.f32 %v974, %v1191
        %v1193 = vpop.f32.mrf.mxu0
        %v1194 = vadd.f32 %v974, %v1193
        %1195 = vmatmul.bf16.gmra.mxu0 %v1044
        %v1196 = vpop.f32.mrf.mxu0
        %v1197 = vadd.f32 %v974, %v1196
        %v1198 = vpop.f32.mrf.mxu0
        %v1199 = vadd.f32 %v974, %v1198
        %1200 = vmatmul.bf16.gmra.mxu0 %v1047
        %v1201 = vpop.f32.mrf.mxu0
        %v1202 = vadd.f32 %v974, %v1201
        %v1203 = vpop.f32.mrf.mxu0
        %v1204 = vadd.f32 %v974, %v1203
        %1205 = vmatmul.bf16.gmra.mxu0 %v1050
        %v1206 = vpop.f32.mrf.mxu0
        %v1207 = vadd.f32 %v974, %v1206
        %v1208 = vpop.f32.mrf.mxu0
        %v1209 = vadd.f32 %v974, %v1208
        %1210 = vmatmul.bf16.gmra.mxu0 %v1053
        %v1211 = vpop.f32.mrf.mxu0
        %v1212 = vadd.f32 %v974, %v1211
        %v1213 = vpop.f32.mrf.mxu0
        %v1214 = vadd.f32 %v974, %v1213
        %1215 = vmatmul.bf16.gmra.mxu0 %v1056
        %v1216 = vpop.f32.mrf.mxu0
        %v1217 = vadd.f32 %v974, %v1216
        %v1218 = vpop.f32.mrf.mxu0
        %v1219 = vadd.f32 %v974, %v1218
        %1220 = vmatmul.bf16.gmra.mxu0 %v1059
        %v1221 = vpop.f32.mrf.mxu0
        %v1222 = vadd.f32 %v974, %v1221
        %v1223 = vpop.f32.mrf.mxu0
        %v1224 = vadd.f32 %v974, %v1223
        %1225 = vmatmul.bf16.gmra.mxu0 %v1062
        %v1226 = vpop.f32.mrf.mxu0
        %v1227 = vadd.f32 %v974, %v1226
        %v1228 = vpop.f32.mrf.mxu0
        %v1229 = vadd.f32 %v974, %v1228
        %1230 = vmatmul.bf16.gmra.mxu0 %v1065
        %v1231 = vpop.f32.mrf.mxu0
        %v1232 = vadd.f32 %v974, %v1231
        %v1233 = vpop.f32.mrf.mxu0
        %v1234 = vadd.f32 %v974, %v1233
        %1235 = vmatmul.bf16.gmra.mxu0 %v1068
        %v1236 = vpop.f32.mrf.mxu0
        %v1237 = vadd.f32 %v974, %v1236
        %v1238 = vpop.f32.mrf.mxu0
        %v1239 = vadd.f32 %v974, %v1238
        %1240 = vmatmul.bf16.gmra.mxu0 %v1071
        %v1241 = vpop.f32.mrf.mxu0
        %v1242 = vadd.f32 %v974, %v1241
        %v1243 = vpop.f32.mrf.mxu0
        %v1244 = vadd.f32 %v974, %v1243
        %1245 = vdwg.mxu0
        %v1246 = vld [vmem:[%s7] sm:$0x1]
        %vm1247 = vcmask 130048
        %v1248 = vsel %vm1247, %v1087, 0.0
        %v1249 = vsel %vm1247, %v1089, 0.0
        %v1250 = vadd.f32 %v1248, %v1249
        %v1251 = vsel %vm1247, %v1092, 0.0
        %v1252 = vadd.f32 %v1250, %v1251
        %v1253 = vsel %vm1247, %v1094, 0.0
        %v1254 = vadd.f32 %v1252, %v1253
        %v1255 = vsel %vm1247, %v1097, 0.0
        %v1256 = vadd.f32 %v1254, %v1255
        %v1257 = vsel %vm1247, %v1099, 0.0
        %v1258 = vadd.f32 %v1256, %v1257
        %v1259 = vsel %vm1247, %v1102, 0.0
        %v1260 = vadd.f32 %v1258, %v1259
        %v1261 = vsel %vm1247, %v1104, 0.0
        %v1262 = vadd.f32 %v1260, %v1261
        %v1263 = vsel %vm1247, %v1107, 0.0
        %v1264 = vadd.f32 %v1262, %v1263
        %v1265 = vsel %vm1247, %v1109, 0.0
        %v1266 = vadd.f32 %v1264, %v1265
        %v1267 = vsel %vm1247, %v1112, 0.0
        %v1268 = vadd.f32 %v1266, %v1267
        %v1269 = vsel %vm1247, %v1114, 0.0
        %v1270 = vadd.f32 %v1268, %v1269
        %v1271 = vsel %vm1247, %v1117, 0.0
        %v1272 = vadd.f32 %v1270, %v1271
        %v1273 = vsel %vm1247, %v1119, 0.0
        %v1274 = vadd.f32 %v1272, %v1273
        %v1275 = vsel %vm1247, %v1122, 0.0
        %v1276 = vadd.f32 %v1274, %v1275
        %v1277 = vsel %vm1247, %v1124, 0.0
        %v1278 = vadd.f32 %v1276, %v1277
        %v1279 = vsel %vm1247, %v1127, 0.0
        %v1280 = vadd.f32 %v1278, %v1279
        %v1281 = vsel %vm1247, %v1129, 0.0
        %v1282 = vadd.f32 %v1280, %v1281
        %v1283 = vsel %vm1247, %v1132, 0.0
        %v1284 = vadd.f32 %v1282, %v1283
        %v1285 = vsel %vm1247, %v1134, 0.0
        %v1286 = vadd.f32 %v1284, %v1285
        %v1287 = vsel %vm1247, %v1137, 0.0
        %v1288 = vadd.f32 %v1286, %v1287
        %v1289 = vsel %vm1247, %v1139, 0.0
        %v1290 = vadd.f32 %v1288, %v1289
        %v1291 = vsel %vm1247, %v1142, 0.0
        %v1292 = vadd.f32 %v1290, %v1291
        %v1293 = vsel %vm1247, %v1144, 0.0
        %v1294 = vadd.f32 %v1292, %v1293
        %v1295 = vsel %vm1247, %v1147, 0.0
        %v1296 = vadd.f32 %v1294, %v1295
        %v1297 = vsel %vm1247, %v1149, 0.0
        %v1298 = vadd.f32 %v1296, %v1297
        %v1299 = vsel %vm1247, %v1152, 0.0
        %v1300 = vadd.f32 %v1298, %v1299
        %v1301 = vsel %vm1247, %v1154, 0.0
        %v1302 = vadd.f32 %v1300, %v1301
        %v1303 = vsel %vm1247, %v1157, 0.0
        %v1304 = vadd.f32 %v1302, %v1303
        %v1305 = vsel %vm1247, %v1159, 0.0
        %v1306 = vadd.f32 %v1304, %v1305
        %v1307 = vsel %vm1247, %v1162, 0.0
        %v1308 = vadd.f32 %v1306, %v1307
        %v1309 = vsel %vm1247, %v1164, 0.0
        %v1310 = vadd.f32 %v1308, %v1309
        %v1311 = vsel %vm1247, %v1167, 0.0
        %v1312 = vadd.f32 %v1310, %v1311
        %v1313 = vsel %vm1247, %v1169, 0.0
        %v1314 = vadd.f32 %v1312, %v1313
        %v1315 = vsel %vm1247, %v1172, 0.0
        %v1316 = vadd.f32 %v1314, %v1315
        %v1317 = vsel %vm1247, %v1174, 0.0
        %v1318 = vadd.f32 %v1316, %v1317
        %v1319 = vsel %vm1247, %v1177, 0.0
        %v1320 = vadd.f32 %v1318, %v1319
        %v1321 = vsel %vm1247, %v1179, 0.0
        %v1322 = vadd.f32 %v1320, %v1321
        %v1323 = vsel %vm1247, %v1182, 0.0
        %v1324 = vadd.f32 %v1322, %v1323
        %v1325 = vsel %vm1247, %v1184, 0.0
        %v1326 = vadd.f32 %v1324, %v1325
        %v1327 = vsel %vm1247, %v1187, 0.0
        %v1328 = vadd.f32 %v1326, %v1327
        %v1329 = vsel %vm1247, %v1189, 0.0
        %v1330 = vadd.f32 %v1328, %v1329
        %v1331 = vsel %vm1247, %v1192, 0.0
        %v1332 = vadd.f32 %v1330, %v1331
        %v1333 = vsel %vm1247, %v1194, 0.0
        %v1334 = vadd.f32 %v1332, %v1333
        %v1335 = vsel %vm1247, %v1197, 0.0
        %v1336 = vadd.f32 %v1334, %v1335
        %v1337 = vsel %vm1247, %v1199, 0.0
        %v1338 = vadd.f32 %v1336, %v1337
        %v1339 = vsel %vm1247, %v1202, 0.0
        %v1340 = vadd.f32 %v1338, %v1339
        %v1341 = vsel %vm1247, %v1204, 0.0
        %v1342 = vadd.f32 %v1340, %v1341
        %v1343 = vsel %vm1247, %v1207, 0.0
        %v1344 = vadd.f32 %v1342, %v1343
        %v1345 = vsel %vm1247, %v1209, 0.0
        %v1346 = vadd.f32 %v1344, %v1345
        %v1347 = vsel %vm1247, %v1212, 0.0
        %v1348 = vadd.f32 %v1346, %v1347
        %v1349 = vsel %vm1247, %v1214, 0.0
        %v1350 = vadd.f32 %v1348, %v1349
        %v1351 = vsel %vm1247, %v1217, 0.0
        %v1352 = vadd.f32 %v1350, %v1351
        %v1353 = vsel %vm1247, %v1219, 0.0
        %v1354 = vadd.f32 %v1352, %v1353
        %v1355 = vsel %vm1247, %v1222, 0.0
        %v1356 = vadd.f32 %v1354, %v1355
        %v1357 = vsel %vm1247, %v1224, 0.0
        %v1358 = vadd.f32 %v1356, %v1357
        %v1359 = vsel %vm1247, %v1227, 0.0
        %v1360 = vadd.f32 %v1358, %v1359
        %v1361 = vsel %vm1247, %v1229, 0.0
        %v1362 = vadd.f32 %v1360, %v1361
        %v1363 = vsel %vm1247, %v1232, 0.0
        %v1364 = vadd.f32 %v1362, %v1363
        %v1365 = vsel %vm1247, %v1234, 0.0
        %v1366 = vadd.f32 %v1364, %v1365
        %v1367 = vsel %vm1247, %v1237, 0.0
        %v1368 = vadd.f32 %v1366, %v1367
        %v1369 = vsel %vm1247, %v1239, 0.0
        %v1370 = vadd.f32 %v1368, %v1369
        %v1371 = vsel %vm1247, %v1242, 0.0
        %v1372 = vadd.f32 %v1370, %v1371
        %v1373 = vsel %vm1247, %v1244, 0.0
        %v1374 = vadd.f32 %v1372, %v1373
        %v1375 = vrot.slane %v1374, 4
        %v1376 = vadd.f32 %v1374, %v1375
        %v1377 = vrot.slane %v1376, 2
        %v1378 = vadd.f32 %v1376, %v1377
        %v1379 = vrot.slane %v1378, 1
        %v1380 = vadd.f32 %v1378, %v1379
        %v1381 = vadd.f32 %v1246, %v1380
        %vm1382 = vcmask 122880
        %1383 = vst.msk [vmem:[%s7] sm:$0x1] %vm1382, %v1381
        %v1384 = vld [vmem:[%s8] sm:$0x1]
        %v1385 = vmul.f32 %v1087, %v1087
        %v1386 = vmul.f32 %v1089, %v1089
        %v1387 = vmul.f32 %v1092, %v1092
        %v1388 = vmul.f32 %v1094, %v1094
        %v1389 = vmul.f32 %v1097, %v1097
        %v1390 = vmul.f32 %v1099, %v1099
        %v1391 = vmul.f32 %v1102, %v1102
        %v1392 = vmul.f32 %v1104, %v1104
        %v1393 = vmul.f32 %v1107, %v1107
        %v1394 = vmul.f32 %v1109, %v1109
        %v1395 = vmul.f32 %v1112, %v1112
        %v1396 = vmul.f32 %v1114, %v1114
        %v1397 = vmul.f32 %v1117, %v1117
        %v1398 = vmul.f32 %v1119, %v1119
        %v1399 = vmul.f32 %v1122, %v1122
        %v1400 = vmul.f32 %v1124, %v1124
        %v1401 = vmul.f32 %v1127, %v1127
        %v1402 = vmul.f32 %v1129, %v1129
        %v1403 = vmul.f32 %v1132, %v1132
        %v1404 = vmul.f32 %v1134, %v1134
        %v1405 = vmul.f32 %v1137, %v1137
        %v1406 = vmul.f32 %v1139, %v1139
        %v1407 = vmul.f32 %v1142, %v1142
        %v1408 = vmul.f32 %v1144, %v1144
        %v1409 = vmul.f32 %v1147, %v1147
        %v1410 = vmul.f32 %v1149, %v1149
        %v1411 = vmul.f32 %v1152, %v1152
        %v1412 = vmul.f32 %v1154, %v1154
        %v1413 = vmul.f32 %v1157, %v1157
        %v1414 = vmul.f32 %v1159, %v1159
        %v1415 = vmul.f32 %v1162, %v1162
        %v1416 = vmul.f32 %v1164, %v1164
        %v1417 = vmul.f32 %v1167, %v1167
        %v1418 = vmul.f32 %v1169, %v1169
        %v1419 = vmul.f32 %v1172, %v1172
        %v1420 = vmul.f32 %v1174, %v1174
        %v1421 = vmul.f32 %v1177, %v1177
        %v1422 = vmul.f32 %v1179, %v1179
        %v1423 = vmul.f32 %v1182, %v1182
        %v1424 = vmul.f32 %v1184, %v1184
        %v1425 = vmul.f32 %v1187, %v1187
        %v1426 = vmul.f32 %v1189, %v1189
        %v1427 = vmul.f32 %v1192, %v1192
        %v1428 = vmul.f32 %v1194, %v1194
        %v1429 = vmul.f32 %v1197, %v1197
        %v1430 = vmul.f32 %v1199, %v1199
        %v1431 = vmul.f32 %v1202, %v1202
        %v1432 = vmul.f32 %v1204, %v1204
        %v1433 = vmul.f32 %v1207, %v1207
        %v1434 = vmul.f32 %v1209, %v1209
        %v1435 = vmul.f32 %v1212, %v1212
        %v1436 = vmul.f32 %v1214, %v1214
        %v1437 = vmul.f32 %v1217, %v1217
        %v1438 = vmul.f32 %v1219, %v1219
        %v1439 = vmul.f32 %v1222, %v1222
        %v1440 = vmul.f32 %v1224, %v1224
        %v1441 = vmul.f32 %v1227, %v1227
        %v1442 = vmul.f32 %v1229, %v1229
        %v1443 = vmul.f32 %v1232, %v1232
        %v1444 = vmul.f32 %v1234, %v1234
        %v1445 = vmul.f32 %v1237, %v1237
        %v1446 = vmul.f32 %v1239, %v1239
        %v1447 = vmul.f32 %v1242, %v1242
        %v1448 = vmul.f32 %v1244, %v1244
        %v1449 = vsel %vm1247, %v1385, 0.0
        %v1450 = vsel %vm1247, %v1386, 0.0
        %v1451 = vadd.f32 %v1449, %v1450
        %v1452 = vsel %vm1247, %v1387, 0.0
        %v1453 = vadd.f32 %v1451, %v1452
        %v1454 = vsel %vm1247, %v1388, 0.0
        %v1455 = vadd.f32 %v1453, %v1454
        %v1456 = vsel %vm1247, %v1389, 0.0
        %v1457 = vadd.f32 %v1455, %v1456
        %v1458 = vsel %vm1247, %v1390, 0.0
        %v1459 = vadd.f32 %v1457, %v1458
        %v1460 = vsel %vm1247, %v1391, 0.0
        %v1461 = vadd.f32 %v1459, %v1460
        %v1462 = vsel %vm1247, %v1392, 0.0
        %v1463 = vadd.f32 %v1461, %v1462
        %v1464 = vsel %vm1247, %v1393, 0.0
        %v1465 = vadd.f32 %v1463, %v1464
        %v1466 = vsel %vm1247, %v1394, 0.0
        %v1467 = vadd.f32 %v1465, %v1466
        %v1468 = vsel %vm1247, %v1395, 0.0
        %v1469 = vadd.f32 %v1467, %v1468
        %v1470 = vsel %vm1247, %v1396, 0.0
        %v1471 = vadd.f32 %v1469, %v1470
        %v1472 = vsel %vm1247, %v1397, 0.0
        %v1473 = vadd.f32 %v1471, %v1472
        %v1474 = vsel %vm1247, %v1398, 0.0
        %v1475 = vadd.f32 %v1473, %v1474
        %v1476 = vsel %vm1247, %v1399, 0.0
        %v1477 = vadd.f32 %v1475, %v1476
        %v1478 = vsel %vm1247, %v1400, 0.0
        %v1479 = vadd.f32 %v1477, %v1478
        %v1480 = vsel %vm1247, %v1401, 0.0
        %v1481 = vadd.f32 %v1479, %v1480
        %v1482 = vsel %vm1247, %v1402, 0.0
        %v1483 = vadd.f32 %v1481, %v1482
        %v1484 = vsel %vm1247, %v1403, 0.0
        %v1485 = vadd.f32 %v1483, %v1484
        %v1486 = vsel %vm1247, %v1404, 0.0
        %v1487 = vadd.f32 %v1485, %v1486
        %v1488 = vsel %vm1247, %v1405, 0.0
        %v1489 = vadd.f32 %v1487, %v1488
        %v1490 = vsel %vm1247, %v1406, 0.0
        %v1491 = vadd.f32 %v1489, %v1490
        %v1492 = vsel %vm1247, %v1407, 0.0
        %v1493 = vadd.f32 %v1491, %v1492
        %v1494 = vsel %vm1247, %v1408, 0.0
        %v1495 = vadd.f32 %v1493, %v1494
        %v1496 = vsel %vm1247, %v1409, 0.0
        %v1497 = vadd.f32 %v1495, %v1496
        %v1498 = vsel %vm1247, %v1410, 0.0
        %v1499 = vadd.f32 %v1497, %v1498
        %v1500 = vsel %vm1247, %v1411, 0.0
        %v1501 = vadd.f32 %v1499, %v1500
        %v1502 = vsel %vm1247, %v1412, 0.0
        %v1503 = vadd.f32 %v1501, %v1502
        %v1504 = vsel %vm1247, %v1413, 0.0
        %v1505 = vadd.f32 %v1503, %v1504
        %v1506 = vsel %vm1247, %v1414, 0.0
        %v1507 = vadd.f32 %v1505, %v1506
        %v1508 = vsel %vm1247, %v1415, 0.0
        %v1509 = vadd.f32 %v1507, %v1508
        %v1510 = vsel %vm1247, %v1416, 0.0
        %v1511 = vadd.f32 %v1509, %v1510
        %v1512 = vsel %vm1247, %v1417, 0.0
        %v1513 = vadd.f32 %v1511, %v1512
        %v1514 = vsel %vm1247, %v1418, 0.0
        %v1515 = vadd.f32 %v1513, %v1514
        %v1516 = vsel %vm1247, %v1419, 0.0
        %v1517 = vadd.f32 %v1515, %v1516
        %v1518 = vsel %vm1247, %v1420, 0.0
        %v1519 = vadd.f32 %v1517, %v1518
        %v1520 = vsel %vm1247, %v1421, 0.0
        %v1521 = vadd.f32 %v1519, %v1520
        %v1522 = vsel %vm1247, %v1422, 0.0
        %v1523 = vadd.f32 %v1521, %v1522
        %v1524 = vsel %vm1247, %v1423, 0.0
        %v1525 = vadd.f32 %v1523, %v1524
        %v1526 = vsel %vm1247, %v1424, 0.0
        %v1527 = vadd.f32 %v1525, %v1526
        %v1528 = vsel %vm1247, %v1425, 0.0
        %v1529 = vadd.f32 %v1527, %v1528
        %v1530 = vsel %vm1247, %v1426, 0.0
        %v1531 = vadd.f32 %v1529, %v1530
        %v1532 = vsel %vm1247, %v1427, 0.0
        %v1533 = vadd.f32 %v1531, %v1532
        %v1534 = vsel %vm1247, %v1428, 0.0
        %v1535 = vadd.f32 %v1533, %v1534
        %v1536 = vsel %vm1247, %v1429, 0.0
        %v1537 = vadd.f32 %v1535, %v1536
        %v1538 = vsel %vm1247, %v1430, 0.0
        %v1539 = vadd.f32 %v1537, %v1538
        %v1540 = vsel %vm1247, %v1431, 0.0
        %v1541 = vadd.f32 %v1539, %v1540
        %v1542 = vsel %vm1247, %v1432, 0.0
        %v1543 = vadd.f32 %v1541, %v1542
        %v1544 = vsel %vm1247, %v1433, 0.0
        %v1545 = vadd.f32 %v1543, %v1544
        %v1546 = vsel %vm1247, %v1434, 0.0
        %v1547 = vadd.f32 %v1545, %v1546
        %v1548 = vsel %vm1247, %v1435, 0.0
        %v1549 = vadd.f32 %v1547, %v1548
        %v1550 = vsel %vm1247, %v1436, 0.0
        %v1551 = vadd.f32 %v1549, %v1550
        %v1552 = vsel %vm1247, %v1437, 0.0
        %v1553 = vadd.f32 %v1551, %v1552
        %v1554 = vsel %vm1247, %v1438, 0.0
        %v1555 = vadd.f32 %v1553, %v1554
        %v1556 = vsel %vm1247, %v1439, 0.0
        %v1557 = vadd.f32 %v1555, %v1556
        %v1558 = vsel %vm1247, %v1440, 0.0
        %v1559 = vadd.f32 %v1557, %v1558
        %v1560 = vsel %vm1247, %v1441, 0.0
        %v1561 = vadd.f32 %v1559, %v1560
        %v1562 = vsel %vm1247, %v1442, 0.0
        %v1563 = vadd.f32 %v1561, %v1562
        %v1564 = vsel %vm1247, %v1443, 0.0
        %v1565 = vadd.f32 %v1563, %v1564
        %v1566 = vsel %vm1247, %v1444, 0.0
        %v1567 = vadd.f32 %v1565, %v1566
        %v1568 = vsel %vm1247, %v1445, 0.0
        %v1569 = vadd.f32 %v1567, %v1568
        %v1570 = vsel %vm1247, %v1446, 0.0
        %v1571 = vadd.f32 %v1569, %v1570
        %v1572 = vsel %vm1247, %v1447, 0.0
        %v1573 = vadd.f32 %v1571, %v1572
        %v1574 = vsel %vm1247, %v1448, 0.0
        %v1575 = vadd.f32 %v1573, %v1574
        %v1576 = vrot.slane %v1575, 4
        %v1577 = vadd.f32 %v1575, %v1576
        %v1578 = vrot.slane %v1577, 2
        %v1579 = vadd.f32 %v1577, %v1578
        %v1580 = vrot.slane %v1579, 1
        %v1581 = vadd.f32 %v1579, %v1580
        %v1582 = vadd.f32 %v1384, %v1581
        %1583 = vst.msk [vmem:[%s8] sm:$0x1] %vm1382, %v1582
      $region52: #{dense_layer_forward.2} parent=39 // pred_fallthru
        _
      // Predicated region
      $region53: #{dense_layer_forward.2} parent=39 // pred_check
        %p1584 = pneg %p155
      $region54: #{dense_layer_forward.2} parent=39 // pred_check_branch
        %1586 = sbr.rel (%p1584) target = $region56
      $region55: #{dense_layer_forward.2} parent=39 // pred_region
        _
      $region56: #{dense_layer_forward.2} parent=39 // pred_fallthru
        _
      // Predicated region
      $region57: #{dense_layer_forward.2} parent=39 // pred_check
        %p1587 = pneg %p176
      $region58: #{dense_layer_forward.2} parent=39 // pred_check_branch
        %1589 = sbr.rel (%p1587) target = $region60
      $region59: #{dense_layer_forward.2} parent=39 // pred_region
        _
      $region60: #{dense_layer_forward.2} parent=39 // pred_fallthru
        _
      // Predicated region
      $region61: #{dense_layer_forward.2} parent=39 // pred_check
        %p1590 = pneg %p197
      $region62: #{dense_layer_forward.2} parent=39 // pred_check_branch
        %1592 = sbr.rel (%p1590) target = $region64
      $region63: #{dense_layer_forward.2} parent=39 // pred_region
        _
      $region64: #{dense_layer_forward.2} parent=39 // pred_fallthru
        _
      // Predicated region
      $region65: #{dense_layer_forward.2} parent=39 // pred_check
        %p1593 = pneg %p218
      $region66: #{dense_layer_forward.2} parent=39 // pred_check_branch
        %1595 = sbr.rel (%p1593) target = $region68
      $region67: #{dense_layer_forward.2} parent=39 // pred_region
        _
      $region68: #{dense_layer_forward.2} parent=39 // pred_fallthru
        _
      // Predicated region
      $region69: #{dense_layer_forward.2} parent=39 // pred_check
        %p1596 = pneg %p155
      $region70: #{dense_layer_forward.2} parent=39 // pred_check_branch
        %1598 = sbr.rel (%p1596) target = $region72
      $region71: #{dense_layer_forward.2} parent=39 // pred_region
        _
      $region72: #{dense_layer_forward.2} parent=39 // pred_fallthru
        _
      // Predicated region
      $region73: #{dense_layer_forward.2} parent=39 // pred_check
        %p1599 = pneg %p176
      $region74: #{dense_layer_forward.2} parent=39 // pred_check_branch
        %1601 = sbr.rel (%p1599) target = $region76
      $region75: #{dense_layer_forward.2} parent=39 // pred_region
        _
      $region76: #{dense_layer_forward.2} parent=39 // pred_fallthru
        _
      // Predicated region
      $region77: #{dense_layer_forward.2} parent=39 // pred_check
        %p1602 = pneg %p197
      $region78: #{dense_layer_forward.2} parent=39 // pred_check_branch
        %1604 = sbr.rel (%p1602) target = $region80
      $region79: #{dense_layer_forward.2} parent=39 // pred_region
        _
      $region80: #{dense_layer_forward.2} parent=39 // pred_fallthru
        _
      // Predicated region
      $region81: #{dense_layer_forward.2} parent=39 // pred_check
        %p1605 = pneg %p218
      $region82: #{dense_layer_forward.2} parent=39 // pred_check_branch
        %1607 = sbr.rel (%p1605) target = $region84
      $region83: #{dense_layer_forward.2} parent=39 // pred_region
        _
      $region84: #{dense_layer_forward.2} parent=39 // pred_fallthru
        _
    $region40: #{dense_layer_forward.2} parent=5 // pred_fallthru
      _
    %p1608 = scmp.le.s32.totalorder 2, %s15
    // Predicated region
    $region85: #{dense_layer_forward.2} parent=5 // pred_check
      %p1609 = pneg %p1608
    $region86: #{dense_layer_forward.2} parent=5 // pred_check_branch
      %1611 = sbr.rel (%p1609) target = $region88
    $region87: #{dense_layer_forward.2} parent=5 // pred_region
      %s1612 = ssub.s32 %s15, 2
    $region88: #{dense_layer_forward.2} parent=5 // pred_fallthru
      _
  $region6: #{dense_layer_forward.2} parent=0 // loop_footer
    %s19 = sadd.s32 1, %s15
  $region7: #{dense_layer_forward.2} parent=0 // loop_footer_branch
    %14 = sbr.rel target = $region3
  $region8: #{dense_layer_forward.2} parent=0 // loop_exit
    _

// kernel: dense_layer_forward.3
$region0: #{dense_layer_forward.3}
  #allocation0 [shape = 'u32[]', space=smem, size = 0x4, offset = 0x4, fixed_abs, tag = 'smem constant byte address 0x4 - core index']
  #allocation1 [shape = 'u32[72,128]{1,0:T(1,128)}', space=vmem, size = 0x9000, scoped, tag = 'internal scratch']
  #allocation2 [shape = 'f32[304,16]{1,0:T(8,128)}', space=vmem, size = 0x26000, scoped, tag = 'scratch operand']
  %s0 = inlined_call_operand.vmem [shape: f32[2,256,4], index: 0, kind: input, shape index: {}]
  %s1 = inlined_call_operand.vmem [shape: f32[2,4,256], index: 1, kind: input, shape index: {}]
  %s2 = inlined_call_operand.vmem [shape: f32[1,4], index: 2, kind: input, shape index: {}]
  %s3 = inlined_call_operand.vmem [shape: f32[1,4], index: 3, kind: input, shape index: {}]
  %s4 = inlined_call_operand.vmem [shape: bf16[4,16], index: 4, kind: input, shape index: {}]
  %s5 = inlined_call_operand.vmem [shape: f32[1,16], index: 5, kind: input, shape index: {}]
  %s6 = inlined_call_operand.vmem [shape: f32[1,16], index: 6, kind: input, shape index: {}]
  %s7 = inlined_call_operand.vmem [shape: bf16[9,4,16], index: 7, kind: input, shape index: {}]
  %s8 = inlined_call_operand.vmem [shape: f32[4,1], index: 8, kind: input, shape index: {}]
  %s9 = inlined_call_operand.vmem [shape: f32[2,8,256], index: 9, kind: output, shape index: {}]
  %s10 = sld [smem:[#allocation0]]
  $region69: #{dense_layer_forward.3} parent=0
    _
  %s12 = ssub.s32 1, %s10
  %s13 = scalar_select 0, %s12, %s10
  loop: start=0, step=1, limit=4
  $region2: #{dense_layer_forward.3} parent=0 // loop_pre_header
    _
  $region3: #{dense_layer_forward.3} parent=0 // loop_header
    %s15 = sphi 0, %s19
    %p16 = scmp.ge.s32.totalorder %s15, 4
    %s25 = sphi 0, %s27
    %s28 = sphi 0, %s25
    %s29 = sphi 0, %s28
    %s45 = sphi 0, %s29
    %s51 = sphi 0, %s53
    %s54 = sphi 0, %s51
    %s55 = sphi 0, %s54
    %s71 = sphi 0, %s55
    %s75 = sphi 0, %s75
    %s77 = sphi 0, %s75
    %s78 = sphi 0, %s77
    %s92 = sphi 0, %s78
    %s96 = sphi 0, %s96
    %s98 = sphi 0, %s96
    %s99 = sphi 0, %s98
    %s113 = sphi 0, %s99
    %s117 = sphi 0, %s117
    %s119 = sphi 0, %s117
    %s120 = sphi 0, %s119
    %s134 = sphi 0, %s120
    %s138 = sphi 0, %s138
    %s140 = sphi 0, %s138
    %s141 = sphi 0, %s140
    %s155 = sphi 0, %s141
    %s159 = sphi 0, %s159
    %s161 = sphi 0, %s159
    %s162 = sphi 0, %s161
    %s176 = sphi 0, %s162
    %s180 = sphi 0, %s180
    %s182 = sphi 0, %s180
    %s183 = sphi 0, %s182
    %s197 = sphi 0, %s183
    %s201 = sphi 0, %s201
    %s203 = sphi 0, %s201
    %s204 = sphi 0, %s203
    %s218 = sphi 0, %s204
    %s224 = sphi 0, %s226
    %s227 = sphi 0, %s224
    %s228 = sphi 0, %s227
    %s244 = sphi 0, %s228
  $region4: #{dense_layer_forward.3} parent=0 // loop_header_branch
    %18 = sbr.rel (%p16) target = $region8
  $region5: #{dense_layer_forward.3} parent=0 // loop_body
    %s20 = ssub.s32 %s15, 1
    %s21 = ssub.s32 %s15, 2
    %s22 = sadd.s32 %s15, 1
    %s23 = ssub.s32 %s15, %s22
    %p24 = scmp.eq.s32.totalorder %s23, 0
    %s26 = sadd.s32 %s25, 1
    %s27 = scalar_select %p24, %s25, %s26
    %p30 = pneg %p24
    %p31 = scmp.eq.s32.totalorder %s15, 1
    %p32 = por %p30, %p31
    %p33 = scmp.ne.s32.totalorder %s25, %s28
    %p34 = scmp.eq.s32.totalorder %s15, 0
    %p35 = por %p33, %p34
    %p36 = scmp.ne.s32.totalorder %s25, %s28
    %p37 = scmp.eq.s32.totalorder %s20, 1
    %p38 = por %p36, %p37
    %p39 = scmp.ne.s32.totalorder %s28, %s29
    %p40 = scmp.eq.s32.totalorder %s20, 0
    %p41 = por %p39, %p40
    %p42 = scmp.ne.s32.totalorder %s28, %s29
    %p43 = scmp.eq.s32.totalorder %s21, 1
    %p44 = por %p42, %p43
    %p46 = scmp.ne.s32.totalorder %s29, %s45
    %p47 = scmp.eq.s32.totalorder %s21, 0
    %p48 = por %p46, %p47
    %s49 = ssub.s32 %s15, %s22
    %p50 = scmp.eq.s32.totalorder %s49, 0
    %s52 = sadd.s32 %s51, 1
    %s53 = scalar_select %p50, %s51, %s52
    %p56 = pneg %p50
    %p57 = scmp.eq.s32.totalorder %s15, 1
    %p58 = por %p56, %p57
    %p59 = scmp.ne.s32.totalorder %s51, %s54
    %p60 = scmp.eq.s32.totalorder %s15, 0
    %p61 = por %p59, %p60
    %p62 = scmp.ne.s32.totalorder %s51, %s54
    %p63 = scmp.eq.s32.totalorder %s20, 1
    %p64 = por %p62, %p63
    %p65 = scmp.ne.s32.totalorder %s54, %s55
    %p66 = scmp.eq.s32.totalorder %s20, 0
    %p67 = por %p65, %p66
    %p68 = scmp.ne.s32.totalorder %s54, %s55
    %p69 = scmp.eq.s32.totalorder %s21, 1
    %p70 = por %p68, %p69
    %p72 = scmp.ne.s32.totalorder %s55, %s71
    %p73 = scmp.eq.s32.totalorder %s21, 0
    %p74 = por %p72, %p73
    %s76 = sadd.s32 %s75, 1
    %p79 = scmp.eq.s32.totalorder %s15, 1
    %p80 = scmp.ne.s32.totalorder %s75, %s77
    %p81 = scmp.eq.s32.totalorder %s15, 0
    %p82 = por %p80, %p81
    %p83 = scmp.ne.s32.totalorder %s75, %s77
    %p84 = scmp.eq.s32.totalorder %s20, 1
    %p85 = por %p83, %p84
    %p86 = scmp.ne.s32.totalorder %s77, %s78
    %p87 = scmp.eq.s32.totalorder %s20, 0
    %p88 = por %p86, %p87
    %p89 = scmp.ne.s32.totalorder %s77, %s78
    %p90 = scmp.eq.s32.totalorder %s21, 1
    %p91 = por %p89, %p90
    %p93 = scmp.ne.s32.totalorder %s78, %s92
    %p94 = scmp.eq.s32.totalorder %s21, 0
    %p95 = por %p93, %p94
    %s97 = sadd.s32 %s96, 1
    %p100 = scmp.eq.s32.totalorder %s15, 1
    %p101 = scmp.ne.s32.totalorder %s96, %s98
    %p102 = scmp.eq.s32.totalorder %s15, 0
    %p103 = por %p101, %p102
    %p104 = scmp.ne.s32.totalorder %s96, %s98
    %p105 = scmp.eq.s32.totalorder %s20, 1
    %p106 = por %p104, %p105
    %p107 = scmp.ne.s32.totalorder %s98, %s99
    %p108 = scmp.eq.s32.totalorder %s20, 0
    %p109 = por %p107, %p108
    %p110 = scmp.ne.s32.totalorder %s98, %s99
    %p111 = scmp.eq.s32.totalorder %s21, 1
    %p112 = por %p110, %p111
    %p114 = scmp.ne.s32.totalorder %s99, %s113
    %p115 = scmp.eq.s32.totalorder %s21, 0
    %p116 = por %p114, %p115
    %s118 = sadd.s32 %s117, 1
    %p121 = scmp.eq.s32.totalorder %s15, 1
    %p122 = scmp.ne.s32.totalorder %s117, %s119
    %p123 = scmp.eq.s32.totalorder %s15, 0
    %p124 = por %p122, %p123
    %p125 = scmp.ne.s32.totalorder %s117, %s119
    %p126 = scmp.eq.s32.totalorder %s20, 1
    %p127 = por %p125, %p126
    %p128 = scmp.ne.s32.totalorder %s119, %s120
    %p129 = scmp.eq.s32.totalorder %s20, 0
    %p130 = por %p128, %p129
    %p131 = scmp.ne.s32.totalorder %s119, %s120
    %p132 = scmp.eq.s32.totalorder %s21, 1
    %p133 = por %p131, %p132
    %p135 = scmp.ne.s32.totalorder %s120, %s134
    %p136 = scmp.eq.s32.totalorder %s21, 0
    %p137 = por %p135, %p136
    %s139 = sadd.s32 %s138, 1
    %p142 = scmp.eq.s32.totalorder %s15, 1
    %p143 = scmp.ne.s32.totalorder %s138, %s140
    %p144 = scmp.eq.s32.totalorder %s15, 0
    %p145 = por %p143, %p144
    %p146 = scmp.ne.s32.totalorder %s138, %s140
    %p147 = scmp.eq.s32.totalorder %s20, 1
    %p148 = por %p146, %p147
    %p149 = scmp.ne.s32.totalorder %s140, %s141
    %p150 = scmp.eq.s32.totalorder %s20, 0
    %p151 = por %p149, %p150
    %p152 = scmp.ne.s32.totalorder %s140, %s141
    %p153 = scmp.eq.s32.totalorder %s21, 1
    %p154 = por %p152, %p153
    %p156 = scmp.ne.s32.totalorder %s141, %s155
    %p157 = scmp.eq.s32.totalorder %s21, 0
    %p158 = por %p156, %p157
    %s160 = sadd.s32 %s159, 1
    %p163 = scmp.eq.s32.totalorder %s15, 1
    %p164 = scmp.ne.s32.totalorder %s159, %s161
    %p165 = scmp.eq.s32.totalorder %s15, 0
    %p166 = por %p164, %p165
    %p167 = scmp.ne.s32.totalorder %s159, %s161
    %p168 = scmp.eq.s32.totalorder %s20, 1
    %p169 = por %p167, %p168
    %p170 = scmp.ne.s32.totalorder %s161, %s162
    %p171 = scmp.eq.s32.totalorder %s20, 0
    %p172 = por %p170, %p171
    %p173 = scmp.ne.s32.totalorder %s161, %s162
    %p174 = scmp.eq.s32.totalorder %s21, 1
    %p175 = por %p173, %p174
    %p177 = scmp.ne.s32.totalorder %s162, %s176
    %p178 = scmp.eq.s32.totalorder %s21, 0
    %p179 = por %p177, %p178
    %s181 = sadd.s32 %s180, 1
    %p184 = scmp.eq.s32.totalorder %s15, 1
    %p185 = scmp.ne.s32.totalorder %s180, %s182
    %p186 = scmp.eq.s32.totalorder %s15, 0
    %p187 = por %p185, %p186
    %p188 = scmp.ne.s32.totalorder %s180, %s182
    %p189 = scmp.eq.s32.totalorder %s20, 1
    %p190 = por %p188, %p189
    %p191 = scmp.ne.s32.totalorder %s182, %s183
    %p192 = scmp.eq.s32.totalorder %s20, 0
    %p193 = por %p191, %p192
    %p194 = scmp.ne.s32.totalorder %s182, %s183
    %p195 = scmp.eq.s32.totalorder %s21, 1
    %p196 = por %p194, %p195
    %p198 = scmp.ne.s32.totalorder %s183, %s197
    %p199 = scmp.eq.s32.totalorder %s21, 0
    %p200 = por %p198, %p199
    %s202 = sadd.s32 %s201, 1
    %p205 = scmp.eq.s32.totalorder %s15, 1
    %p206 = scmp.ne.s32.totalorder %s201, %s203
    %p207 = scmp.eq.s32.totalorder %s15, 0
    %p208 = por %p206, %p207
    %p209 = scmp.ne.s32.totalorder %s201, %s203
    %p210 = scmp.eq.s32.totalorder %s20, 1
    %p211 = por %p209, %p210
    %p212 = scmp.ne.s32.totalorder %s203, %s204
    %p213 = scmp.eq.s32.totalorder %s20, 0
    %p214 = por %p212, %p213
    %p215 = scmp.ne.s32.totalorder %s203, %s204
    %p216 = scmp.eq.s32.totalorder %s21, 1
    %p217 = por %p215, %p216
    %p219 = scmp.ne.s32.totalorder %s204, %s218
    %p220 = scmp.eq.s32.totalorder %s21, 0
    %p221 = por %p219, %p220
    %s222 = ssub.s32 %s15, %s22
    %p223 = scmp.eq.s32.totalorder %s222, 0
    %s225 = sadd.s32 %s224, 1
    %s226 = scalar_select %p223, %s224, %s225
    %p229 = pneg %p223
    %p230 = scmp.eq.s32.totalorder %s15, 1
    %p231 = por %p229, %p230
    %p232 = scmp.ne.s32.totalorder %s224, %s227
    %p233 = scmp.eq.s32.totalorder %s15, 0
    %p234 = por %p232, %p233
    %p235 = scmp.ne.s32.totalorder %s224, %s227
    %p236 = scmp.eq.s32.totalorder %s20, 1
    %p237 = por %p235, %p236
    %p238 = scmp.ne.s32.totalorder %s227, %s228
    %p239 = scmp.eq.s32.totalorder %s20, 0
    %p240 = por %p238, %p239
    %p241 = scmp.ne.s32.totalorder %s227, %s228
    %p242 = scmp.eq.s32.totalorder %s21, 1
    %p243 = por %p241, %p242
    %p245 = scmp.ne.s32.totalorder %s228, %s244
    %p246 = scmp.eq.s32.totalorder %s21, 0
    %p247 = por %p245, %p246
    %p248 = scmp.le.s32.totalorder 1, %s15
    %p249 = scmp.lt.s32.totalorder %s15, 3
    %p250 = pnand %p248, %p249
    %p251 = pneg %p250
    // Predicated region
    $region9: #{dense_layer_forward.3} parent=5 // pred_check
      _
    $region10: #{dense_layer_forward.3} parent=5 // pred_check_branch
      %253 = sbr.rel (%p250) target = $region12
    $region11: #{dense_layer_forward.3} parent=5 // pred_region
      %s254 = ssub.s32 %s15, 1
      // Predicated region
      $region13: #{dense_layer_forward.3} parent=11 // pred_check
        %p255 = pneg %p88
      $region14: #{dense_layer_forward.3} parent=11 // pred_check_branch
        %257 = sbr.rel (%p255) target = $region16
      $region15: #{dense_layer_forward.3} parent=11 // pred_region
        _
      $region16: #{dense_layer_forward.3} parent=11 // pred_fallthru
        _
      // Predicated region
      $region17: #{dense_layer_forward.3} parent=11 // pred_check
        %p258 = pneg %p109
      $region18: #{dense_layer_forward.3} parent=11 // pred_check_branch
        %260 = sbr.rel (%p258) target = $region20
      $region19: #{dense_layer_forward.3} parent=11 // pred_region
        _
      $region20: #{dense_layer_forward.3} parent=11 // pred_fallthru
        _
      // Predicated region
      $region21: #{dense_layer_forward.3} parent=11 // pred_check
        %p261 = pneg %p130
      $region22: #{dense_layer_forward.3} parent=11 // pred_check_branch
        %263 = sbr.rel (%p261) target = $region24
      $region23: #{dense_layer_forward.3} parent=11 // pred_region
        _
      $region24: #{dense_layer_forward.3} parent=11 // pred_fallthru
        _
      // Predicated region
      $region25: #{dense_layer_forward.3} parent=11 // pred_check
        %p264 = pneg %p151
      $region26: #{dense_layer_forward.3} parent=11 // pred_check_branch
        %266 = sbr.rel (%p264) target = $region28
      $region27: #{dense_layer_forward.3} parent=11 // pred_region
        _
      $region28: #{dense_layer_forward.3} parent=11 // pred_fallthru
        _
      // Predicated region
      $region29: #{dense_layer_forward.3} parent=11 // pred_check
        %p267 = pneg %p172
      $region30: #{dense_layer_forward.3} parent=11 // pred_check_branch
        %269 = sbr.rel (%p267) target = $region32
      $region31: #{dense_layer_forward.3} parent=11 // pred_region
        _
      $region32: #{dense_layer_forward.3} parent=11 // pred_fallthru
        _
      // Predicated region
      $region33: #{dense_layer_forward.3} parent=11 // pred_check
        %p270 = pneg %p193
      $region34: #{dense_layer_forward.3} parent=11 // pred_check_branch
        %272 = sbr.rel (%p270) target = $region36
      $region35: #{dense_layer_forward.3} parent=11 // pred_region
        _
      $region36: #{dense_layer_forward.3} parent=11 // pred_fallthru
        _
      // Predicated region
      $region37: #{dense_layer_forward.3} parent=11 // pred_check
        %p273 = pneg %p214
      $region38: #{dense_layer_forward.3} parent=11 // pred_check_branch
        %275 = sbr.rel (%p273) target = $region40
      $region39: #{dense_layer_forward.3} parent=11 // pred_region
        _
      $region40: #{dense_layer_forward.3} parent=11 // pred_fallthru
        _
    $region12: #{dense_layer_forward.3} parent=5 // pred_fallthru
      _
    %p276 = scmp.lt.s32.totalorder %s15, 2
    // Predicated region
    $region41: #{dense_layer_forward.3} parent=5 // pred_check
      %p277 = pneg %p276
    $region42: #{dense_layer_forward.3} parent=5 // pred_check_branch
      %279 = sbr.rel (%p277) target = $region44
    $region43: #{dense_layer_forward.3} parent=5 // pred_region
      // Predicated region
      $region45: #{dense_layer_forward.3} parent=43 // pred_check
        %p280 = pneg %p35
      $region46: #{dense_layer_forward.3} parent=43 // pred_check_branch
        %282 = sbr.rel (%p280) target = $region48
      $region47: #{dense_layer_forward.3} parent=43 // pred_region
        %p283 = scmp.lt.s32.totalorder %s15, 1
        %s284 = scalar_select %p283, %s15, 1
        %s285 = smul.addr %s284, 32
        %s286 = smul.addr %s285, 8
        %s287 = scalar_lea.vmem %s0, %s286
      $region48: #{dense_layer_forward.3} parent=43 // pred_fallthru
        _
      // Predicated region
      $region49: #{dense_layer_forward.3} parent=43 // pred_check
        %p288 = pneg %p61
      $region50: #{dense_layer_forward.3} parent=43 // pred_check_branch
        %290 = sbr.rel (%p288) target = $region52
      $region51: #{dense_layer_forward.3} parent=43 // pred_region
        %p291 = scmp.lt.s32.totalorder %s15, 1
        %s292 = scalar_select %p291, %s15, 1
        %s293 = smul.addr %s292, 2
        %s294 = smul.addr %s293, 4
        %s295 = scalar_lea.vmem %s1, %s294
      $region52: #{dense_layer_forward.3} parent=43 // pred_fallthru
        _
    $region44: #{dense_layer_forward.3} parent=5 // pred_fallthru
      _
    %p296 = scmp.le.s32.totalorder 1, %s15
    %p297 = scmp.lt.s32.totalorder %s15, 3
    %p298 = pnand %p296, %p297
    %p299 = pneg %p298
    // Predicated region
    $region53: #{dense_layer_forward.3} parent=5 // pred_check
      _
    $region54: #{dense_layer_forward.3} parent=5 // pred_check_branch
      %301 = sbr.rel (%p298) target = $region56
    $region55: #{dense_layer_forward.3} parent=5 // pred_region
      %s302 = ssub.s32 %s15, 1
      %p303 = scmp.lt.s32.totalorder %s20, 1
      %s304 = scalar_select %p303, %s20, 1
      %s305 = smul.addr %s304, 32
      %s306 = smul.addr %s305, 8
      %s307 = scalar_lea.vmem %s0, %s306
      %p308 = pneg %p41
      %p309 = pneg %p38
      %p310 = scmp.lt.s32.totalorder %s20, 1
      %s311 = scalar_select %p310, %s20, 1
      %s312 = smul.addr %s311, 2
      %s313 = smul.addr %s312, 4
      %s314 = scalar_lea.vmem %s1, %s313
      %p315 = pneg %p67
      %p316 = pneg %p64
      %p317 = pneg %p88
      %p318 = pneg %p85
      %p319 = pneg %p109
      %p320 = pneg %p106
      %p321 = pneg %p130
      %p322 = pneg %p127
      %p323 = pneg %p151
      %p324 = pneg %p148
      %p325 = pneg %p172
      %p326 = pneg %p169
      %p327 = pneg %p193
      %p328 = pneg %p190
      %p329 = pneg %p214
      %p330 = pneg %p211
      %p331 = pneg %p240
      %p332 = pneg %p237
      %p333 = scmp.lt.s32.totalorder %s20, 1
      %s334 = scalar_select %p333, %s20, 1
      %s335 = smul.addr %s334, 2
      %s336 = smul.addr %s335, 8
      %s337 = scalar_lea.vmem %s9, %s336
      %p338 = scmp.lt.s32.totalorder %s20, 1
      %s339 = scalar_select %p338, %s20, 1
      %s340 = smul.addr %s339, 32
      %s341 = smul.addr %s340, 8
      %s342 = scalar_lea.vmem %s0, %s341
      %p343 = scmp.lt.s32.totalorder %s20, 1
      %s344 = scalar_select %p343, %s20, 1
      %s345 = smul.addr %s344, 2
      %s346 = smul.addr %s345, 4
      %s347 = scalar_lea.vmem %s1, %s346
      %p348 = scmp.lt.s32.totalorder %s20, 1
      %s349 = scalar_select %p348, %s20, 1
      %s350 = smul.addr %s349, 2
      %s351 = smul.addr %s350, 8
      %s352 = scalar_lea.vmem %s9, %s351
      %v354 = vld [vmem:[%s347] sm:$0xff]
      %356 = vst [vmem:[#allocation1] ss:$2 sm:$0xff] %v354
      %v357 = vld.sshfl [vmem:[#allocation1] sm:$0xff pattern:$0x75316420]
      %v358 = vld.sshfl [vmem:[#allocation1 + $0x8] sm:$0xff pattern:$0x75316420]
      %361 = vst [vmem:[%s352] sm:$0xf] %v357
      %362 = vst [vmem:[%s352 + $0x8] sm:$0xf] %v358
      %v363 = vld [vmem:[%s342] sm:$0xff]
      %v364 = vld [vmem:[%s342 + $0x8] sm:$0xff]
      %v365 = vld [vmem:[%s342 + $0x10] sm:$0xff]
      %v366 = vld [vmem:[%s342 + $0x18] sm:$0xff]
      %v367 = vld [vmem:[%s342 + $0x20] sm:$0xff]
      %v368 = vld [vmem:[%s342 + $0x28] sm:$0xff]
      %v369 = vld [vmem:[%s342 + $0x30] sm:$0xff]
      %v370 = vld [vmem:[%s342 + $0x38] sm:$0xff]
      %v371 = vld [vmem:[%s342 + $0x40] sm:$0xff]
      %v372 = vld [vmem:[%s342 + $0x48] sm:$0xff]
      %v373 = vld [vmem:[%s342 + $0x50] sm:$0xff]
      %v374 = vld [vmem:[%s342 + $0x58] sm:$0xff]
      %v375 = vld [vmem:[%s342 + $0x60] sm:$0xff]
      %v376 = vld [vmem:[%s342 + $0x68] sm:$0xff]
      %v377 = vld [vmem:[%s342 + $0x70] sm:$0xff]
      %v378 = vld [vmem:[%s342 + $0x78] sm:$0xff]
      %v379 = vld [vmem:[%s342 + $0x80] sm:$0xff]
      %v380 = vld [vmem:[%s342 + $0x88] sm:$0xff]
      %v381 = vld [vmem:[%s342 + $0x90] sm:$0xff]
      %v382 = vld [vmem:[%s342 + $0x98] sm:$0xff]
      %v383 = vld [vmem:[%s342 + $0xa0] sm:$0xff]
      %v384 = vld [vmem:[%s342 + $0xa8] sm:$0xff]
      %v385 = vld [vmem:[%s342 + $0xb0] sm:$0xff]
      %v386 = vld [vmem:[%s342 + $0xb8] sm:$0xff]
      %v387 = vld [vmem:[%s342 + $0xc0] sm:$0xff]
      %v388 = vld [vmem:[%s342 + $0xc8] sm:$0xff]
      %v389 = vld [vmem:[%s342 + $0xd0] sm:$0xff]
      %v390 = vld [vmem:[%s342 + $0xd8] sm:$0xff]
      %v391 = vld [vmem:[%s342 + $0xe0] sm:$0xff]
      %v392 = vld [vmem:[%s342 + $0xe8] sm:$0xff]
      %v393 = vld [vmem:[%s342 + $0xf0] sm:$0xff]
      %v394 = vld [vmem:[%s342 + $0xf8] sm:$0xff]
      %v395 = vld [vmem:[%s2] sm:$0x1]
      %v397 = vperm.slane %v395, 0
      %v399 = vmul.f32 %v363, %v397
      %v400 = vmul.f32 %v364, %v397
      %v401 = vmul.f32 %v365, %v397
      %v402 = vmul.f32 %v366, %v397
      %v403 = vmul.f32 %v367, %v397
      %v404 = vmul.f32 %v368, %v397
      %v405 = vmul.f32 %v369, %v397
      %v406 = vmul.f32 %v370, %v397
      %v407 = vmul.f32 %v371, %v397
      %v408 = vmul.f32 %v372, %v397
      %v409 = vmul.f32 %v373, %v397
      %v410 = vmul.f32 %v374, %v397
      %v411 = vmul.f32 %v375, %v397
      %v412 = vmul.f32 %v376, %v397
      %v413 = vmul.f32 %v377, %v397
      %v414 = vmul.f32 %v378, %v397
      %v415 = vmul.f32 %v379, %v397
      %v416 = vmul.f32 %v380, %v397
      %v417 = vmul.f32 %v381, %v397
      %v418 = vmul.f32 %v382, %v397
      %v419 = vmul.f32 %v383, %v397
      %v420 = vmul.f32 %v384, %v397
      %v421 = vmul.f32 %v385, %v397
      %v422 = vmul.f32 %v386, %v397
      %v423 = vmul.f32 %v387, %v397
      %v424 = vmul.f32 %v388, %v397
      %v425 = vmul.f32 %v389, %v397
      %v426 = vmul.f32 %v390, %v397
      %v427 = vmul.f32 %v391, %v397
      %v428 = vmul.f32 %v392, %v397
      %v429 = vmul.f32 %v393, %v397
      %v430 = vmul.f32 %v394, %v397
      %v431 = vld [vmem:[%s3] sm:$0x1]
      %v433 = vperm.slane %v431, 0
      %v435 = vadd.f32 %v399, %v433
      %v436 = vadd.f32 %v400, %v433
      %v437 = vadd.f32 %v401, %v433
      %v438 = vadd.f32 %v402, %v433
      %v439 = vadd.f32 %v403, %v433
      %v440 = vadd.f32 %v404, %v433
      %v441 = vadd.f32 %v405, %v433
      %v442 = vadd.f32 %v406, %v433
      %v443 = vadd.f32 %v407, %v433
      %v444 = vadd.f32 %v408, %v433
      %v445 = vadd.f32 %v409, %v433
      %v446 = vadd.f32 %v410, %v433
      %v447 = vadd.f32 %v411, %v433
      %v448 = vadd.f32 %v412, %v433
      %v449 = vadd.f32 %v413, %v433
      %v450 = vadd.f32 %v414, %v433
      %v451 = vadd.f32 %v415, %v433
      %v452 = vadd.f32 %v416, %v433
      %v453 = vadd.f32 %v417, %v433
      %v454 = vadd.f32 %v418, %v433
      %v455 = vadd.f32 %v419, %v433
      %v456 = vadd.f32 %v420, %v433
      %v457 = vadd.f32 %v421, %v433
      %v458 = vadd.f32 %v422, %v433
      %v459 = vadd.f32 %v423, %v433
      %v460 = vadd.f32 %v424, %v433
      %v461 = vadd.f32 %v425, %v433
      %v462 = vadd.f32 %v426, %v433
      %v463 = vadd.f32 %v427, %v433
      %v464 = vadd.f32 %v428, %v433
      %v465 = vadd.f32 %v429, %v433
      %v466 = vadd.f32 %v430, %v433
      %v467 = vmax.f32 %v435, 0.0
      %v468 = vmax.f32 %v436, 0.0
      %v469 = vmax.f32 %v437, 0.0
      %v470 = vmax.f32 %v438, 0.0
      %v471 = vmax.f32 %v439, 0.0
      %v472 = vmax.f32 %v440, 0.0
      %v473 = vmax.f32 %v441, 0.0
      %v474 = vmax.f32 %v442, 0.0
      %v475 = vmax.f32 %v443, 0.0
      %v476 = vmax.f32 %v444, 0.0
      %v477 = vmax.f32 %v445, 0.0
      %v478 = vmax.f32 %v446, 0.0
      %v479 = vmax.f32 %v447, 0.0
      %v480 = vmax.f32 %v448, 0.0
      %v481 = vmax.f32 %v449, 0.0
      %v482 = vmax.f32 %v450, 0.0
      %v483 = vmax.f32 %v451, 0.0
      %v484 = vmax.f32 %v452, 0.0
      %v485 = vmax.f32 %v453, 0.0
      %v486 = vmax.f32 %v454, 0.0
      %v487 = vmax.f32 %v455, 0.0
      %v488 = vmax.f32 %v456, 0.0
      %v489 = vmax.f32 %v457, 0.0
      %v490 = vmax.f32 %v458, 0.0
      %v491 = vmax.f32 %v459, 0.0
      %v492 = vmax.f32 %v460, 0.0
      %v493 = vmax.f32 %v461, 0.0
      %v494 = vmax.f32 %v462, 0.0
      %v495 = vmax.f32 %v463, 0.0
      %v496 = vmax.f32 %v464, 0.0
      %v497 = vmax.f32 %v465, 0.0
      %v498 = vmax.f32 %v466, 0.0
      %v499 = vpack.c.bf16 %v468, %v467
      %v500 = vpack.c.bf16 %v470, %v469
      %v501 = vpack.c.bf16 %v472, %v471
      %v502 = vpack.c.bf16 %v474, %v473
      %v503 = vpack.c.bf16 %v476, %v475
      %v504 = vpack.c.bf16 %v478, %v477
      %v505 = vpack.c.bf16 %v480, %v479
      %v506 = vpack.c.bf16 %v482, %v481
      %v507 = vpack.c.bf16 %v484, %v483
      %v508 = vpack.c.bf16 %v486, %v485
      %v509 = vpack.c.bf16 %v488, %v487
      %v510 = vpack.c.bf16 %v490, %v489
      %v511 = vpack.c.bf16 %v492, %v491
      %v512 = vpack.c.bf16 %v494, %v493
      %v513 = vpack.c.bf16 %v496, %v495
      %v514 = vpack.c.bf16 %v498, %v497
      %v515 = vld [vmem:[%s4] sm:$0x3]
      %vm516 = vcmask 31744
      %v518 = vsel %vm516, %v499, 0
      %v521 = vsel %vm516, %v500, 0
      %v524 = vsel %vm516, %v501, 0
      %v527 = vsel %vm516, %v502, 0
      %v530 = vsel %vm516, %v503, 0
      %v533 = vsel %vm516, %v504, 0
      %v536 = vsel %vm516, %v505, 0
      %v539 = vsel %vm516, %v506, 0
      %v542 = vsel %vm516, %v507, 0
      %v545 = vsel %vm516, %v508, 0
      %v548 = vsel %vm516, %v509, 0
      %v551 = vsel %vm516, %v510, 0
      %v554 = vsel %vm516, %v511, 0
      %v557 = vsel %vm516, %v512, 0
      %v560 = vsel %vm516, %v513, 0
      %v563 = vsel %vm516, %v514, 0
      %vm565 = vcmask 1041408
      %v567 = vsel %vm565, %v515, 0
      %569 = vmatpush.bf16.msra.mxu0 0
      %570 = vmatpush.bf16.msra.mxu0 0
      %571 = vmatpush.bf16.msra.mxu0 0
      %572 = vmatpush.bf16.msra.mxu0 0
      %573 = vmatpush.bf16.msra.mxu0 0
      %574 = vmatpush.bf16.msra.mxu0 0
      %575 = vmatpush.bf16.msra.mxu0 0
      %576 = vmatpush.bf16.msra.mxu0 %v567
      %577 = vmatmul.bf16.gmra.mxu0 %v518
      %v578 = vpop.f32.mrf.mxu0
      %v579 = vadd.f32 0.0, %v578
      %v580 = vpop.f32.mrf.mxu0
      %v581 = vadd.f32 0.0, %v580
      %582 = vmatmul.bf16.gmra.mxu0 %v521
      %v583 = vpop.f32.mrf.mxu0
      %v584 = vadd.f32 0.0, %v583
      %v585 = vpop.f32.mrf.mxu0
      %v586 = vadd.f32 0.0, %v585
      %587 = vmatmul.bf16.gmra.mxu0 %v524
      %v588 = vpop.f32.mrf.mxu0
      %v589 = vadd.f32 0.0, %v588
      %v590 = vpop.f32.mrf.mxu0
      %v591 = vadd.f32 0.0, %v590
      %592 = vmatmul.bf16.gmra.mxu0 %v527
      %v593 = vpop.f32.mrf.mxu0
      %v594 = vadd.f32 0.0, %v593
      %v595 = vpop.f32.mrf.mxu0
      %v596 = vadd.f32 0.0, %v595
      %597 = vmatmul.bf16.gmra.mxu0 %v530
      %v598 = vpop.f32.mrf.mxu0
      %v599 = vadd.f32 0.0, %v598
      %v600 = vpop.f32.mrf.mxu0
      %v601 = vadd.f32 0.0, %v600
      %602 = vmatmul.bf16.gmra.mxu0 %v533
      %v603 = vpop.f32.mrf.mxu0
      %v604 = vadd.f32 0.0, %v603
      %v605 = vpop.f32.mrf.mxu0
      %v606 = vadd.f32 0.0, %v605
      %607 = vmatmul.bf16.gmra.mxu0 %v536
      %v608 = vpop.f32.mrf.mxu0
      %v609 = vadd.f32 0.0, %v608
      %v610 = vpop.f32.mrf.mxu0
      %v611 = vadd.f32 0.0, %v610
      %612 = vmatmul.bf16.gmra.mxu0 %v539
      %v613 = vpop.f32.mrf.mxu0
      %v614 = vadd.f32 0.0, %v613
      %v615 = vpop.f32.mrf.mxu0
      %v616 = vadd.f32 0.0, %v615
      %617 = vmatmul.bf16.gmra.mxu0 %v542
      %v618 = vpop.f32.mrf.mxu0
      %v619 = vadd.f32 0.0, %v618
      %v620 = vpop.f32.mrf.mxu0
      %v621 = vadd.f32 0.0, %v620
      %622 = vmatmul.bf16.gmra.mxu0 %v545
      %v623 = vpop.f32.mrf.mxu0
      %v624 = vadd.f32 0.0, %v623
      %v625 = vpop.f32.mrf.mxu0
      %v626 = vadd.f32 0.0, %v625
      %627 = vmatmul.bf16.gmra.mxu0 %v548
      %v628 = vpop.f32.mrf.mxu0
      %v629 = vadd.f32 0.0, %v628
      %v630 = vpop.f32.mrf.mxu0
      %v631 = vadd.f32 0.0, %v630
      %632 = vmatmul.bf16.gmra.mxu0 %v551
      %v633 = vpop.f32.mrf.mxu0
      %v634 = vadd.f32 0.0, %v633
      %v635 = vpop.f32.mrf.mxu0
      %v636 = vadd.f32 0.0, %v635
      %637 = vmatmul.bf16.gmra.mxu0 %v554
      %v638 = vpop.f32.mrf.mxu0
      %v639 = vadd.f32 0.0, %v638
      %v640 = vpop.f32.mrf.mxu0
      %v641 = vadd.f32 0.0, %v640
      %642 = vmatmul.bf16.gmra.mxu0 %v557
      %v643 = vpop.f32.mrf.mxu0
      %v644 = vadd.f32 0.0, %v643
      %v645 = vpop.f32.mrf.mxu0
      %v646 = vadd.f32 0.0, %v645
      %647 = vmatmul.bf16.gmra.mxu0 %v560
      %v648 = vpop.f32.mrf.mxu0
      %v649 = vadd.f32 0.0, %v648
      %v650 = vpop.f32.mrf.mxu0
      %v651 = vadd.f32 0.0, %v650
      %652 = vmatmul.bf16.gmra.mxu0 %v563
      %v653 = vpop.f32.mrf.mxu0
      %v654 = vadd.f32 0.0, %v653
      %v655 = vpop.f32.mrf.mxu0
      %v656 = vadd.f32 0.0, %v655
      %657 = vdwg.mxu0
      %v658 = vld [vmem:[%s5] sm:$0x1]
      %v660 = vperm.slane %v658, 0
      %v662 = vmul.f32 %v579, %v660
      %v663 = vmul.f32 %v581, %v660
      %v664 = vmul.f32 %v584, %v660
      %v665 = vmul.f32 %v586, %v660
      %v666 = vmul.f32 %v589, %v660
      %v667 = vmul.f32 %v591, %v660
      %v668 = vmul.f32 %v594, %v660
      %v669 = vmul.f32 %v596, %v660
      %v670 = vmul.f32 %v599, %v660
      %v671 = vmul.f32 %v601, %v660
      %v672 = vmul.f32 %v604, %v660
      %v673 = vmul.f32 %v606, %v660
      %v674 = vmul.f32 %v609, %v660
      %v675 = vmul.f32 %v611, %v660
      %v676 = vmul.f32 %v614, %v660
      %v677 = vmul.f32 %v616, %v660
      %v678 = vmul.f32 %v619, %v660
      %v679 = vmul.f32 %v621, %v660
      %v680 = vmul.f32 %v624, %v660
      %v681 = vmul.f32 %v626, %v660
      %v682 = vmul.f32 %v629, %v660
      %v683 = vmul.f32 %v631, %v660
      %v684 = vmul.f32 %v634, %v660
      %v685 = vmul.f32 %v636, %v660
      %v686 = vmul.f32 %v639, %v660
      %v687 = vmul.f32 %v641, %v660
      %v688 = vmul.f32 %v644, %v660
      %v689 = vmul.f32 %v646, %v660
      %v690 = vmul.f32 %v649, %v660
      %v691 = vmul.f32 %v651, %v660
      %v692 = vmul.f32 %v654, %v660
      %v693 = vmul.f32 %v656, %v660
      %v694 = vld [vmem:[%s6] sm:$0x1]
      %v696 = vperm.slane %v694, 0
      %v698 = vadd.f32 %v662, %v696
      %v699 = vadd.f32 %v663, %v696
      %v700 = vadd.f32 %v664, %v696
      %v701 = vadd.f32 %v665, %v696
      %v702 = vadd.f32 %v666, %v696
      %v703 = vadd.f32 %v667, %v696
      %v704 = vadd.f32 %v668, %v696
      %v705 = vadd.f32 %v669, %v696
      %v706 = vadd.f32 %v670, %v696
      %v707 = vadd.f32 %v671, %v696
      %v708 = vadd.f32 %v672, %v696
      %v709 = vadd.f32 %v673, %v696
      %v710 = vadd.f32 %v674, %v696
      %v711 = vadd.f32 %v675, %v696
      %v712 = vadd.f32 %v676, %v696
      %v713 = vadd.f32 %v677, %v696
      %v714 = vadd.f32 %v678, %v696
      %v715 = vadd.f32 %v679, %v696
      %v716 = vadd.f32 %v680, %v696
      %v717 = vadd.f32 %v681, %v696
      %v718 = vadd.f32 %v682, %v696
      %v719 = vadd.f32 %v683, %v696
      %v720 = vadd.f32 %v684, %v696
      %v721 = vadd.f32 %v685, %v696
      %v722 = vadd.f32 %v686, %v696
      %v723 = vadd.f32 %v687, %v696
      %v724 = vadd.f32 %v688, %v696
      %v725 = vadd.f32 %v689, %v696
      %v726 = vadd.f32 %v690, %v696
      %v727 = vadd.f32 %v691, %v696
      %v728 = vadd.f32 %v692, %v696
      %v729 = vadd.f32 %v693, %v696
      %v730 = vmax.f32 %v698, 0.0
      %v731 = vmax.f32 %v699, 0.0
      %v732 = vmax.f32 %v700, 0.0
      %v733 = vmax.f32 %v701, 0.0
      %v734 = vmax.f32 %v702, 0.0
      %v735 = vmax.f32 %v703, 0.0
      %v736 = vmax.f32 %v704, 0.0
      %v737 = vmax.f32 %v705, 0.0
      %v738 = vmax.f32 %v706, 0.0
      %v739 = vmax.f32 %v707, 0.0
      %v740 = vmax.f32 %v708, 0.0
      %v741 = vmax.f32 %v709, 0.0
      %v742 = vmax.f32 %v710, 0.0
      %v743 = vmax.f32 %v711, 0.0
      %v744 = vmax.f32 %v712, 0.0
      %v745 = vmax.f32 %v713, 0.0
      %v746 = vmax.f32 %v714, 0.0
      %v747 = vmax.f32 %v715, 0.0
      %v748 = vmax.f32 %v716, 0.0
      %v749 = vmax.f32 %v717, 0.0
      %v750 = vmax.f32 %v718, 0.0
      %v751 = vmax.f32 %v719, 0.0
      %v752 = vmax.f32 %v720, 0.0
      %v753 = vmax.f32 %v721, 0.0
      %v754 = vmax.f32 %v722, 0.0
      %v755 = vmax.f32 %v723, 0.0
      %v756 = vmax.f32 %v724, 0.0
      %v757 = vmax.f32 %v725, 0.0
      %v758 = vmax.f32 %v726, 0.0
      %v759 = vmax.f32 %v727, 0.0
      %v760 = vmax.f32 %v728, 0.0
      %v761 = vmax.f32 %v729, 0.0
      %vm762 = vcmask 130048
      %763 = vst.msk [vmem:[#allocation2] sm:$0xff] %vm762, 0.0
      %764 = vst.msk [vmem:[#allocation2 + $0x8] sm:$0xff] %vm762, 0.0
      %765 = vst.msk [vmem:[#allocation2 + $0x10] sm:$0xff] %vm762, 0.0
      %766 = vst.msk [vmem:[#allocation2 + $0x118] sm:$0xff] %vm762, 0.0
      %767 = vst.msk [vmem:[#allocation2 + $0x120] sm:$0xff] %vm762, 0.0
      %768 = vst.msk [vmem:[#allocation2 + $0x128] sm:$0xff] %vm762, 0.0
      %769 = vst.msk [vmem:[#allocation2 + $0x18] sm:$0xff] %vm762, %v730
      %770 = vst.msk [vmem:[#allocation2 + $0x20] sm:$0xff] %vm762, %v731
      %771 = vst.msk [vmem:[#allocation2 + $0x28] sm:$0xff] %vm762, %v732
      %772 = vst.msk [vmem:[#allocation2 + $0x30] sm:$0xff] %vm762, %v733
      %773 = vst.msk [vmem:[#allocation2 + $0x38] sm:$0xff] %vm762, %v734
      %774 = vst.msk [vmem:[#allocation2 + $0x40] sm:$0xff] %vm762, %v735
      %775 = vst.msk [vmem:[#allocation2 + $0x48] sm:$0xff] %vm762, %v736
      %776 = vst.msk [vmem:[#allocation2 + $0x50] sm:$0xff] %vm762, %v737
      %777 = vst.msk [vmem:[#allocation2 + $0x58] sm:$0xff] %vm762, %v738
      %778 = vst.msk [vmem:[#allocation2 + $0x60] sm:$0xff] %vm762, %v739
      %779 = vst.msk [vmem:[#allocation2 + $0x68] sm:$0xff] %vm762, %v740
      %780 = vst.msk [vmem:[#allocation2 + $0x70] sm:$0xff] %vm762, %v741
      %781 = vst.msk [vmem:[#allocation2 + $0x78] sm:$0xff] %vm762, %v742
      %782 = vst.msk [vmem:[#allocation2 + $0x80] sm:$0xff] %vm762, %v743
      %783 = vst.msk [vmem:[#allocation2 + $0x88] sm:$0xff] %vm762, %v744
      %784 = vst.msk [vmem:[#allocation2 + $0x90] sm:$0xff] %vm762, %v745
      %785 = vst.msk [vmem:[#allocation2 + $0x98] sm:$0xff] %vm762, %v746
      %786 = vst.msk [vmem:[#allocation2 + $0xa0] sm:$0xff] %vm762, %v747
      %787 = vst.msk [vmem:[#allocation2 + $0xa8] sm:$0xff] %vm762, %v748
      %788 = vst.msk [vmem:[#allocation2 + $0xb0] sm:$0xff] %vm762, %v749
      %789 = vst.msk [vmem:[#allocation2 + $0xb8] sm:$0xff] %vm762, %v750
      %790 = vst.msk [vmem:[#allocation2 + $0xc0] sm:$0xff] %vm762, %v751
      %791 = vst.msk [vmem:[#allocation2 + $0xc8] sm:$0xff] %vm762, %v752
      %792 = vst.msk [vmem:[#allocation2 + $0xd0] sm:$0xff] %vm762, %v753
      %793 = vst.msk [vmem:[#allocation2 + $0xd8] sm:$0xff] %vm762, %v754
      %794 = vst.msk [vmem:[#allocation2 + $0xe0] sm:$0xff] %vm762, %v755
      %795 = vst.msk [vmem:[#allocation2 + $0xe8] sm:$0xff] %vm762, %v756
      %796 = vst.msk [vmem:[#allocation2 + $0xf0] sm:$0xff] %vm762, %v757
      %797 = vst.msk [vmem:[#allocation2 + $0xf8] sm:$0xff] %vm762, %v758
      %798 = vst.msk [vmem:[#allocation2 + $0x100] sm:$0xff] %vm762, %v759
      %799 = vst.msk [vmem:[#allocation2 + $0x108] sm:$0xff] %vm762, %v760
      %800 = vst.msk [vmem:[#allocation2 + $0x110] sm:$0xff] %vm762, %v761
      %v801 = vlaneseq
      %v802 = vshrl.u32 %v801, 7
      %v803 = vadd.s32 %v802, 8
      %v804 = vadd.s32 %v802, 16
      %v805 = vadd.s32 %v802, 24
      %v806 = vadd.s32 %v802, 32
      %v807 = vadd.s32 %v802, 40
      %v808 = vadd.s32 %v802, 48
      %v809 = vadd.s32 %v802, 56
      %v810 = vadd.s32 %v802, 64
      %v811 = vadd.s32 %v802, 72
      %v812 = vadd.s32 %v802, 80
      %v813 = vadd.s32 %v802, 88
      %v814 = vadd.s32 %v802, 96
      %v815 = vadd.s32 %v802, 104
      %v816 = vadd.s32 %v802, 112
      %v817 = vadd.s32 %v802, 120
      %v818 = vadd.s32 %v802, 128
      %v819 = vadd.s32 %v802, 136
      %v820 = vadd.s32 %v802, 144
      %v821 = vadd.s32 %v802, 152
      %v822 = vadd.s32 %v802, 160
      %v823 = vadd.s32 %v802, 168
      %v824 = vadd.s32 %v802, 176
      %v825 = vadd.s32 %v802, 184
      %v826 = vadd.s32 %v802, 192
      %v827 = vadd.s32 %v802, 200
      %v828 = vadd.s32 %v802, 208
      %v829 = vadd.s32 %v802, 216
      %v830 = vadd.s32 %v802, 224
      %v831 = vadd.s32 %v802, 232
      %v832 = vadd.s32 %v802, 240
      %v833 = vadd.s32 %v802, 248
      %vm834 = vcmp.lt.s32.totalorder %v802, 0
      %v835 = vsub.s32 0, %v802
      %v836 = vsel %vm834, %v835, %v802
      %v837 = vshrl.u32 %v836, 4
      %v838 = vand.u32 %v836, 15
      %v839 = vsub.s32 0, %v838
      %v840 = vsel %vm834, %v839, %v838
      %vm841 = vcmp.lt.s32.totalorder %v803, 0
      %v842 = vsub.s32 0, %v803
      %v843 = vsel %vm841, %v842, %v803
      %v844 = vshrl.u32 %v843, 4
      %v845 = vand.u32 %v843, 15
      %v846 = vsub.s32 0, %v845
      %v847 = vsel %vm841, %v846, %v845
      %vm848 = vcmp.lt.s32.totalorder %v804, 0
      %v849 = vsub.s32 0, %v804
      %v850 = vsel %vm848, %v849, %v804
      %v851 = vshrl.u32 %v850, 4
      %v852 = vand.u32 %v850, 15
      %v853 = vsub.s32 0, %v852
      %v854 = vsel %vm848, %v853, %v852
      %vm855 = vcmp.lt.s32.totalorder %v805, 0
      %v856 = vsub.s32 0, %v805
      %v857 = vsel %vm855, %v856, %v805
      %v858 = vshrl.u32 %v857, 4
      %v859 = vand.u32 %v857, 15
      %v860 = vsub.s32 0, %v859
      %v861 = vsel %vm855, %v860, %v859
      %vm862 = vcmp.lt.s32.totalorder %v806, 0
      %v863 = vsub.s32 0, %v806
      %v864 = vsel %vm862, %v863, %v806
      %v865 = vshrl.u32 %v864, 4
      %v866 = vand.u32 %v864, 15
      %v867 = vsub.s32 0, %v866
      %v868 = vsel %vm862, %v867, %v866
      %vm869 = vcmp.lt.s32.totalorder %v807, 0
      %v870 = vsub.s32 0, %v807
      %v871 = vsel %vm869, %v870, %v807
      %v872 = vshrl.u32 %v871, 4
      %v873 = vand.u32 %v871, 15
      %v874 = vsub.s32 0, %v873
      %v875 = vsel %vm869, %v874, %v873
      %vm876 = vcmp.lt.s32.totalorder %v808, 0
      %v877 = vsub.s32 0, %v808
      %v878 = vsel %vm876, %v877, %v808
      %v879 = vshrl.u32 %v878, 4
      %v880 = vand.u32 %v878, 15
      %v881 = vsub.s32 0, %v880
      %v882 = vsel %vm876, %v881, %v880
      %vm883 = vcmp.lt.s32.totalorder %v809, 0
      %v884 = vsub.s32 0, %v809
      %v885 = vsel %vm883, %v884, %v809
      %v886 = vshrl.u32 %v885, 4
      %v887 = vand.u32 %v885, 15
      %v888 = vsub.s32 0, %v887
      %v889 = vsel %vm883, %v888, %v887
      %vm890 = vcmp.lt.s32.totalorder %v810, 0
      %v891 = vsub.s32 0, %v810
      %v892 = vsel %vm890, %v891, %v810
      %v893 = vshrl.u32 %v892, 4
      %v894 = vand.u32 %v892, 15
      %v895 = vsub.s32 0, %v894
      %v896 = vsel %vm890, %v895, %v894
      %vm897 = vcmp.lt.s32.totalorder %v811, 0
      %v898 = vsub.s32 0, %v811
      %v899 = vsel %vm897, %v898, %v811
      %v900 = vshrl.u32 %v899, 4
      %v901 = vand.u32 %v899, 15
      %v902 = vsub.s32 0, %v901
      %v903 = vsel %vm897, %v902, %v901
      %vm904 = vcmp.lt.s32.totalorder %v812, 0
      %v905 = vsub.s32 0, %v812
      %v906 = vsel %vm904, %v905, %v812
      %v907 = vshrl.u32 %v906, 4
      %v908 = vand.u32 %v906, 15
      %v909 = vsub.s32 0, %v908
      %v910 = vsel %vm904, %v909, %v908
      %vm911 = vcmp.lt.s32.totalorder %v813, 0
      %v912 = vsub.s32 0, %v813
      %v913 = vsel %vm911, %v912, %v813
      %v914 = vshrl.u32 %v913, 4
      %v915 = vand.u32 %v913, 15
      %v916 = vsub.s32 0, %v915
      %v917 = vsel %vm911, %v916, %v915
      %vm918 = vcmp.lt.s32.totalorder %v814, 0
      %v919 = vsub.s32 0, %v814
      %v920 = vsel %vm918, %v919, %v814
      %v921 = vshrl.u32 %v920, 4
      %v922 = vand.u32 %v920, 15
      %v923 = vsub.s32 0, %v922
      %v924 = vsel %vm918, %v923, %v922
      %vm925 = vcmp.lt.s32.totalorder %v815, 0
      %v926 = vsub.s32 0, %v815
      %v927 = vsel %vm925, %v926, %v815
      %v928 = vshrl.u32 %v927, 4
      %v929 = vand.u32 %v927, 15
      %v930 = vsub.s32 0, %v929
      %v931 = vsel %vm925, %v930, %v929
      %vm932 = vcmp.lt.s32.totalorder %v816, 0
      %v933 = vsub.s32 0, %v816
      %v934 = vsel %vm932, %v933, %v816
      %v935 = vshrl.u32 %v934, 4
      %v936 = vand.u32 %v934, 15
      %v937 = vsub.s32 0, %v936
      %v938 = vsel %vm932, %v937, %v936
      %vm939 = vcmp.lt.s32.totalorder %v817, 0
      %v940 = vsub.s32 0, %v817
      %v941 = vsel %vm939, %v940, %v817
      %v942 = vshrl.u32 %v941, 4
      %v943 = vand.u32 %v941, 15
      %v944 = vsub.s32 0, %v943
      %v945 = vsel %vm939, %v944, %v943
      %vm946 = vcmp.lt.s32.totalorder %v818, 0
      %v947 = vsub.s32 0, %v818
      %v948 = vsel %vm946, %v947, %v818
      %v949 = vshrl.u32 %v948, 4
      %v950 = vand.u32 %v948, 15
      %v951 = vsub.s32 0, %v950
      %v952 = vsel %vm946, %v951, %v950
      %vm953 = vcmp.lt.s32.totalorder %v819, 0
      %v954 = vsub.s32 0, %v819
      %v955 = vsel %vm953, %v954, %v819
      %v956 = vshrl.u32 %v955, 4
      %v957 = vand.u32 %v955, 15
      %v958 = vsub.s32 0, %v957
      %v959 = vsel %vm953, %v958, %v957
      %vm960 = vcmp.lt.s32.totalorder %v820, 0
      %v961 = vsub.s32 0, %v820
      %v962 = vsel %vm960, %v961, %v820
      %v963 = vshrl.u32 %v962, 4
      %v964 = vand.u32 %v962, 15
      %v965 = vsub.s32 0, %v964
      %v966 = vsel %vm960, %v965, %v964
      %vm967 = vcmp.lt.s32.totalorder %v821, 0
      %v968 = vsub.s32 0, %v821
      %v969 = vsel %vm967, %v968, %v821
      %v970 = vshrl.u32 %v969, 4
      %v971 = vand.u32 %v969, 15
      %v972 = vsub.s32 0, %v971
      %v973 = vsel %vm967, %v972, %v971
      %vm974 = vcmp.lt.s32.totalorder %v822, 0
      %v975 = vsub.s32 0, %v822
      %v976 = vsel %vm974, %v975, %v822
      %v977 = vshrl.u32 %v976, 4
      %v978 = vand.u32 %v976, 15
      %v979 = vsub.s32 0, %v978
      %v980 = vsel %vm974, %v979, %v978
      %vm981 = vcmp.lt.s32.totalorder %v823, 0
      %v982 = vsub.s32 0, %v823
      %v983 = vsel %vm981, %v982, %v823
      %v984 = vshrl.u32 %v983, 4
      %v985 = vand.u32 %v983, 15
      %v986 = vsub.s32 0, %v985
      %v987 = vsel %vm981, %v986, %v985
      %vm988 = vcmp.lt.s32.totalorder %v824, 0
      %v989 = vsub.s32 0, %v824
      %v990 = vsel %vm988, %v989, %v824
      %v991 = vshrl.u32 %v990, 4
      %v992 = vand.u32 %v990, 15
      %v993 = vsub.s32 0, %v992
      %v994 = vsel %vm988, %v993, %v992
      %vm995 = vcmp.lt.s32.totalorder %v825, 0
      %v996 = vsub.s32 0, %v825
      %v997 = vsel %vm995, %v996, %v825
      %v998 = vshrl.u32 %v997, 4
      %v999 = vand.u32 %v997, 15
      %v1000 = vsub.s32 0, %v999
      %v1001 = vsel %vm995, %v1000, %v999
      %vm1002 = vcmp.lt.s32.totalorder %v826, 0
      %v1003 = vsub.s32 0, %v826
      %v1004 = vsel %vm1002, %v1003, %v826
      %v1005 = vshrl.u32 %v1004, 4
      %v1006 = vand.u32 %v1004, 15
      %v1007 = vsub.s32 0, %v1006
      %v1008 = vsel %vm1002, %v1007, %v1006
      %vm1009 = vcmp.lt.s32.totalorder %v827, 0
      %v1010 = vsub.s32 0, %v827
      %v1011 = vsel %vm1009, %v1010, %v827
      %v1012 = vshrl.u32 %v1011, 4
      %v1013 = vand.u32 %v1011, 15
      %v1014 = vsub.s32 0, %v1013
      %v1015 = vsel %vm1009, %v1014, %v1013
      %vm1016 = vcmp.lt.s32.totalorder %v828, 0
      %v1017 = vsub.s32 0, %v828
      %v1018 = vsel %vm1016, %v1017, %v828
      %v1019 = vshrl.u32 %v1018, 4
      %v1020 = vand.u32 %v1018, 15
      %v1021 = vsub.s32 0, %v1020
      %v1022 = vsel %vm1016, %v1021, %v1020
      %vm1023 = vcmp.lt.s32.totalorder %v829, 0
      %v1024 = vsub.s32 0, %v829
      %v1025 = vsel %vm1023, %v1024, %v829
      %v1026 = vshrl.u32 %v1025, 4
      %v1027 = vand.u32 %v1025, 15
      %v1028 = vsub.s32 0, %v1027
      %v1029 = vsel %vm1023, %v1028, %v1027
      %vm1030 = vcmp.lt.s32.totalorder %v830, 0
      %v1031 = vsub.s32 0, %v830
      %v1032 = vsel %vm1030, %v1031, %v830
      %v1033 = vshrl.u32 %v1032, 4
      %v1034 = vand.u32 %v1032, 15
      %v1035 = vsub.s32 0, %v1034
      %v1036 = vsel %vm1030, %v1035, %v1034
      %vm1037 = vcmp.lt.s32.totalorder %v831, 0
      %v1038 = vsub.s32 0, %v831
      %v1039 = vsel %vm1037, %v1038, %v831
      %v1040 = vshrl.u32 %v1039, 4
      %v1041 = vand.u32 %v1039, 15
      %v1042 = vsub.s32 0, %v1041
      %v1043 = vsel %vm1037, %v1042, %v1041
      %vm1044 = vcmp.lt.s32.totalorder %v832, 0
      %v1045 = vsub.s32 0, %v832
      %v1046 = vsel %vm1044, %v1045, %v832
      %v1047 = vshrl.u32 %v1046, 4
      %v1048 = vand.u32 %v1046, 15
      %v1049 = vsub.s32 0, %v1048
      %v1050 = vsel %vm1044, %v1049, %v1048
      %vm1051 = vcmp.lt.s32.totalorder %v833, 0
      %v1052 = vsub.s32 0, %v833
      %v1053 = vsel %vm1051, %v1052, %v833
      %v1054 = vshrl.u32 %v1053, 4
      %v1055 = vand.u32 %v1053, 15
      %v1056 = vsub.s32 0, %v1055
      %v1057 = vsel %vm1051, %v1056, %v1055
      %vm1058 = vcmp.ne.s32.totalorder %v840, 0
      %vm1059 = vcmp.ne.s32.totalorder %v847, 0
      %vm1060 = vcmp.ne.s32.totalorder %v854, 0
      %vm1061 = vcmp.ne.s32.totalorder %v861, 0
      %vm1062 = vcmp.ne.s32.totalorder %v868, 0
      %vm1063 = vcmp.ne.s32.totalorder %v875, 0
      %vm1064 = vcmp.ne.s32.totalorder %v882, 0
      %vm1065 = vcmp.ne.s32.totalorder %v889, 0
      %vm1066 = vcmp.ne.s32.totalorder %v896, 0
      %vm1067 = vcmp.ne.s32.totalorder %v903, 0
      %vm1068 = vcmp.ne.s32.totalorder %v910, 0
      %vm1069 = vcmp.ne.s32.totalorder %v917, 0
      %vm1070 = vcmp.ne.s32.totalorder %v924, 0
      %vm1071 = vcmp.ne.s32.totalorder %v931, 0
      %vm1072 = vcmp.ne.s32.totalorder %v938, 0
      %vm1073 = vcmp.ne.s32.totalorder %v945, 0
      %vm1074 = vcmp.ne.s32.totalorder %v952, 0
      %vm1075 = vcmp.ne.s32.totalorder %v959, 0
      %vm1076 = vcmp.ne.s32.totalorder %v966, 0
      %vm1077 = vcmp.ne.s32.totalorder %v973, 0
      %vm1078 = vcmp.ne.s32.totalorder %v980, 0
      %vm1079 = vcmp.ne.s32.totalorder %v987, 0
      %vm1080 = vcmp.ne.s32.totalorder %v994, 0
      %vm1081 = vcmp.ne.s32.totalorder %v1001, 0
      %vm1082 = vcmp.ne.s32.totalorder %v1008, 0
      %vm1083 = vcmp.ne.s32.totalorder %v1015, 0
      %vm1084 = vcmp.ne.s32.totalorder %v1022, 0
      %vm1085 = vcmp.ne.s32.totalorder %v1029, 0
      %vm1086 = vcmp.ne.s32.totalorder %v1036, 0
      %vm1087 = vcmp.ne.s32.totalorder %v1043, 0
      %vm1088 = vcmp.ne.s32.totalorder %v1050, 0
      %vm1089 = vcmp.ne.s32.totalorder %v1057, 0
      %vm1090 = vcmp.lt.s32.totalorder %v840, 0
      %vm1091 = vcmp.lt.s32.totalorder %v847, 0
      %vm1092 = vcmp.lt.s32.totalorder %v854, 0
      %vm1093 = vcmp.lt.s32.totalorder %v861, 0
      %vm1094 = vcmp.lt.s32.totalorder %v868, 0
      %vm1095 = vcmp.lt.s32.totalorder %v875, 0
      %vm1096 = vcmp.lt.s32.totalorder %v882, 0
      %vm1097 = vcmp.lt.s32.totalorder %v889, 0
      %vm1098 = vcmp.lt.s32.totalorder %v896, 0
      %vm1099 = vcmp.lt.s32.totalorder %v903, 0
      %vm1100 = vcmp.lt.s32.totalorder %v910, 0
      %vm1101 = vcmp.lt.s32.totalorder %v917, 0
      %vm1102 = vcmp.lt.s32.totalorder %v924, 0
      %vm1103 = vcmp.lt.s32.totalorder %v931, 0
      %vm1104 = vcmp.lt.s32.totalorder %v938, 0
      %vm1105 = vcmp.lt.s32.totalorder %v945, 0
      %vm1106 = vcmp.lt.s32.totalorder %v952, 0
      %vm1107 = vcmp.lt.s32.totalorder %v959, 0
      %vm1108 = vcmp.lt.s32.totalorder %v966, 0
      %vm1109 = vcmp.lt.s32.totalorder %v973, 0
      %vm1110 = vcmp.lt.s32.totalorder %v980, 0
      %vm1111 = vcmp.lt.s32.totalorder %v987, 0
      %vm1112 = vcmp.lt.s32.totalorder %v994, 0
      %vm1113 = vcmp.lt.s32.totalorder %v1001, 0
      %vm1114 = vcmp.lt.s32.totalorder %v1008, 0
      %vm1115 = vcmp.lt.s32.totalorder %v1015, 0
      %vm1116 = vcmp.lt.s32.totalorder %v1022, 0
      %vm1117 = vcmp.lt.s32.totalorder %v1029, 0
      %vm1118 = vcmp.lt.s32.totalorder %v1036, 0
      %vm1119 = vcmp.lt.s32.totalorder %v1043, 0
      %vm1120 = vcmp.lt.s32.totalorder %v1050, 0
      %vm1121 = vcmp.lt.s32.totalorder %v1057, 0
      %vm1122 = vmand %vm1090, %vm1058
      %vm1123 = vmand %vm1091, %vm1059
      %vm1124 = vmand %vm1092, %vm1060
      %vm1125 = vmand %vm1093, %vm1061
      %vm1126 = vmand %vm1094, %vm1062
      %vm1127 = vmand %vm1095, %vm1063
      %vm1128 = vmand %vm1096, %vm1064
      %vm1129 = vmand %vm1097, %vm1065
      %vm1130 = vmand %vm1098, %vm1066
      %vm1131 = vmand %vm1099, %vm1067
      %vm1132 = vmand %vm1100, %vm1068
      %vm1133 = vmand %vm1101, %vm1069
      %vm1134 = vmand %vm1102, %vm1070
      %vm1135 = vmand %vm1103, %vm1071
      %vm1136 = vmand %vm1104, %vm1072
      %vm1137 = vmand %vm1105, %vm1073
      %vm1138 = vmand %vm1106, %vm1074
      %vm1139 = vmand %vm1107, %vm1075
      %vm1140 = vmand %vm1108, %vm1076
      %vm1141 = vmand %vm1109, %vm1077
      %vm1142 = vmand %vm1110, %vm1078
      %vm1143 = vmand %vm1111, %vm1079
      %vm1144 = vmand %vm1112, %vm1080
      %vm1145 = vmand %vm1113, %vm1081
      %vm1146 = vmand %vm1114, %vm1082
      %vm1147 = vmand %vm1115, %vm1083
      %vm1148 = vmand %vm1116, %vm1084
      %vm1149 = vmand %vm1117, %vm1085
      %vm1150 = vmand %vm1118, %vm1086
      %vm1151 = vmand %vm1119, %vm1087
      %vm1152 = vmand %vm1120, %vm1088
      %vm1153 = vmand %vm1121, %vm1089
      %v1154 = vadd.s32 %v840, 16
      %v1155 = vadd.s32 %v847, 16
      %v1156 = vadd.s32 %v854, 16
      %v1157 = vadd.s32 %v861, 16
      %v1158 = vadd.s32 %v868, 16
      %v1159 = vadd.s32 %v875, 16
      %v1160 = vadd.s32 %v882, 16
      %v1161 = vadd.s32 %v889, 16
      %v1162 = vadd.s32 %v896, 16
      %v1163 = vadd.s32 %v903, 16
      %v1164 = vadd.s32 %v910, 16
      %v1165 = vadd.s32 %v917, 16
      %v1166 = vadd.s32 %v924, 16
      %v1167 = vadd.s32 %v931, 16
      %v1168 = vadd.s32 %v938, 16
      %v1169 = vadd.s32 %v945, 16
      %v1170 = vadd.s32 %v952, 16
      %v1171 = vadd.s32 %v959, 16
      %v1172 = vadd.s32 %v966, 16
      %v1173 = vadd.s32 %v973, 16
      %v1174 = vadd.s32 %v980, 16
      %v1175 = vadd.s32 %v987, 16
      %v1176 = vadd.s32 %v994, 16
      %v1177 = vadd.s32 %v1001, 16
      %v1178 = vadd.s32 %v1008, 16
      %v1179 = vadd.s32 %v1015, 16
      %v1180 = vadd.s32 %v1022, 16
      %v1181 = vadd.s32 %v1029, 16
      %v1182 = vadd.s32 %v1036, 16
      %v1183 = vadd.s32 %v1043, 16
      %v1184 = vadd.s32 %v1050, 16
      %v1185 = vadd.s32 %v1057, 16
      %v1186 = vsel %vm1122, %v1154, %v840
      %v1187 = vsel %vm1123, %v1155, %v847
      %v1188 = vsel %vm1124, %v1156, %v854
      %v1189 = vsel %vm1125, %v1157, %v861
      %v1190 = vsel %vm1126, %v1158, %v868
      %v1191 = vsel %vm1127, %v1159, %v875
      %v1192 = vsel %vm1128, %v1160, %v882
      %v1193 = vsel %vm1129, %v1161, %v889
      %v1194 = vsel %vm1130, %v1162, %v896
      %v1195 = vsel %vm1131, %v1163, %v903
      %v1196 = vsel %vm1132, %v1164, %v910
      %v1197 = vsel %vm1133, %v1165, %v917
      %v1198 = vsel %vm1134, %v1166, %v924
      %v1199 = vsel %vm1135, %v1167, %v931
      %v1200 = vsel %vm1136, %v1168, %v938
      %v1201 = vsel %vm1137, %v1169, %v945
      %v1202 = vsel %vm1138, %v1170, %v952
      %v1203 = vsel %vm1139, %v1171, %v959
      %v1204 = vsel %vm1140, %v1172, %v966
      %v1205 = vsel %vm1141, %v1173, %v973
      %v1206 = vsel %vm1142, %v1174, %v980
      %v1207 = vsel %vm1143, %v1175, %v987
      %v1208 = vsel %vm1144, %v1176, %v994
      %v1209 = vsel %vm1145, %v1177, %v1001
      %v1210 = vsel %vm1146, %v1178, %v1008
      %v1211 = vsel %vm1147, %v1179, %v1015
      %v1212 = vsel %vm1148, %v1180, %v1022
      %v1213 = vsel %vm1149, %v1181, %v1029
      %v1214 = vsel %vm1150, %v1182, %v1036
      %v1215 = vsel %vm1151, %v1183, %v1043
      %v1216 = vsel %vm1152, %v1184, %v1050
      %v1217 = vsel %vm1153, %v1185, %v1057
      %vm1218 = vcmp.gt.s32.totalorder %v1186, 0
      %vm1219 = vcmp.gt.s32.totalorder %v1187, 0
      %vm1220 = vcmp.gt.s32.totalorder %v1188, 0
      %vm1221 = vcmp.gt.s32.totalorder %v1189, 0
      %vm1222 = vcmp.gt.s32.totalorder %v1190, 0
      %vm1223 = vcmp.gt.s32.totalorder %v1191, 0
      %vm1224 = vcmp.gt.s32.totalorder %v1192, 0
      %vm1225 = vcmp.gt.s32.totalorder %v1193, 0
      %vm1226 = vcmp.gt.s32.totalorder %v1194, 0
      %vm1227 = vcmp.gt.s32.totalorder %v1195, 0
      %vm1228 = vcmp.gt.s32.totalorder %v1196, 0
      %vm1229 = vcmp.gt.s32.totalorder %v1197, 0
      %vm1230 = vcmp.gt.s32.totalorder %v1198, 0
      %vm1231 = vcmp.gt.s32.totalorder %v1199, 0
      %vm1232 = vcmp.gt.s32.totalorder %v1200, 0
      %vm1233 = vcmp.gt.s32.totalorder %v1201, 0
      %vm1234 = vcmp.gt.s32.totalorder %v1202, 0
      %vm1235 = vcmp.gt.s32.totalorder %v1203, 0
      %vm1236 = vcmp.gt.s32.totalorder %v1204, 0
      %vm1237 = vcmp.gt.s32.totalorder %v1205, 0
      %vm1238 = vcmp.gt.s32.totalorder %v1206, 0
      %vm1239 = vcmp.gt.s32.totalorder %v1207, 0
      %vm1240 = vcmp.gt.s32.totalorder %v1208, 0
      %vm1241 = vcmp.gt.s32.totalorder %v1209, 0
      %vm1242 = vcmp.gt.s32.totalorder %v1210, 0
      %vm1243 = vcmp.gt.s32.totalorder %v1211, 0
      %vm1244 = vcmp.gt.s32.totalorder %v1212, 0
      %vm1245 = vcmp.gt.s32.totalorder %v1213, 0
      %vm1246 = vcmp.gt.s32.totalorder %v1214, 0
      %vm1247 = vcmp.gt.s32.totalorder %v1215, 0
      %vm1248 = vcmp.gt.s32.totalorder %v1216, 0
      %vm1249 = vcmp.gt.s32.totalorder %v1217, 0
      %vm1250 = vcmp.lt.s32.totalorder %v1186, 15
      %vm1251 = vcmp.lt.s32.totalorder %v1187, 15
      %vm1252 = vcmp.lt.s32.totalorder %v1188, 15
      %vm1253 = vcmp.lt.s32.totalorder %v1189, 15
      %vm1254 = vcmp.lt.s32.totalorder %v1190, 15
      %vm1255 = vcmp.lt.s32.totalorder %v1191, 15
      %vm1256 = vcmp.lt.s32.totalorder %v1192, 15
      %vm1257 = vcmp.lt.s32.totalorder %v1193, 15
      %vm1258 = vcmp.lt.s32.totalorder %v1194, 15
      %vm1259 = vcmp.lt.s32.totalorder %v1195, 15
      %vm1260 = vcmp.lt.s32.totalorder %v1196, 15
      %vm1261 = vcmp.lt.s32.totalorder %v1197, 15
      %vm1262 = vcmp.lt.s32.totalorder %v1198, 15
      %vm1263 = vcmp.lt.s32.totalorder %v1199, 15
      %vm1264 = vcmp.lt.s32.totalorder %v1200, 15
      %vm1265 = vcmp.lt.s32.totalorder %v1201, 15
      %vm1266 = vcmp.lt.s32.totalorder %v1202, 15
      %vm1267 = vcmp.lt.s32.totalorder %v1203, 15
      %vm1268 = vcmp.lt.s32.totalorder %v1204, 15
      %vm1269 = vcmp.lt.s32.totalorder %v1205, 15
      %vm1270 = vcmp.lt.s32.totalorder %v1206, 15
      %vm1271 = vcmp.lt.s32.totalorder %v1207, 15
      %vm1272 = vcmp.lt.s32.totalorder %v1208, 15
      %vm1273 = vcmp.lt.s32.totalorder %v1209, 15
      %vm1274 = vcmp.lt.s32.totalorder %v1210, 15
      %vm1275 = vcmp.lt.s32.totalorder %v1211, 15
      %vm1276 = vcmp.lt.s32.totalorder %v1212, 15
      %vm1277 = vcmp.lt.s32.totalorder %v1213, 15
      %vm1278 = vcmp.lt.s32.totalorder %v1214, 15
      %vm1279 = vcmp.lt.s32.totalorder %v1215, 15
      %vm1280 = vcmp.lt.s32.totalorder %v1216, 15
      %vm1281 = vcmp.lt.s32.totalorder %v1217, 15
      %v1282 = vld [vmem:[#allocation2 + $0x7] sm:$0xff]
      %v1283 = vld [vmem:[#allocation2 + $0xf] sm:$0xff]
      %v1284 = vld [vmem:[#allocation2 + $0x17] sm:$0xff]
      %v1285 = vld [vmem:[#allocation2 + $0x1f] sm:$0xff]
      %v1286 = vld [vmem:[#allocation2 + $0x27] sm:$0xff]
      %v1287 = vld [vmem:[#allocation2 + $0x2f] sm:$0xff]
      %v1288 = vld [vmem:[#allocation2 + $0x37] sm:$0xff]
      %v1289 = vld [vmem:[#allocation2 + $0x3f] sm:$0xff]
      %v1290 = vld [vmem:[#allocation2 + $0x47] sm:$0xff]
      %v1291 = vld [vmem:[#allocation2 + $0x4f] sm:$0xff]
      %v1292 = vld [vmem:[#allocation2 + $0x57] sm:$0xff]
      %v1293 = vld [vmem:[#allocation2 + $0x5f] sm:$0xff]
      %v1294 = vld [vmem:[#allocation2 + $0x67] sm:$0xff]
      %v1295 = vld [vmem:[#allocation2 + $0x6f] sm:$0xff]
      %v1296 = vld [vmem:[#allocation2 + $0x77] sm:$0xff]
      %v1297 = vld [vmem:[#allocation2 + $0x7f] sm:$0xff]
      %v1298 = vld [vmem:[#allocation2 + $0x87] sm:$0xff]
      %v1299 = vld [vmem:[#allocation2 + $0x8f] sm:$0xff]
      %v1300 = vld [vmem:[#allocation2 + $0x97] sm:$0xff]
      %v1301 = vld [vmem:[#allocation2 + $0x9f] sm:$0xff]
      %v1302 = vld [vmem:[#allocation2 + $0xa7] sm:$0xff]
      %v1303 = vld [vmem:[#allocation2 + $0xaf] sm:$0xff]
      %v1304 = vld [vmem:[#allocation2 + $0xb7] sm:$0xff]
      %v1305 = vld [vmem:[#allocation2 + $0xbf] sm:$0xff]
      %v1306 = vld [vmem:[#allocation2 + $0xc7] sm:$0xff]
      %v1307 = vld [vmem:[#allocation2 + $0xcf] sm:$0xff]
      %v1308 = vld [vmem:[#allocation2 + $0xd7] sm:$0xff]
      %v1309 = vld [vmem:[#allocation2 + $0xdf] sm:$0xff]
      %v1310 = vld [vmem:[#allocation2 + $0xe7] sm:$0xff]
      %v1311 = vld [vmem:[#allocation2 + $0xef] sm:$0xff]
      %v1312 = vld [vmem:[#allocation2 + $0xf7] sm:$0xff]
      %v1313 = vld [vmem:[#allocation2 + $0xff] sm:$0xff]
      %v1314 = vsel %vm1218, 1, 0
      %v1315 = vsel %vm1219, 1, 0
      %v1316 = vsel %vm1220, 1, 0
      %v1317 = vsel %vm1221, 1, 0
      %v1318 = vsel %vm1222, 1, 0
      %v1319 = vsel %vm1223, 1, 0
      %v1320 = vsel %vm1224, 1, 0
      %v1321 = vsel %vm1225, 1, 0
      %v1322 = vsel %vm1226, 1, 0
      %v1323 = vsel %vm1227, 1, 0
      %v1324 = vsel %vm1228, 1, 0
      %v1325 = vsel %vm1229, 1, 0
      %v1326 = vsel %vm1230, 1, 0
      %v1327 = vsel %vm1231, 1, 0
      %v1328 = vsel %vm1232, 1, 0
      %v1329 = vsel %vm1233, 1, 0
      %v1330 = vsel %vm1234, 1, 0
      %v1331 = vsel %vm1235, 1, 0
      %v1332 = vsel %vm1236, 1, 0
      %v1333 = vsel %vm1237, 1, 0
      %v1334 = vsel %vm1238, 1, 0
      %v1335 = vsel %vm1239, 1, 0
      %v1336 = vsel %vm1240, 1, 0
      %v1337 = vsel %vm1241, 1, 0
      %v1338 = vsel %vm1242, 1, 0
      %v1339 = vsel %vm1243, 1, 0
      %v1340 = vsel %vm1244, 1, 0
      %v1341 = vsel %vm1245, 1, 0
      %v1342 = vsel %vm1246, 1, 0
      %v1343 = vsel %vm1247, 1, 0
      %v1344 = vsel %vm1248, 1, 0
      %v1345 = vsel %vm1249, 1, 0
      %vm1346 = vcmp.eq.s32.totalorder %v1314, 1
      %vm1347 = vcmp.eq.s32.totalorder %v1315, 1
      %vm1348 = vcmp.eq.s32.totalorder %v1316, 1
      %vm1349 = vcmp.eq.s32.totalorder %v1317, 1
      %vm1350 = vcmp.eq.s32.totalorder %v1318, 1
      %vm1351 = vcmp.eq.s32.totalorder %v1319, 1
      %vm1352 = vcmp.eq.s32.totalorder %v1320, 1
      %vm1353 = vcmp.eq.s32.totalorder %v1321, 1
      %vm1354 = vcmp.eq.s32.totalorder %v1322, 1
      %vm1355 = vcmp.eq.s32.totalorder %v1323, 1
      %vm1356 = vcmp.eq.s32.totalorder %v1324, 1
      %vm1357 = vcmp.eq.s32.totalorder %v1325, 1
      %vm1358 = vcmp.eq.s32.totalorder %v1326, 1
      %vm1359 = vcmp.eq.s32.totalorder %v1327, 1
      %vm1360 = vcmp.eq.s32.totalorder %v1328, 1
      %vm1361 = vcmp.eq.s32.totalorder %v1329, 1
      %vm1362 = vcmp.eq.s32.totalorder %v1330, 1
      %vm1363 = vcmp.eq.s32.totalorder %v1331, 1
      %vm1364 = vcmp.eq.s32.totalorder %v1332, 1
      %vm1365 = vcmp.eq.s32.totalorder %v1333, 1
      %vm1366 = vcmp.eq.s32.totalorder %v1334, 1
      %vm1367 = vcmp.eq.s32.totalorder %v1335, 1
      %vm1368 = vcmp.eq.s32.totalorder %v1336, 1
      %vm1369 = vcmp.eq.s32.totalorder %v1337, 1
      %vm1370 = vcmp.eq.s32.totalorder %v1338, 1
      %vm1371 = vcmp.eq.s32.totalorder %v1339, 1
      %vm1372 = vcmp.eq.s32.totalorder %v1340, 1
      %vm1373 = vcmp.eq.s32.totalorder %v1341, 1
      %vm1374 = vcmp.eq.s32.totalorder %v1342, 1
      %vm1375 = vcmp.eq.s32.totalorder %v1343, 1
      %vm1376 = vcmp.eq.s32.totalorder %v1344, 1
      %vm1377 = vcmp.eq.s32.totalorder %v1345, 1
      %v1378 = vsel %vm1346, %v1282, 0.0
      %v1379 = vsel %vm1347, %v1283, 0.0
      %v1380 = vsel %vm1348, %v1284, 0.0
      %v1381 = vsel %vm1349, %v1285, 0.0
      %v1382 = vsel %vm1350, %v1286, 0.0
      %v1383 = vsel %vm1351, %v1287, 0.0
      %v1384 = vsel %vm1352, %v1288, 0.0
      %v1385 = vsel %vm1353, %v1289, 0.0
      %v1386 = vsel %vm1354, %v1290, 0.0
      %v1387 = vsel %vm1355, %v1291, 0.0
      %v1388 = vsel %vm1356, %v1292, 0.0
      %v1389 = vsel %vm1357, %v1293, 0.0
      %v1390 = vsel %vm1358, %v1294, 0.0
      %v1391 = vsel %vm1359, %v1295, 0.0
      %v1392 = vsel %vm1360, %v1296, 0.0
      %v1393 = vsel %vm1361, %v1297, 0.0
      %v1394 = vsel %vm1362, %v1298, 0.0
      %v1395 = vsel %vm1363, %v1299, 0.0
      %v1396 = vsel %vm1364, %v1300, 0.0
      %v1397 = vsel %vm1365, %v1301, 0.0
      %v1398 = vsel %vm1366, %v1302, 0.0
      %v1399 = vsel %vm1367, %v1303, 0.0
      %v1400 = vsel %vm1368, %v1304, 0.0
      %v1401 = vsel %vm1369, %v1305, 0.0
      %v1402 = vsel %vm1370, %v1306, 0.0
      %v1403 = vsel %vm1371, %v1307, 0.0
      %v1404 = vsel %vm1372, %v1308, 0.0
      %v1405 = vsel %vm1373, %v1309, 0.0
      %v1406 = vsel %vm1374, %v1310, 0.0
      %v1407 = vsel %vm1375, %v1311, 0.0
      %v1408 = vsel %vm1376, %v1312, 0.0
      %v1409 = vsel %vm1377, %v1313, 0.0
      %v1410 = vld [vmem:[%s7] sm:$0x3]
      %v1411 = vpack.c.bf16 %v1379, %v1378
      %v1412 = vpack.c.bf16 %v1381, %v1380
      %v1413 = vpack.c.bf16 %v1383, %v1382
      %v1414 = vpack.c.bf16 %v1385, %v1384
      %v1415 = vpack.c.bf16 %v1387, %v1386
      %v1416 = vpack.c.bf16 %v1389, %v1388
      %v1417 = vpack.c.bf16 %v1391, %v1390
      %v1418 = vpack.c.bf16 %v1393, %v1392
      %v1419 = vpack.c.bf16 %v1395, %v1394
      %v1420 = vpack.c.bf16 %v1397, %v1396
      %v1421 = vpack.c.bf16 %v1399, %v1398
      %v1422 = vpack.c.bf16 %v1401, %v1400
      %v1423 = vpack.c.bf16 %v1403, %v1402
      %v1424 = vpack.c.bf16 %v1405, %v1404
      %v1425 = vpack.c.bf16 %v1407, %v1406
      %v1426 = vpack.c.bf16 %v1409, %v1408
      %v1427 = vld [vmem:[#allocation2 + $0x8] sm:$0xff]
      %v1428 = vld [vmem:[#allocation2 + $0x10] sm:$0xff]
      %v1429 = vld [vmem:[#allocation2 + $0x18] sm:$0xff]
      %v1430 = vld [vmem:[#allocation2 + $0x20] sm:$0xff]
      %v1431 = vld [vmem:[#allocation2 + $0x28] sm:$0xff]
      %v1432 = vld [vmem:[#allocation2 + $0x30] sm:$0xff]
      %v1433 = vld [vmem:[#allocation2 + $0x38] sm:$0xff]
      %v1434 = vld [vmem:[#allocation2 + $0x40] sm:$0xff]
      %v1435 = vld [vmem:[#allocation2 + $0x48] sm:$0xff]
      %v1436 = vld [vmem:[#allocation2 + $0x50] sm:$0xff]
      %v1437 = vld [vmem:[#allocation2 + $0x58] sm:$0xff]
      %v1438 = vld [vmem:[#allocation2 + $0x60] sm:$0xff]
      %v1439 = vld [vmem:[#allocation2 + $0x68] sm:$0xff]
      %v1440 = vld [vmem:[#allocation2 + $0x70] sm:$0xff]
      %v1441 = vld [vmem:[#allocation2 + $0x78] sm:$0xff]
      %v1442 = vld [vmem:[#allocation2 + $0x80] sm:$0xff]
      %v1443 = vld [vmem:[#allocation2 + $0x88] sm:$0xff]
      %v1444 = vld [vmem:[#allocation2 + $0x90] sm:$0xff]
      %v1445 = vld [vmem:[#allocation2 + $0x98] sm:$0xff]
      %v1446 = vld [vmem:[#allocation2 + $0xa0] sm:$0xff]
      %v1447 = vld [vmem:[#allocation2 + $0xa8] sm:$0xff]
      %v1448 = vld [vmem:[#allocation2 + $0xb0] sm:$0xff]
      %v1449 = vld [vmem:[#allocation2 + $0xb8] sm:$0xff]
      %v1450 = vld [vmem:[#allocation2 + $0xc0] sm:$0xff]
      %v1451 = vld [vmem:[#allocation2 + $0xc8] sm:$0xff]
      %v1452 = vld [vmem:[#allocation2 + $0xd0] sm:$0xff]
      %v1453 = vld [vmem:[#allocation2 + $0xd8] sm:$0xff]
      %v1454 = vld [vmem:[#allocation2 + $0xe0] sm:$0xff]
      %v1455 = vld [vmem:[#allocation2 + $0xe8] sm:$0xff]
      %v1456 = vld [vmem:[#allocation2 + $0xf0] sm:$0xff]
      %v1457 = vld [vmem:[#allocation2 + $0xf8] sm:$0xff]
      %v1458 = vld [vmem:[#allocation2 + $0x100] sm:$0xff]
      %s1459 = scalar_lea.vmem %s7, 2
      %v1460 = vld [vmem:[%s1459] sm:$0x3]
      %v1461 = vpack.c.bf16 %v1428, %v1427
      %v1462 = vpack.c.bf16 %v1430, %v1429
      %v1463 = vpack.c.bf16 %v1432, %v1431
      %v1464 = vpack.c.bf16 %v1434, %v1433
      %v1465 = vpack.c.bf16 %v1436, %v1435
      %v1466 = vpack.c.bf16 %v1438, %v1437
      %v1467 = vpack.c.bf16 %v1440, %v1439
      %v1468 = vpack.c.bf16 %v1442, %v1441
      %v1469 = vpack.c.bf16 %v1444, %v1443
      %v1470 = vpack.c.bf16 %v1446, %v1445
      %v1471 = vpack.c.bf16 %v1448, %v1447
      %v1472 = vpack.c.bf16 %v1450, %v1449
      %v1473 = vpack.c.bf16 %v1452, %v1451
      %v1474 = vpack.c.bf16 %v1454, %v1453
      %v1475 = vpack.c.bf16 %v1456, %v1455
      %v1476 = vpack.c.bf16 %v1458, %v1457
      %v1478 = vsel %vm762, %v1460, 0
      %v1481 = vsel %vm762, %v1461, 0
      %v1484 = vsel %vm762, %v1462, 0
      %v1487 = vsel %vm762, %v1463, 0
      %v1490 = vsel %vm762, %v1464, 0
      %v1493 = vsel %vm762, %v1465, 0
      %v1496 = vsel %vm762, %v1466, 0
      %v1499 = vsel %vm762, %v1467, 0
      %v1502 = vsel %vm762, %v1468, 0
      %v1505 = vsel %vm762, %v1469, 0
      %v1508 = vsel %vm762, %v1470, 0
      %v1511 = vsel %vm762, %v1471, 0
      %v1514 = vsel %vm762, %v1472, 0
      %v1517 = vsel %vm762, %v1473, 0
      %v1520 = vsel %vm762, %v1474, 0
      %v1523 = vsel %vm762, %v1475, 0
      %v1526 = vsel %vm762, %v1476, 0
      %1528 = vmatpush.bf16.xpose.msra.mxu0 %v1502
      %1529 = vmatpush.bf16.xpose.msra.mxu0 %v1499
      %1530 = vmatpush.bf16.xpose.msra.mxu0 %v1496
      %1531 = vmatpush.bf16.xpose.msra.mxu0 %v1493
      %1532 = vmatpush.bf16.xpose.msra.mxu0 %v1490
      %1533 = vmatpush.bf16.xpose.msra.mxu0 %v1487
      %1534 = vmatpush.bf16.xpose.msra.mxu0 %v1484
      %1535 = vmatpush.bf16.xpose.msra.mxu0 %v1481
      %1536 = vmatmul.bf16.gmra.mxu0 %v1478
      %v1537 = vpop.f32.mrf.mxu0
      %v1538 = vadd.f32 0.0, %v1537
      %v1539 = vpop.f32.mrf.mxu0
      %1540 = vdwg.mxu0
      %1541 = vmatpush.bf16.xpose.msra.mxu0 %v1526
      %1542 = vmatpush.bf16.xpose.msra.mxu0 %v1523
      %1543 = vmatpush.bf16.xpose.msra.mxu0 %v1520
      %1544 = vmatpush.bf16.xpose.msra.mxu0 %v1517
      %1545 = vmatpush.bf16.xpose.msra.mxu0 %v1514
      %1546 = vmatpush.bf16.xpose.msra.mxu0 %v1511
      %1547 = vmatpush.bf16.xpose.msra.mxu0 %v1508
      %1548 = vmatpush.bf16.xpose.msra.mxu0 %v1505
      %1549 = vmatmul.bf16.gmra.mxu0 %v1478
      %v1550 = vpop.f32.mrf.mxu0
      %v1551 = vadd.f32 0.0, %v1550
      %v1552 = vpop.f32.mrf.mxu0
      %1553 = vdwg.mxu0
      %v1555 = vsel %vm762, %v1410, 0
      %v1558 = vsel %vm762, %v1411, 0
      %v1561 = vsel %vm762, %v1412, 0
      %v1564 = vsel %vm762, %v1413, 0
      %v1567 = vsel %vm762, %v1414, 0
      %v1570 = vsel %vm762, %v1415, 0
      %v1573 = vsel %vm762, %v1416, 0
      %v1576 = vsel %vm762, %v1417, 0
      %v1579 = vsel %vm762, %v1418, 0
      %v1582 = vsel %vm762, %v1419, 0
      %v1585 = vsel %vm762, %v1420, 0
      %v1588 = vsel %vm762, %v1421, 0
      %v1591 = vsel %vm762, %v1422, 0
      %v1594 = vsel %vm762, %v1423, 0
      %v1597 = vsel %vm762, %v1424, 0
      %v1600 = vsel %vm762, %v1425, 0
      %v1603 = vsel %vm762, %v1426, 0
      %1605 = vmatpush.bf16.xpose.msra.mxu0 %v1579
      %1606 = vmatpush.bf16.xpose.msra.mxu0 %v1576
      %1607 = vmatpush.bf16.xpose.msra.mxu0 %v1573
      %1608 = vmatpush.bf16.xpose.msra.mxu0 %v1570
      %1609 = vmatpush.bf16.xpose.msra.mxu0 %v1567
      %1610 = vmatpush.bf16.xpose.msra.mxu0 %v1564
      %1611 = vmatpush.bf16.xpose.msra.mxu0 %v1561
      %1612 = vmatpush.bf16.xpose.msra.mxu0 %v1558
      %1613 = vmatmul.bf16.gmra.mxu0 %v1555
      %v1614 = vpop.f32.mrf.mxu0
      %v1615 = vadd.f32 %v1538, %v1614
      %v1616 = vpop.f32.mrf.mxu0
      %1617 = vdwg.mxu0
      %1618 = vmatpush.bf16.xpose.msra.mxu0 %v1603
      %1619 = vmatpush.bf16.xpose.msra.mxu0 %v1600
      %1620 = vmatpush.bf16.xpose.msra.mxu0 %v1597
      %1621 = vmatpush.bf16.xpose.msra.mxu0 %v1594
      %1622 = vmatpush.bf16.xpose.msra.mxu0 %v1591
      %1623 = vmatpush.bf16.xpose.msra.mxu0 %v1588
      %1624 = vmatpush.bf16.xpose.msra.mxu0 %v1585
      %1625 = vmatpush.bf16.xpose.msra.mxu0 %v1582
      %1626 = vmatmul.bf16.gmra.mxu0 %v1555
      %v1627 = vpop.f32.mrf.mxu0
      %v1628 = vadd.f32 %v1551, %v1627
      %v1629 = vpop.f32.mrf.mxu0
      %1630 = vdwg.mxu0
      %v1631 = vld [vmem:[#allocation2 + $0x9] sm:$0xff]
      %v1632 = vld [vmem:[#allocation2 + $0x11] sm:$0xff]
      %v1633 = vld [vmem:[#allocation2 + $0x19] sm:$0xff]
      %v1634 = vld [vmem:[#allocation2 + $0x21] sm:$0xff]
      %v1635 = vld [vmem:[#allocation2 + $0x29] sm:$0xff]
      %v1636 = vld [vmem:[#allocation2 + $0x31] sm:$0xff]
      %v1637 = vld [vmem:[#allocation2 + $0x39] sm:$0xff]
      %v1638 = vld [vmem:[#allocation2 + $0x41] sm:$0xff]
      %v1639 = vld [vmem:[#allocation2 + $0x49] sm:$0xff]
      %v1640 = vld [vmem:[#allocation2 + $0x51] sm:$0xff]
      %v1641 = vld [vmem:[#allocation2 + $0x59] sm:$0xff]
      %v1642 = vld [vmem:[#allocation2 + $0x61] sm:$0xff]
      %v1643 = vld [vmem:[#allocation2 + $0x69] sm:$0xff]
      %v1644 = vld [vmem:[#allocation2 + $0x71] sm:$0xff]
      %v1645 = vld [vmem:[#allocation2 + $0x79] sm:$0xff]
      %v1646 = vld [vmem:[#allocation2 + $0x81] sm:$0xff]
      %v1647 = vld [vmem:[#allocation2 + $0x89] sm:$0xff]
      %v1648 = vld [vmem:[#allocation2 + $0x91] sm:$0xff]
      %v1649 = vld [vmem:[#allocation2 + $0x99] sm:$0xff]
      %v1650 = vld [vmem:[#allocation2 + $0xa1] sm:$0xff]
      %v1651 = vld [vmem:[#allocation2 + $0xa9] sm:$0xff]
      %v1652 = vld [vmem:[#allocation2 + $0xb1] sm:$0xff]
      %v1653 = vld [vmem:[#allocation2 + $0xb9] sm:$0xff]
      %v1654 = vld [vmem:[#allocation2 + $0xc1] sm:$0xff]
      %v1655 = vld [vmem:[#allocation2 + $0xc9] sm:$0xff]
      %v1656 = vld [vmem:[#allocation2 + $0xd1] sm:$0xff]
      %v1657 = vld [vmem:[#allocation2 + $0xd9] sm:$0xff]
      %v1658 = vld [vmem:[#allocation2 + $0xe1] sm:$0xff]
      %v1659 = vld [vmem:[#allocation2 + $0xe9] sm:$0xff]
      %v1660 = vld [vmem:[#allocation2 + $0xf1] sm:$0xff]
      %v1661 = vld [vmem:[#allocation2 + $0xf9] sm:$0xff]
      %v1662 = vld [vmem:[#allocation2 + $0x101] sm:$0xff]
      %v1663 = vsel %vm1250, 1, 0
      %v1664 = vsel %vm1251, 1, 0
      %v1665 = vsel %vm1252, 1, 0
      %v1666 = vsel %vm1253, 1, 0
      %v1667 = vsel %vm1254, 1, 0
      %v1668 = vsel %vm1255, 1, 0
      %v1669 = vsel %vm1256, 1, 0
      %v1670 = vsel %vm1257, 1, 0
      %v1671 = vsel %vm1258, 1, 0
      %v1672 = vsel %vm1259, 1, 0
      %v1673 = vsel %vm1260, 1, 0
      %v1674 = vsel %vm1261, 1, 0
      %v1675 = vsel %vm1262, 1, 0
      %v1676 = vsel %vm1263, 1, 0
      %v1677 = vsel %vm1264, 1, 0
      %v1678 = vsel %vm1265, 1, 0
      %v1679 = vsel %vm1266, 1, 0
      %v1680 = vsel %vm1267, 1, 0
      %v1681 = vsel %vm1268, 1, 0
      %v1682 = vsel %vm1269, 1, 0
      %v1683 = vsel %vm1270, 1, 0
      %v1684 = vsel %vm1271, 1, 0
      %v1685 = vsel %vm1272, 1, 0
      %v1686 = vsel %vm1273, 1, 0
      %v1687 = vsel %vm1274, 1, 0
      %v1688 = vsel %vm1275, 1, 0
      %v1689 = vsel %vm1276, 1, 0
      %v1690 = vsel %vm1277, 1, 0
      %v1691 = vsel %vm1278, 1, 0
      %v1692 = vsel %vm1279, 1, 0
      %v1693 = vsel %vm1280, 1, 0
      %v1694 = vsel %vm1281, 1, 0
      %vm1695 = vcmp.eq.s32.totalorder %v1663, 1
      %vm1696 = vcmp.eq.s32.totalorder %v1664, 1
      %vm1697 = vcmp.eq.s32.totalorder %v1665, 1
      %vm1698 = vcmp.eq.s32.totalorder %v1666, 1
      %vm1699 = vcmp.eq.s32.totalorder %v1667, 1
      %vm1700 = vcmp.eq.s32.totalorder %v1668, 1
      %vm1701 = vcmp.eq.s32.totalorder %v1669, 1
      %vm1702 = vcmp.eq.s32.totalorder %v1670, 1
      %vm1703 = vcmp.eq.s32.totalorder %v1671, 1
      %vm1704 = vcmp.eq.s32.totalorder %v1672, 1
      %vm1705 = vcmp.eq.s32.totalorder %v1673, 1
      %vm1706 = vcmp.eq.s32.totalorder %v1674, 1
      %vm1707 = vcmp.eq.s32.totalorder %v1675, 1
      %vm1708 = vcmp.eq.s32.totalorder %v1676, 1
      %vm1709 = vcmp.eq.s32.totalorder %v1677, 1
      %vm1710 = vcmp.eq.s32.totalorder %v1678, 1
      %vm1711 = vcmp.eq.s32.totalorder %v1679, 1
      %vm1712 = vcmp.eq.s32.totalorder %v1680, 1
      %vm1713 = vcmp.eq.s32.totalorder %v1681, 1
      %vm1714 = vcmp.eq.s32.totalorder %v1682, 1
      %vm1715 = vcmp.eq.s32.totalorder %v1683, 1
      %vm1716 = vcmp.eq.s32.totalorder %v1684, 1
      %vm1717 = vcmp.eq.s32.totalorder %v1685, 1
      %vm1718 = vcmp.eq.s32.totalorder %v1686, 1
      %vm1719 = vcmp.eq.s32.totalorder %v1687, 1
      %vm1720 = vcmp.eq.s32.totalorder %v1688, 1
      %vm1721 = vcmp.eq.s32.totalorder %v1689, 1
      %vm1722 = vcmp.eq.s32.totalorder %v1690, 1
      %vm1723 = vcmp.eq.s32.totalorder %v1691, 1
      %vm1724 = vcmp.eq.s32.totalorder %v1692, 1
      %vm1725 = vcmp.eq.s32.totalorder %v1693, 1
      %vm1726 = vcmp.eq.s32.totalorder %v1694, 1
      %v1727 = vsel %vm1695, %v1631, 0.0
      %v1728 = vsel %vm1696, %v1632, 0.0
      %v1729 = vsel %vm1697, %v1633, 0.0
      %v1730 = vsel %vm1698, %v1634, 0.0
      %v1731 = vsel %vm1699, %v1635, 0.0
      %v1732 = vsel %vm1700, %v1636, 0.0
      %v1733 = vsel %vm1701, %v1637, 0.0
      %v1734 = vsel %vm1702, %v1638, 0.0
      %v1735 = vsel %vm1703, %v1639, 0.0
      %v1736 = vsel %vm1704, %v1640, 0.0
      %v1737 = vsel %vm1705, %v1641, 0.0
      %v1738 = vsel %vm1706, %v1642, 0.0
      %v1739 = vsel %vm1707, %v1643, 0.0
      %v1740 = vsel %vm1708, %v1644, 0.0
      %v1741 = vsel %vm1709, %v1645, 0.0
      %v1742 = vsel %vm1710, %v1646, 0.0
      %v1743 = vsel %vm1711, %v1647, 0.0
      %v1744 = vsel %vm1712, %v1648, 0.0
      %v1745 = vsel %vm1713, %v1649, 0.0
      %v1746 = vsel %vm1714, %v1650, 0.0
      %v1747 = vsel %vm1715, %v1651, 0.0
      %v1748 = vsel %vm1716, %v1652, 0.0
      %v1749 = vsel %vm1717, %v1653, 0.0
      %v1750 = vsel %vm1718, %v1654, 0.0
      %v1751 = vsel %vm1719, %v1655, 0.0
      %v1752 = vsel %vm1720, %v1656, 0.0
      %v1753 = vsel %vm1721, %v1657, 0.0
      %v1754 = vsel %vm1722, %v1658, 0.0
      %v1755 = vsel %vm1723, %v1659, 0.0
      %v1756 = vsel %vm1724, %v1660, 0.0
      %v1757 = vsel %vm1725, %v1661, 0.0
      %v1758 = vsel %vm1726, %v1662, 0.0
      %s1759 = scalar_lea.vmem %s7, 4
      %v1760 = vld [vmem:[%s1759] sm:$0x3]
      %v1761 = vpack.c.bf16 %v1728, %v1727
      %v1762 = vpack.c.bf16 %v1730, %v1729
      %v1763 = vpack.c.bf16 %v1732, %v1731
      %v1764 = vpack.c.bf16 %v1734, %v1733
      %v1765 = vpack.c.bf16 %v1736, %v1735
      %v1766 = vpack.c.bf16 %v1738, %v1737
      %v1767 = vpack.c.bf16 %v1740, %v1739
      %v1768 = vpack.c.bf16 %v1742, %v1741
      %v1769 = vpack.c.bf16 %v1744, %v1743
      %v1770 = vpack.c.bf16 %v1746, %v1745
      %v1771 = vpack.c.bf16 %v1748, %v1747
      %v1772 = vpack.c.bf16 %v1750, %v1749
      %v1773 = vpack.c.bf16 %v1752, %v1751
      %v1774 = vpack.c.bf16 %v1754, %v1753
      %v1775 = vpack.c.bf16 %v1756, %v1755
      %v1776 = vpack.c.bf16 %v1758, %v1757
      %v1778 = vsel %vm762, %v1760, 0
      %v1781 = vsel %vm762, %v1761, 0
      %v1784 = vsel %vm762, %v1762, 0
      %v1787 = vsel %vm762, %v1763, 0
      %v1790 = vsel %vm762, %v1764, 0
      %v1793 = vsel %vm762, %v1765, 0
      %v1796 = vsel %vm762, %v1766, 0
      %v1799 = vsel %vm762, %v1767, 0
      %v1802 = vsel %vm762, %v1768, 0
      %v1805 = vsel %vm762, %v1769, 0
      %v1808 = vsel %vm762, %v1770, 0
      %v1811 = vsel %vm762, %v1771, 0
      %v1814 = vsel %vm762, %v1772, 0
      %v1817 = vsel %vm762, %v1773, 0
      %v1820 = vsel %vm762, %v1774, 0
      %v1823 = vsel %vm762, %v1775, 0
      %v1826 = vsel %vm762, %v1776, 0
      %1828 = vmatpush.bf16.xpose.msra.mxu0 %v1802
      %1829 = vmatpush.bf16.xpose.msra.mxu0 %v1799
      %1830 = vmatpush.bf16.xpose.msra.mxu0 %v1796
      %1831 = vmatpush.bf16.xpose.msra.mxu0 %v1793
      %1832 = vmatpush.bf16.xpose.msra.mxu0 %v1790
      %1833 = vmatpush.bf16.xpose.msra.mxu0 %v1787
      %1834 = vmatpush.bf16.xpose.msra.mxu0 %v1784
      %1835 = vmatpush.bf16.xpose.msra.mxu0 %v1781
      %1836 = vmatmul.bf16.gmra.mxu0 %v1778
      %v1837 = vpop.f32.mrf.mxu0
      %v1838 = vadd.f32 0.0, %v1837
      %v1839 = vpop.f32.mrf.mxu0
      %1840 = vdwg.mxu0
      %1841 = vmatpush.bf16.xpose.msra.mxu0 %v1826
      %1842 = vmatpush.bf16.xpose.msra.mxu0 %v1823
      %1843 = vmatpush.bf16.xpose.msra.mxu0 %v1820
      %1844 = vmatpush.bf16.xpose.msra.mxu0 %v1817
      %1845 = vmatpush.bf16.xpose.msra.mxu0 %v1814
      %1846 = vmatpush.bf16.xpose.msra.mxu0 %v1811
      %1847 = vmatpush.bf16.xpose.msra.mxu0 %v1808
      %1848 = vmatpush.bf16.xpose.msra.mxu0 %v1805
      %1849 = vmatmul.bf16.gmra.mxu0 %v1778
      %v1850 = vpop.f32.mrf.mxu0
      %v1851 = vadd.f32 0.0, %v1850
      %v1852 = vpop.f32.mrf.mxu0
      %1853 = vdwg.mxu0
      %v1854 = vadd.f32 %v1615, %v1838
      %v1855 = vadd.f32 %v1628, %v1851
      %v1856 = vld [vmem:[#allocation2 + $0x17] sm:$0xff]
      %v1857 = vld [vmem:[#allocation2 + $0x1f] sm:$0xff]
      %v1858 = vld [vmem:[#allocation2 + $0x27] sm:$0xff]
      %v1859 = vld [vmem:[#allocation2 + $0x2f] sm:$0xff]
      %v1860 = vld [vmem:[#allocation2 + $0x37] sm:$0xff]
      %v1861 = vld [vmem:[#allocation2 + $0x3f] sm:$0xff]
      %v1862 = vld [vmem:[#allocation2 + $0x47] sm:$0xff]
      %v1863 = vld [vmem:[#allocation2 + $0x4f] sm:$0xff]
      %v1864 = vld [vmem:[#allocation2 + $0x57] sm:$0xff]
      %v1865 = vld [vmem:[#allocation2 + $0x5f] sm:$0xff]
      %v1866 = vld [vmem:[#allocation2 + $0x67] sm:$0xff]
      %v1867 = vld [vmem:[#allocation2 + $0x6f] sm:$0xff]
      %v1868 = vld [vmem:[#allocation2 + $0x77] sm:$0xff]
      %v1869 = vld [vmem:[#allocation2 + $0x7f] sm:$0xff]
      %v1870 = vld [vmem:[#allocation2 + $0x87] sm:$0xff]
      %v1871 = vld [vmem:[#allocation2 + $0x8f] sm:$0xff]
      %v1872 = vld [vmem:[#allocation2 + $0x97] sm:$0xff]
      %v1873 = vld [vmem:[#allocation2 + $0x9f] sm:$0xff]
      %v1874 = vld [vmem:[#allocation2 + $0xa7] sm:$0xff]
      %v1875 = vld [vmem:[#allocation2 + $0xaf] sm:$0xff]
      %v1876 = vld [vmem:[#allocation2 + $0xb7] sm:$0xff]
      %v1877 = vld [vmem:[#allocation2 + $0xbf] sm:$0xff]
      %v1878 = vld [vmem:[#allocation2 + $0xc7] sm:$0xff]
      %v1879 = vld [vmem:[#allocation2 + $0xcf] sm:$0xff]
      %v1880 = vld [vmem:[#allocation2 + $0xd7] sm:$0xff]
      %v1881 = vld [vmem:[#allocation2 + $0xdf] sm:$0xff]
      %v1882 = vld [vmem:[#allocation2 + $0xe7] sm:$0xff]
      %v1883 = vld [vmem:[#allocation2 + $0xef] sm:$0xff]
      %v1884 = vld [vmem:[#allocation2 + $0xf7] sm:$0xff]
      %v1885 = vld [vmem:[#allocation2 + $0xff] sm:$0xff]
      %v1886 = vld [vmem:[#allocation2 + $0x107] sm:$0xff]
      %v1887 = vld [vmem:[#allocation2 + $0x10f] sm:$0xff]
      %v1888 = vsel %vm1346, %v1856, 0.0
      %v1889 = vsel %vm1347, %v1857, 0.0
      %v1890 = vsel %vm1348, %v1858, 0.0
      %v1891 = vsel %vm1349, %v1859, 0.0
      %v1892 = vsel %vm1350, %v1860, 0.0
      %v1893 = vsel %vm1351, %v1861, 0.0
      %v1894 = vsel %vm1352, %v1862, 0.0
      %v1895 = vsel %vm1353, %v1863, 0.0
      %v1896 = vsel %vm1354, %v1864, 0.0
      %v1897 = vsel %vm1355, %v1865, 0.0
      %v1898 = vsel %vm1356, %v1866, 0.0
      %v1899 = vsel %vm1357, %v1867, 0.0
      %v1900 = vsel %vm1358, %v1868, 0.0
      %v1901 = vsel %vm1359, %v1869, 0.0
      %v1902 = vsel %vm1360, %v1870, 0.0
      %v1903 = vsel %vm1361, %v1871, 0.0
      %v1904 = vsel %vm1362, %v1872, 0.0
      %v1905 = vsel %vm1363, %v1873, 0.0
      %v1906 = vsel %vm1364, %v1874, 0.0
      %v1907 = vsel %vm1365, %v1875, 0.0
      %v1908 = vsel %vm1366, %v1876, 0.0
      %v1909 = vsel %vm1367, %v1877, 0.0
      %v1910 = vsel %vm1368, %v1878, 0.0
      %v1911 = vsel %vm1369, %v1879, 0.0
      %v1912 = vsel %vm1370, %v1880, 0.0
      %v1913 = vsel %vm1371, %v1881, 0.0
      %v1914 = vsel %vm1372, %v1882, 0.0
      %v1915 = vsel %vm1373, %v1883, 0.0
      %v1916 = vsel %vm1374, %v1884, 0.0
      %v1917 = vsel %vm1375, %v1885, 0.0
      %v1918 = vsel %vm1376, %v1886, 0.0
      %v1919 = vsel %vm1377, %v1887, 0.0
      %s1920 = scalar_lea.vmem %s7, 6
      %v1921 = vld [vmem:[%s1920] sm:$0x3]
      %v1922 = vpack.c.bf16 %v1889, %v1888
      %v1923 = vpack.c.bf16 %v1891, %v1890
      %v1924 = vpack.c.bf16 %v1893, %v1892
      %v1925 = vpack.c.bf16 %v1895, %v1894
      %v1926 = vpack.c.bf16 %v1897, %v1896
      %v1927 = vpack.c.bf16 %v1899, %v1898
      %v1928 = vpack.c.bf16 %v1901, %v1900
      %v1929 = vpack.c.bf16 %v1903, %v1902
      %v1930 = vpack.c.bf16 %v1905, %v1904
      %v1931 = vpack.c.bf16 %v1907, %v1906
      %v1932 = vpack.c.bf16 %v1909, %v1908
      %v1933 = vpack.c.bf16 %v1911, %v1910
      %v1934 = vpack.c.bf16 %v1913, %v1912
      %v1935 = vpack.c.bf16 %v1915, %v1914
      %v1936 = vpack.c.bf16 %v1917, %v1916
      %v1937 = vpack.c.bf16 %v1919, %v1918
      %v1939 = vsel %vm762, %v1921, 0
      %v1942 = vsel %vm762, %v1922, 0
      %v1945 = vsel %vm762, %v1923, 0
      %v1948 = vsel %vm762, %v1924, 0
      %v1951 = vsel %vm762, %v1925, 0
      %v1954 = vsel %vm762, %v1926, 0
      %v1957 = vsel %vm762, %v1927, 0
      %v1960 = vsel %vm762, %v1928, 0
      %v1963 = vsel %vm762, %v1929, 0
      %v1966 = vsel %vm762, %v1930, 0
      %v1969 = vsel %vm762, %v1931, 0
      %v1972 = vsel %vm762, %v1932, 0
      %v1975 = vsel %vm762, %v1933, 0
      %v1978 = vsel %vm762, %v1934, 0
      %v1981 = vsel %vm762, %v1935, 0
      %v1984 = vsel %vm762, %v1936, 0
      %v1987 = vsel %vm762, %v1937, 0
      %1989 = vmatpush.bf16.xpose.msra.mxu0 %v1963
      %1990 = vmatpush.bf16.xpose.msra.mxu0 %v1960
      %1991 = vmatpush.bf16.xpose.msra.mxu0 %v1957
      %1992 = vmatpush.bf16.xpose.msra.mxu0 %v1954
      %1993 = vmatpush.bf16.xpose.msra.mxu0 %v1951
      %1994 = vmatpush.bf16.xpose.msra.mxu0 %v1948
      %1995 = vmatpush.bf16.xpose.msra.mxu0 %v1945
      %1996 = vmatpush.bf16.xpose.msra.mxu0 %v1942
      %1997 = vmatmul.bf16.gmra.mxu0 %v1939
      %v1998 = vpop.f32.mrf.mxu0
      %v1999 = vadd.f32 0.0, %v1998
      %v2000 = vpop.f32.mrf.mxu0
      %2001 = vdwg.mxu0
      %2002 = vmatpush.bf16.xpose.msra.mxu0 %v1987
      %2003 = vmatpush.bf16.xpose.msra.mxu0 %v1984
      %2004 = vmatpush.bf16.xpose.msra.mxu0 %v1981
      %2005 = vmatpush.bf16.xpose.msra.mxu0 %v1978
      %2006 = vmatpush.bf16.xpose.msra.mxu0 %v1975
      %2007 = vmatpush.bf16.xpose.msra.mxu0 %v1972
      %2008 = vmatpush.bf16.xpose.msra.mxu0 %v1969
      %2009 = vmatpush.bf16.xpose.msra.mxu0 %v1966
      %2010 = vmatmul.bf16.gmra.mxu0 %v1939
      %v2011 = vpop.f32.mrf.mxu0
      %v2012 = vadd.f32 0.0, %v2011
      %v2013 = vpop.f32.mrf.mxu0
      %2014 = vdwg.mxu0
      %v2015 = vadd.f32 %v1854, %v1999
      %v2016 = vadd.f32 %v1855, %v2012
      %v2017 = vld [vmem:[#allocation2 + $0x18] sm:$0xff]
      %v2018 = vld [vmem:[#allocation2 + $0x20] sm:$0xff]
      %v2019 = vld [vmem:[#allocation2 + $0x28] sm:$0xff]
      %v2020 = vld [vmem:[#allocation2 + $0x30] sm:$0xff]
      %v2021 = vld [vmem:[#allocation2 + $0x38] sm:$0xff]
      %v2022 = vld [vmem:[#allocation2 + $0x40] sm:$0xff]
      %v2023 = vld [vmem:[#allocation2 + $0x48] sm:$0xff]
      %v2024 = vld [vmem:[#allocation2 + $0x50] sm:$0xff]
      %v2025 = vld [vmem:[#allocation2 + $0x58] sm:$0xff]
      %v2026 = vld [vmem:[#allocation2 + $0x60] sm:$0xff]
      %v2027 = vld [vmem:[#allocation2 + $0x68] sm:$0xff]
      %v2028 = vld [vmem:[#allocation2 + $0x70] sm:$0xff]
      %v2029 = vld [vmem:[#allocation2 + $0x78] sm:$0xff]
      %v2030 = vld [vmem:[#allocation2 + $0x80] sm:$0xff]
      %v2031 = vld [vmem:[#allocation2 + $0x88] sm:$0xff]
      %v2032 = vld [vmem:[#allocation2 + $0x90] sm:$0xff]
      %v2033 = vld [vmem:[#allocation2 + $0x98] sm:$0xff]
      %v2034 = vld [vmem:[#allocation2 + $0xa0] sm:$0xff]
      %v2035 = vld [vmem:[#allocation2 + $0xa8] sm:$0xff]
      %v2036 = vld [vmem:[#allocation2 + $0xb0] sm:$0xff]
      %v2037 = vld [vmem:[#allocation2 + $0xb8] sm:$0xff]
      %v2038 = vld [vmem:[#allocation2 + $0xc0] sm:$0xff]
      %v2039 = vld [vmem:[#allocation2 + $0xc8] sm:$0xff]
      %v2040 = vld [vmem:[#allocation2 + $0xd0] sm:$0xff]
      %v2041 = vld [vmem:[#allocation2 + $0xd8] sm:$0xff]
      %v2042 = vld [vmem:[#allocation2 + $0xe0] sm:$0xff]
      %v2043 = vld [vmem:[#allocation2 + $0xe8] sm:$0xff]
      %v2044 = vld [vmem:[#allocation2 + $0xf0] sm:$0xff]
      %v2045 = vld [vmem:[#allocation2 + $0xf8] sm:$0xff]
      %v2046 = vld [vmem:[#allocation2 + $0x100] sm:$0xff]
      %v2047 = vld [vmem:[#allocation2 + $0x108] sm:$0xff]
      %v2048 = vld [vmem:[#allocation2 + $0x110] sm:$0xff]
      %s2049 = scalar_lea.vmem %s7, 8
      %v2050 = vld [vmem:[%s2049] sm:$0x3]
      %v2051 = vpack.c.bf16 %v2018, %v2017
      %v2052 = vpack.c.bf16 %v2020, %v2019
      %v2053 = vpack.c.bf16 %v2022, %v2021
      %v2054 = vpack.c.bf16 %v2024, %v2023
      %v2055 = vpack.c.bf16 %v2026, %v2025
      %v2056 = vpack.c.bf16 %v2028, %v2027
      %v2057 = vpack.c.bf16 %v2030, %v2029
      %v2058 = vpack.c.bf16 %v2032, %v2031
      %v2059 = vpack.c.bf16 %v2034, %v2033
      %v2060 = vpack.c.bf16 %v2036, %v2035
      %v2061 = vpack.c.bf16 %v2038, %v2037
      %v2062 = vpack.c.bf16 %v2040, %v2039
      %v2063 = vpack.c.bf16 %v2042, %v2041
      %v2064 = vpack.c.bf16 %v2044, %v2043
      %v2065 = vpack.c.bf16 %v2046, %v2045
      %v2066 = vpack.c.bf16 %v2048, %v2047
      %v2068 = vsel %vm762, %v2050, 0
      %v2071 = vsel %vm762, %v2051, 0
      %v2074 = vsel %vm762, %v2052, 0
      %v2077 = vsel %vm762, %v2053, 0
      %v2080 = vsel %vm762, %v2054, 0
      %v2083 = vsel %vm762, %v2055, 0
      %v2086 = vsel %vm762, %v2056, 0
      %v2089 = vsel %vm762, %v2057, 0
      %v2092 = vsel %vm762, %v2058, 0
      %v2095 = vsel %vm762, %v2059, 0
      %v2098 = vsel %vm762, %v2060, 0
      %v2101 = vsel %vm762, %v2061, 0
      %v2104 = vsel %vm762, %v2062, 0
      %v2107 = vsel %vm762, %v2063, 0
      %v2110 = vsel %vm762, %v2064, 0
      %v2113 = vsel %vm762, %v2065, 0
      %v2116 = vsel %vm762, %v2066, 0
      %2118 = vmatpush.bf16.xpose.msra.mxu0 %v2092
      %2119 = vmatpush.bf16.xpose.msra.mxu0 %v2089
      %2120 = vmatpush.bf16.xpose.msra.mxu0 %v2086
      %2121 = vmatpush.bf16.xpose.msra.mxu0 %v2083
      %2122 = vmatpush.bf16.xpose.msra.mxu0 %v2080
      %2123 = vmatpush.bf16.xpose.msra.mxu0 %v2077
      %2124 = vmatpush.bf16.xpose.msra.mxu0 %v2074
      %2125 = vmatpush.bf16.xpose.msra.mxu0 %v2071
      %2126 = vmatmul.bf16.gmra.mxu0 %v2068
      %v2127 = vpop.f32.mrf.mxu0
      %v2128 = vadd.f32 0.0, %v2127
      %v2129 = vpop.f32.mrf.mxu0
      %2130 = vdwg.mxu0
      %2131 = vmatpush.bf16.xpose.msra.mxu0 %v2116
      %2132 = vmatpush.bf16.xpose.msra.mxu0 %v2113
      %2133 = vmatpush.bf16.xpose.msra.mxu0 %v2110
      %2134 = vmatpush.bf16.xpose.msra.mxu0 %v2107
      %2135 = vmatpush.bf16.xpose.msra.mxu0 %v2104
      %2136 = vmatpush.bf16.xpose.msra.mxu0 %v2101
      %2137 = vmatpush.bf16.xpose.msra.mxu0 %v2098
      %2138 = vmatpush.bf16.xpose.msra.mxu0 %v2095
      %2139 = vmatmul.bf16.gmra.mxu0 %v2068
      %v2140 = vpop.f32.mrf.mxu0
      %v2141 = vadd.f32 0.0, %v2140
      %v2142 = vpop.f32.mrf.mxu0
      %2143 = vdwg.mxu0
      %v2144 = vadd.f32 %v2015, %v2128
      %v2145 = vadd.f32 %v2016, %v2141
      %v2146 = vld [vmem:[#allocation2 + $0x19] sm:$0xff]
      %v2147 = vld [vmem:[#allocation2 + $0x21] sm:$0xff]
      %v2148 = vld [vmem:[#allocation2 + $0x29] sm:$0xff]
      %v2149 = vld [vmem:[#allocation2 + $0x31] sm:$0xff]
      %v2150 = vld [vmem:[#allocation2 + $0x39] sm:$0xff]
      %v2151 = vld [vmem:[#allocation2 + $0x41] sm:$0xff]
      %v2152 = vld [vmem:[#allocation2 + $0x49] sm:$0xff]
      %v2153 = vld [vmem:[#allocation2 + $0x51] sm:$0xff]
      %v2154 = vld [vmem:[#allocation2 + $0x59] sm:$0xff]
      %v2155 = vld [vmem:[#allocation2 + $0x61] sm:$0xff]
      %v2156 = vld [vmem:[#allocation2 + $0x69] sm:$0xff]
      %v2157 = vld [vmem:[#allocation2 + $0x71] sm:$0xff]
      %v2158 = vld [vmem:[#allocation2 + $0x79] sm:$0xff]
      %v2159 = vld [vmem:[#allocation2 + $0x81] sm:$0xff]
      %v2160 = vld [vmem:[#allocation2 + $0x89] sm:$0xff]
      %v2161 = vld [vmem:[#allocation2 + $0x91] sm:$0xff]
      %v2162 = vld [vmem:[#allocation2 + $0x99] sm:$0xff]
      %v2163 = vld [vmem:[#allocation2 + $0xa1] sm:$0xff]
      %v2164 = vld [vmem:[#allocation2 + $0xa9] sm:$0xff]
      %v2165 = vld [vmem:[#allocation2 + $0xb1] sm:$0xff]
      %v2166 = vld [vmem:[#allocation2 + $0xb9] sm:$0xff]
      %v2167 = vld [vmem:[#allocation2 + $0xc1] sm:$0xff]
      %v2168 = vld [vmem:[#allocation2 + $0xc9] sm:$0xff]
      %v2169 = vld [vmem:[#allocation2 + $0xd1] sm:$0xff]
      %v2170 = vld [vmem:[#allocation2 + $0xd9] sm:$0xff]
      %v2171 = vld [vmem:[#allocation2 + $0xe1] sm:$0xff]
      %v2172 = vld [vmem:[#allocation2 + $0xe9] sm:$0xff]
      %v2173 = vld [vmem:[#allocation2 + $0xf1] sm:$0xff]
      %v2174 = vld [vmem:[#allocation2 + $0xf9] sm:$0xff]
      %v2175 = vld [vmem:[#allocation2 + $0x101] sm:$0xff]
      %v2176 = vld [vmem:[#allocation2 + $0x109] sm:$0xff]
      %v2177 = vld [vmem:[#allocation2 + $0x111] sm:$0xff]
      %v2178 = vsel %vm1695, %v2146, 0.0
      %v2179 = vsel %vm1696, %v2147, 0.0
      %v2180 = vsel %vm1697, %v2148, 0.0
      %v2181 = vsel %vm1698, %v2149, 0.0
      %v2182 = vsel %vm1699, %v2150, 0.0
      %v2183 = vsel %vm1700, %v2151, 0.0
      %v2184 = vsel %vm1701, %v2152, 0.0
      %v2185 = vsel %vm1702, %v2153, 0.0
      %v2186 = vsel %vm1703, %v2154, 0.0
      %v2187 = vsel %vm1704, %v2155, 0.0
      %v2188 = vsel %vm1705, %v2156, 0.0
      %v2189 = vsel %vm1706, %v2157, 0.0
      %v2190 = vsel %vm1707, %v2158, 0.0
      %v2191 = vsel %vm1708, %v2159, 0.0
      %v2192 = vsel %vm1709, %v2160, 0.0
      %v2193 = vsel %vm1710, %v2161, 0.0
      %v2194 = vsel %vm1711, %v2162, 0.0
      %v2195 = vsel %vm1712, %v2163, 0.0
      %v2196 = vsel %vm1713, %v2164, 0.0
      %v2197 = vsel %vm1714, %v2165, 0.0
      %v2198 = vsel %vm1715, %v2166, 0.0
      %v2199 = vsel %vm1716, %v2167, 0.0
      %v2200 = vsel %vm1717, %v2168, 0.0
      %v2201 = vsel %vm1718, %v2169, 0.0
      %v2202 = vsel %vm1719, %v2170, 0.0
      %v2203 = vsel %vm1720, %v2171, 0.0
      %v2204 = vsel %vm1721, %v2172, 0.0
      %v2205 = vsel %vm1722, %v2173, 0.0
      %v2206 = vsel %vm1723, %v2174, 0.0
      %v2207 = vsel %vm1724, %v2175, 0.0
      %v2208 = vsel %vm1725, %v2176, 0.0
      %v2209 = vsel %vm1726, %v2177, 0.0
      %s2210 = scalar_lea.vmem %s7, 10
      %v2211 = vld [vmem:[%s2210] sm:$0x3]
      %v2212 = vpack.c.bf16 %v2179, %v2178
      %v2213 = vpack.c.bf16 %v2181, %v2180
      %v2214 = vpack.c.bf16 %v2183, %v2182
      %v2215 = vpack.c.bf16 %v2185, %v2184
      %v2216 = vpack.c.bf16 %v2187, %v2186
      %v2217 = vpack.c.bf16 %v2189, %v2188
      %v2218 = vpack.c.bf16 %v2191, %v2190
      %v2219 = vpack.c.bf16 %v2193, %v2192
      %v2220 = vpack.c.bf16 %v2195, %v2194
      %v2221 = vpack.c.bf16 %v2197, %v2196
      %v2222 = vpack.c.bf16 %v2199, %v2198
      %v2223 = vpack.c.bf16 %v2201, %v2200
      %v2224 = vpack.c.bf16 %v2203, %v2202
      %v2225 = vpack.c.bf16 %v2205, %v2204
      %v2226 = vpack.c.bf16 %v2207, %v2206
      %v2227 = vpack.c.bf16 %v2209, %v2208
      %v2229 = vsel %vm762, %v2211, 0
      %v2232 = vsel %vm762, %v2212, 0
      %v2235 = vsel %vm762, %v2213, 0
      %v2238 = vsel %vm762, %v2214, 0
      %v2241 = vsel %vm762, %v2215, 0
      %v2244 = vsel %vm762, %v2216, 0
      %v2247 = vsel %vm762, %v2217, 0
      %v2250 = vsel %vm762, %v2218, 0
      %v2253 = vsel %vm762, %v2219, 0
      %v2256 = vsel %vm762, %v2220, 0
      %v2259 = vsel %vm762, %v2221, 0
      %v2262 = vsel %vm762, %v2222, 0
      %v2265 = vsel %vm762, %v2223, 0
      %v2268 = vsel %vm762, %v2224, 0
      %v2271 = vsel %vm762, %v2225, 0
      %v2274 = vsel %vm762, %v2226, 0
      %v2277 = vsel %vm762, %v2227, 0
      %2279 = vmatpush.bf16.xpose.msra.mxu0 %v2253
      %2280 = vmatpush.bf16.xpose.msra.mxu0 %v2250
      %2281 = vmatpush.bf16.xpose.msra.mxu0 %v2247
      %2282 = vmatpush.bf16.xpose.msra.mxu0 %v2244
      %2283 = vmatpush.bf16.xpose.msra.mxu0 %v2241
      %2284 = vmatpush.bf16.xpose.msra.mxu0 %v2238
      %2285 = vmatpush.bf16.xpose.msra.mxu0 %v2235
      %2286 = vmatpush.bf16.xpose.msra.mxu0 %v2232
      %2287 = vmatmul.bf16.gmra.mxu0 %v2229
      %v2288 = vpop.f32.mrf.mxu0
      %v2289 = vadd.f32 0.0, %v2288
      %v2290 = vpop.f32.mrf.mxu0
      %2291 = vdwg.mxu0
      %2292 = vmatpush.bf16.xpose.msra.mxu0 %v2277
      %2293 = vmatpush.bf16.xpose.msra.mxu0 %v2274
      %2294 = vmatpush.bf16.xpose.msra.mxu0 %v2271
      %2295 = vmatpush.bf16.xpose.msra.mxu0 %v2268
      %2296 = vmatpush.bf16.xpose.msra.mxu0 %v2265
      %2297 = vmatpush.bf16.xpose.msra.mxu0 %v2262
      %2298 = vmatpush.bf16.xpose.msra.mxu0 %v2259
      %2299 = vmatpush.bf16.xpose.msra.mxu0 %v2256
      %2300 = vmatmul.bf16.gmra.mxu0 %v2229
      %v2301 = vpop.f32.mrf.mxu0
      %v2302 = vadd.f32 0.0, %v2301
      %v2303 = vpop.f32.mrf.mxu0
      %2304 = vdwg.mxu0
      %v2305 = vadd.f32 %v2144, %v2289
      %v2306 = vadd.f32 %v2145, %v2302
      %v2307 = vld [vmem:[#allocation2 + $0x27] sm:$0xff]
      %v2308 = vld [vmem:[#allocation2 + $0x2f] sm:$0xff]
      %v2309 = vld [vmem:[#allocation2 + $0x37] sm:$0xff]
      %v2310 = vld [vmem:[#allocation2 + $0x3f] sm:$0xff]
      %v2311 = vld [vmem:[#allocation2 + $0x47] sm:$0xff]
      %v2312 = vld [vmem:[#allocation2 + $0x4f] sm:$0xff]
      %v2313 = vld [vmem:[#allocation2 + $0x57] sm:$0xff]
      %v2314 = vld [vmem:[#allocation2 + $0x5f] sm:$0xff]
      %v2315 = vld [vmem:[#allocation2 + $0x67] sm:$0xff]
      %v2316 = vld [vmem:[#allocation2 + $0x6f] sm:$0xff]
      %v2317 = vld [vmem:[#allocation2 + $0x77] sm:$0xff]
      %v2318 = vld [vmem:[#allocation2 + $0x7f] sm:$0xff]
      %v2319 = vld [vmem:[#allocation2 + $0x87] sm:$0xff]
      %v2320 = vld [vmem:[#allocation2 + $0x8f] sm:$0xff]
      %v2321 = vld [vmem:[#allocation2 + $0x97] sm:$0xff]
      %v2322 = vld [vmem:[#allocation2 + $0x9f] sm:$0xff]
      %v2323 = vld [vmem:[#allocation2 + $0xa7] sm:$0xff]
      %v2324 = vld [vmem:[#allocation2 + $0xaf] sm:$0xff]
      %v2325 = vld [vmem:[#allocation2 + $0xb7] sm:$0xff]
      %v2326 = vld [vmem:[#allocation2 + $0xbf] sm:$0xff]
      %v2327 = vld [vmem:[#allocation2 + $0xc7] sm:$0xff]
      %v2328 = vld [vmem:[#allocation2 + $0xcf] sm:$0xff]
      %v2329 = vld [vmem:[#allocation2 + $0xd7] sm:$0xff]
      %v2330 = vld [vmem:[#allocation2 + $0xdf] sm:$0xff]
      %v2331 = vld [vmem:[#allocation2 + $0xe7] sm:$0xff]
      %v2332 = vld [vmem:[#allocation2 + $0xef] sm:$0xff]
      %v2333 = vld [vmem:[#allocation2 + $0xf7] sm:$0xff]
      %v2334 = vld [vmem:[#allocation2 + $0xff] sm:$0xff]
      %v2335 = vld [vmem:[#allocation2 + $0x107] sm:$0xff]
      %v2336 = vld [vmem:[#allocation2 + $0x10f] sm:$0xff]
      %v2337 = vld [vmem:[#allocation2 + $0x117] sm:$0xff]
      %v2338 = vld [vmem:[#allocation2 + $0x11f] sm:$0xff]
      %v2339 = vsel %vm1346, %v2307, 0.0
      %v2340 = vsel %vm1347, %v2308, 0.0
      %v2341 = vsel %vm1348, %v2309, 0.0
      %v2342 = vsel %vm1349, %v2310, 0.0
      %v2343 = vsel %vm1350, %v2311, 0.0
      %v2344 = vsel %vm1351, %v2312, 0.0
      %v2345 = vsel %vm1352, %v2313, 0.0
      %v2346 = vsel %vm1353, %v2314, 0.0
      %v2347 = vsel %vm1354, %v2315, 0.0
      %v2348 = vsel %vm1355, %v2316, 0.0
      %v2349 = vsel %vm1356, %v2317, 0.0
      %v2350 = vsel %vm1357, %v2318, 0.0
      %v2351 = vsel %vm1358, %v2319, 0.0
      %v2352 = vsel %vm1359, %v2320, 0.0
      %v2353 = vsel %vm1360, %v2321, 0.0
      %v2354 = vsel %vm1361, %v2322, 0.0
      %v2355 = vsel %vm1362, %v2323, 0.0
      %v2356 = vsel %vm1363, %v2324, 0.0
      %v2357 = vsel %vm1364, %v2325, 0.0
      %v2358 = vsel %vm1365, %v2326, 0.0
      %v2359 = vsel %vm1366, %v2327, 0.0
      %v2360 = vsel %vm1367, %v2328, 0.0
      %v2361 = vsel %vm1368, %v2329, 0.0
      %v2362 = vsel %vm1369, %v2330, 0.0
      %v2363 = vsel %vm1370, %v2331, 0.0
      %v2364 = vsel %vm1371, %v2332, 0.0
      %v2365 = vsel %vm1372, %v2333, 0.0
      %v2366 = vsel %vm1373, %v2334, 0.0
      %v2367 = vsel %vm1374, %v2335, 0.0
      %v2368 = vsel %vm1375, %v2336, 0.0
      %v2369 = vsel %vm1376, %v2337, 0.0
      %v2370 = vsel %vm1377, %v2338, 0.0
      %s2371 = scalar_lea.vmem %s7, 12
      %v2372 = vld [vmem:[%s2371] sm:$0x3]
      %v2373 = vpack.c.bf16 %v2340, %v2339
      %v2374 = vpack.c.bf16 %v2342, %v2341
      %v2375 = vpack.c.bf16 %v2344, %v2343
      %v2376 = vpack.c.bf16 %v2346, %v2345
      %v2377 = vpack.c.bf16 %v2348, %v2347
      %v2378 = vpack.c.bf16 %v2350, %v2349
      %v2379 = vpack.c.bf16 %v2352, %v2351
      %v2380 = vpack.c.bf16 %v2354, %v2353
      %v2381 = vpack.c.bf16 %v2356, %v2355
      %v2382 = vpack.c.bf16 %v2358, %v2357
      %v2383 = vpack.c.bf16 %v2360, %v2359
      %v2384 = vpack.c.bf16 %v2362, %v2361
      %v2385 = vpack.c.bf16 %v2364, %v2363
      %v2386 = vpack.c.bf16 %v2366, %v2365
      %v2387 = vpack.c.bf16 %v2368, %v2367
      %v2388 = vpack.c.bf16 %v2370, %v2369
      %v2390 = vsel %vm762, %v2372, 0
      %v2393 = vsel %vm762, %v2373, 0
      %v2396 = vsel %vm762, %v2374, 0
      %v2399 = vsel %vm762, %v2375, 0
      %v2402 = vsel %vm762, %v2376, 0
      %v2405 = vsel %vm762, %v2377, 0
      %v2408 = vsel %vm762, %v2378, 0
      %v2411 = vsel %vm762, %v2379, 0
      %v2414 = vsel %vm762, %v2380, 0
      %v2417 = vsel %vm762, %v2381, 0
      %v2420 = vsel %vm762, %v2382, 0
      %v2423 = vsel %vm762, %v2383, 0
      %v2426 = vsel %vm762, %v2384, 0
      %v2429 = vsel %vm762, %v2385, 0
      %v2432 = vsel %vm762, %v2386, 0
      %v2435 = vsel %vm762, %v2387, 0
      %v2438 = vsel %vm762, %v2388, 0
      %2440 = vmatpush.bf16.xpose.msra.mxu0 %v2414
      %2441 = vmatpush.bf16.xpose.msra.mxu0 %v2411
      %2442 = vmatpush.bf16.xpose.msra.mxu0 %v2408
      %2443 = vmatpush.bf16.xpose.msra.mxu0 %v2405
      %2444 = vmatpush.bf16.xpose.msra.mxu0 %v2402
      %2445 = vmatpush.bf16.xpose.msra.mxu0 %v2399
      %2446 = vmatpush.bf16.xpose.msra.mxu0 %v2396
      %2447 = vmatpush.bf16.xpose.msra.mxu0 %v2393
      %2448 = vmatmul.bf16.gmra.mxu0 %v2390
      %v2449 = vpop.f32.mrf.mxu0
      %v2450 = vadd.f32 0.0, %v2449
      %v2451 = vpop.f32.mrf.mxu0
      %2452 = vdwg.mxu0
      %2453 = vmatpush.bf16.xpose.msra.mxu0 %v2438
      %2454 = vmatpush.bf16.xpose.msra.mxu0 %v2435
      %2455 = vmatpush.bf16.xpose.msra.mxu0 %v2432
      %2456 = vmatpush.bf16.xpose.msra.mxu0 %v2429
      %2457 = vmatpush.bf16.xpose.msra.mxu0 %v2426
      %2458 = vmatpush.bf16.xpose.msra.mxu0 %v2423
      %2459 = vmatpush.bf16.xpose.msra.mxu0 %v2420
      %2460 = vmatpush.bf16.xpose.msra.mxu0 %v2417
      %2461 = vmatmul.bf16.gmra.mxu0 %v2390
      %v2462 = vpop.f32.mrf.mxu0
      %v2463 = vadd.f32 0.0, %v2462
      %v2464 = vpop.f32.mrf.mxu0
      %2465 = vdwg.mxu0
      %v2466 = vadd.f32 %v2305, %v2450
      %v2467 = vadd.f32 %v2306, %v2463
      %v2468 = vld [vmem:[#allocation2 + $0x28] sm:$0xff]
      %v2469 = vld [vmem:[#allocation2 + $0x30] sm:$0xff]
      %v2470 = vld [vmem:[#allocation2 + $0x38] sm:$0xff]
      %v2471 = vld [vmem:[#allocation2 + $0x40] sm:$0xff]
      %v2472 = vld [vmem:[#allocation2 + $0x48] sm:$0xff]
      %v2473 = vld [vmem:[#allocation2 + $0x50] sm:$0xff]
      %v2474 = vld [vmem:[#allocation2 + $0x58] sm:$0xff]
      %v2475 = vld [vmem:[#allocation2 + $0x60] sm:$0xff]
      %v2476 = vld [vmem:[#allocation2 + $0x68] sm:$0xff]
      %v2477 = vld [vmem:[#allocation2 + $0x70] sm:$0xff]
      %v2478 = vld [vmem:[#allocation2 + $0x78] sm:$0xff]
      %v2479 = vld [vmem:[#allocation2 + $0x80] sm:$0xff]
      %v2480 = vld [vmem:[#allocation2 + $0x88] sm:$0xff]
      %v2481 = vld [vmem:[#allocation2 + $0x90] sm:$0xff]
      %v2482 = vld [vmem:[#allocation2 + $0x98] sm:$0xff]
      %v2483 = vld [vmem:[#allocation2 + $0xa0] sm:$0xff]
      %v2484 = vld [vmem:[#allocation2 + $0xa8] sm:$0xff]
      %v2485 = vld [vmem:[#allocation2 + $0xb0] sm:$0xff]
      %v2486 = vld [vmem:[#allocation2 + $0xb8] sm:$0xff]
      %v2487 = vld [vmem:[#allocation2 + $0xc0] sm:$0xff]
      %v2488 = vld [vmem:[#allocation2 + $0xc8] sm:$0xff]
      %v2489 = vld [vmem:[#allocation2 + $0xd0] sm:$0xff]
      %v2490 = vld [vmem:[#allocation2 + $0xd8] sm:$0xff]
      %v2491 = vld [vmem:[#allocation2 + $0xe0] sm:$0xff]
      %v2492 = vld [vmem:[#allocation2 + $0xe8] sm:$0xff]
      %v2493 = vld [vmem:[#allocation2 + $0xf0] sm:$0xff]
      %v2494 = vld [vmem:[#allocation2 + $0xf8] sm:$0xff]
      %v2495 = vld [vmem:[#allocation2 + $0x100] sm:$0xff]
      %v2496 = vld [vmem:[#allocation2 + $0x108] sm:$0xff]
      %v2497 = vld [vmem:[#allocation2 + $0x110] sm:$0xff]
      %v2498 = vld [vmem:[#allocation2 + $0x118] sm:$0xff]
      %v2499 = vld [vmem:[#allocation2 + $0x120] sm:$0xff]
      %s2500 = scalar_lea.vmem %s7, 14
      %v2501 = vld [vmem:[%s2500] sm:$0x3]
      %v2502 = vpack.c.bf16 %v2469, %v2468
      %v2503 = vpack.c.bf16 %v2471, %v2470
      %v2504 = vpack.c.bf16 %v2473, %v2472
      %v2505 = vpack.c.bf16 %v2475, %v2474
      %v2506 = vpack.c.bf16 %v2477, %v2476
      %v2507 = vpack.c.bf16 %v2479, %v2478
      %v2508 = vpack.c.bf16 %v2481, %v2480
      %v2509 = vpack.c.bf16 %v2483, %v2482
      %v2510 = vpack.c.bf16 %v2485, %v2484
      %v2511 = vpack.c.bf16 %v2487, %v2486
      %v2512 = vpack.c.bf16 %v2489, %v2488
      %v2513 = vpack.c.bf16 %v2491, %v2490
      %v2514 = vpack.c.bf16 %v2493, %v2492
      %v2515 = vpack.c.bf16 %v2495, %v2494
      %v2516 = vpack.c.bf16 %v2497, %v2496
      %v2517 = vpack.c.bf16 %v2499, %v2498
      %v2519 = vsel %vm762, %v2501, 0
      %v2522 = vsel %vm762, %v2502, 0
      %v2525 = vsel %vm762, %v2503, 0
      %v2528 = vsel %vm762, %v2504, 0
      %v2531 = vsel %vm762, %v2505, 0
      %v2534 = vsel %vm762, %v2506, 0
      %v2537 = vsel %vm762, %v2507, 0
      %v2540 = vsel %vm762, %v2508, 0
      %v2543 = vsel %vm762, %v2509, 0
      %v2546 = vsel %vm762, %v2510, 0
      %v2549 = vsel %vm762, %v2511, 0
      %v2552 = vsel %vm762, %v2512, 0
      %v2555 = vsel %vm762, %v2513, 0
      %v2558 = vsel %vm762, %v2514, 0
      %v2561 = vsel %vm762, %v2515, 0
      %v2564 = vsel %vm762, %v2516, 0
      %v2567 = vsel %vm762, %v2517, 0
      %2569 = vmatpush.bf16.xpose.msra.mxu0 %v2543
      %2570 = vmatpush.bf16.xpose.msra.mxu0 %v2540
      %2571 = vmatpush.bf16.xpose.msra.mxu0 %v2537
      %2572 = vmatpush.bf16.xpose.msra.mxu0 %v2534
      %2573 = vmatpush.bf16.xpose.msra.mxu0 %v2531
      %2574 = vmatpush.bf16.xpose.msra.mxu0 %v2528
      %2575 = vmatpush.bf16.xpose.msra.mxu0 %v2525
      %2576 = vmatpush.bf16.xpose.msra.mxu0 %v2522
      %2577 = vmatmul.bf16.gmra.mxu0 %v2519
      %v2578 = vpop.f32.mrf.mxu0
      %v2579 = vadd.f32 0.0, %v2578
      %v2580 = vpop.f32.mrf.mxu0
      %2581 = vdwg.mxu0
      %2582 = vmatpush.bf16.xpose.msra.mxu0 %v2567
      %2583 = vmatpush.bf16.xpose.msra.mxu0 %v2564
      %2584 = vmatpush.bf16.xpose.msra.mxu0 %v2561
      %2585 = vmatpush.bf16.xpose.msra.mxu0 %v2558
      %2586 = vmatpush.bf16.xpose.msra.mxu0 %v2555
      %2587 = vmatpush.bf16.xpose.msra.mxu0 %v2552
      %2588 = vmatpush.bf16.xpose.msra.mxu0 %v2549
      %2589 = vmatpush.bf16.xpose.msra.mxu0 %v2546
      %2590 = vmatmul.bf16.gmra.mxu0 %v2519
      %v2591 = vpop.f32.mrf.mxu0
      %v2592 = vadd.f32 0.0, %v2591
      %v2593 = vpop.f32.mrf.mxu0
      %2594 = vdwg.mxu0
      %v2595 = vadd.f32 %v2466, %v2579
      %v2596 = vadd.f32 %v2467, %v2592
      %v2597 = vld [vmem:[#allocation2 + $0x29] sm:$0xff]
      %v2598 = vld [vmem:[#allocation2 + $0x31] sm:$0xff]
      %v2599 = vld [vmem:[#allocation2 + $0x39] sm:$0xff]
      %v2600 = vld [vmem:[#allocation2 + $0x41] sm:$0xff]
      %v2601 = vld [vmem:[#allocation2 + $0x49] sm:$0xff]
      %v2602 = vld [vmem:[#allocation2 + $0x51] sm:$0xff]
      %v2603 = vld [vmem:[#allocation2 + $0x59] sm:$0xff]
      %v2604 = vld [vmem:[#allocation2 + $0x61] sm:$0xff]
      %v2605 = vld [vmem:[#allocation2 + $0x69] sm:$0xff]
      %v2606 = vld [vmem:[#allocation2 + $0x71] sm:$0xff]
      %v2607 = vld [vmem:[#allocation2 + $0x79] sm:$0xff]
      %v2608 = vld [vmem:[#allocation2 + $0x81] sm:$0xff]
      %v2609 = vld [vmem:[#allocation2 + $0x89] sm:$0xff]
      %v2610 = vld [vmem:[#allocation2 + $0x91] sm:$0xff]
      %v2611 = vld [vmem:[#allocation2 + $0x99] sm:$0xff]
      %v2612 = vld [vmem:[#allocation2 + $0xa1] sm:$0xff]
      %v2613 = vld [vmem:[#allocation2 + $0xa9] sm:$0xff]
      %v2614 = vld [vmem:[#allocation2 + $0xb1] sm:$0xff]
      %v2615 = vld [vmem:[#allocation2 + $0xb9] sm:$0xff]
      %v2616 = vld [vmem:[#allocation2 + $0xc1] sm:$0xff]
      %v2617 = vld [vmem:[#allocation2 + $0xc9] sm:$0xff]
      %v2618 = vld [vmem:[#allocation2 + $0xd1] sm:$0xff]
      %v2619 = vld [vmem:[#allocation2 + $0xd9] sm:$0xff]
      %v2620 = vld [vmem:[#allocation2 + $0xe1] sm:$0xff]
      %v2621 = vld [vmem:[#allocation2 + $0xe9] sm:$0xff]
      %v2622 = vld [vmem:[#allocation2 + $0xf1] sm:$0xff]
      %v2623 = vld [vmem:[#allocation2 + $0xf9] sm:$0xff]
      %v2624 = vld [vmem:[#allocation2 + $0x101] sm:$0xff]
      %v2625 = vld [vmem:[#allocation2 + $0x109] sm:$0xff]
      %v2626 = vld [vmem:[#allocation2 + $0x111] sm:$0xff]
      %v2627 = vld [vmem:[#allocation2 + $0x119] sm:$0xff]
      %v2628 = vld [vmem:[#allocation2 + $0x121] sm:$0xff]
      %v2629 = vsel %vm1695, %v2597, 0.0
      %v2630 = vsel %vm1696, %v2598, 0.0
      %v2631 = vsel %vm1697, %v2599, 0.0
      %v2632 = vsel %vm1698, %v2600, 0.0
      %v2633 = vsel %vm1699, %v2601, 0.0
      %v2634 = vsel %vm1700, %v2602, 0.0
      %v2635 = vsel %vm1701, %v2603, 0.0
      %v2636 = vsel %vm1702, %v2604, 0.0
      %v2637 = vsel %vm1703, %v2605, 0.0
      %v2638 = vsel %vm1704, %v2606, 0.0
      %v2639 = vsel %vm1705, %v2607, 0.0
      %v2640 = vsel %vm1706, %v2608, 0.0
      %v2641 = vsel %vm1707, %v2609, 0.0
      %v2642 = vsel %vm1708, %v2610, 0.0
      %v2643 = vsel %vm1709, %v2611, 0.0
      %v2644 = vsel %vm1710, %v2612, 0.0
      %v2645 = vsel %vm1711, %v2613, 0.0
      %v2646 = vsel %vm1712, %v2614, 0.0
      %v2647 = vsel %vm1713, %v2615, 0.0
      %v2648 = vsel %vm1714, %v2616, 0.0
      %v2649 = vsel %vm1715, %v2617, 0.0
      %v2650 = vsel %vm1716, %v2618, 0.0
      %v2651 = vsel %vm1717, %v2619, 0.0
      %v2652 = vsel %vm1718, %v2620, 0.0
      %v2653 = vsel %vm1719, %v2621, 0.0
      %v2654 = vsel %vm1720, %v2622, 0.0
      %v2655 = vsel %vm1721, %v2623, 0.0
      %v2656 = vsel %vm1722, %v2624, 0.0
      %v2657 = vsel %vm1723, %v2625, 0.0
      %v2658 = vsel %vm1724, %v2626, 0.0
      %v2659 = vsel %vm1725, %v2627, 0.0
      %v2660 = vsel %vm1726, %v2628, 0.0
      %s2661 = scalar_lea.vmem %s7, 16
      %v2662 = vld [vmem:[%s2661] sm:$0x3]
      %v2663 = vpack.c.bf16 %v2630, %v2629
      %v2664 = vpack.c.bf16 %v2632, %v2631
      %v2665 = vpack.c.bf16 %v2634, %v2633
      %v2666 = vpack.c.bf16 %v2636, %v2635
      %v2667 = vpack.c.bf16 %v2638, %v2637
      %v2668 = vpack.c.bf16 %v2640, %v2639
      %v2669 = vpack.c.bf16 %v2642, %v2641
      %v2670 = vpack.c.bf16 %v2644, %v2643
      %v2671 = vpack.c.bf16 %v2646, %v2645
      %v2672 = vpack.c.bf16 %v2648, %v2647
      %v2673 = vpack.c.bf16 %v2650, %v2649
      %v2674 = vpack.c.bf16 %v2652, %v2651
      %v2675 = vpack.c.bf16 %v2654, %v2653
      %v2676 = vpack.c.bf16 %v2656, %v2655
      %v2677 = vpack.c.bf16 %v2658, %v2657
      %v2678 = vpack.c.bf16 %v2660, %v2659
      %v2680 = vsel %vm762, %v2662, 0
      %v2683 = vsel %vm762, %v2663, 0
      %v2686 = vsel %vm762, %v2664, 0
      %v2689 = vsel %vm762, %v2665, 0
      %v2692 = vsel %vm762, %v2666, 0
      %v2695 = vsel %vm762, %v2667, 0
      %v2698 = vsel %vm762, %v2668, 0
      %v2701 = vsel %vm762, %v2669, 0
      %v2704 = vsel %vm762, %v2670, 0
      %v2707 = vsel %vm762, %v2671, 0
      %v2710 = vsel %vm762, %v2672, 0
      %v2713 = vsel %vm762, %v2673, 0
      %v2716 = vsel %vm762, %v2674, 0
      %v2719 = vsel %vm762, %v2675, 0
      %v2722 = vsel %vm762, %v2676, 0
      %v2725 = vsel %vm762, %v2677, 0
      %v2728 = vsel %vm762, %v2678, 0
      %2730 = vmatpush.bf16.xpose.msra.mxu0 %v2704
      %2731 = vmatpush.bf16.xpose.msra.mxu0 %v2701
      %2732 = vmatpush.bf16.xpose.msra.mxu0 %v2698
      %2733 = vmatpush.bf16.xpose.msra.mxu0 %v2695
      %2734 = vmatpush.bf16.xpose.msra.mxu0 %v2692
      %2735 = vmatpush.bf16.xpose.msra.mxu0 %v2689
      %2736 = vmatpush.bf16.xpose.msra.mxu0 %v2686
      %2737 = vmatpush.bf16.xpose.msra.mxu0 %v2683
      %2738 = vmatmul.bf16.gmra.mxu0 %v2680
      %v2739 = vpop.f32.mrf.mxu0
      %v2740 = vadd.f32 0.0, %v2739
      %v2741 = vpop.f32.mrf.mxu0
      %2742 = vdwg.mxu0
      %2743 = vmatpush.bf16.xpose.msra.mxu0 %v2728
      %2744 = vmatpush.bf16.xpose.msra.mxu0 %v2725
      %2745 = vmatpush.bf16.xpose.msra.mxu0 %v2722
      %2746 = vmatpush.bf16.xpose.msra.mxu0 %v2719
      %2747 = vmatpush.bf16.xpose.msra.mxu0 %v2716
      %2748 = vmatpush.bf16.xpose.msra.mxu0 %v2713
      %2749 = vmatpush.bf16.xpose.msra.mxu0 %v2710
      %2750 = vmatpush.bf16.xpose.msra.mxu0 %v2707
      %2751 = vmatmul.bf16.gmra.mxu0 %v2680
      %v2752 = vpop.f32.mrf.mxu0
      %v2753 = vadd.f32 0.0, %v2752
      %v2754 = vpop.f32.mrf.mxu0
      %2755 = vdwg.mxu0
      %v2756 = vadd.f32 %v2595, %v2740
      %v2757 = vadd.f32 %v2596, %v2753
      %v2758 = vld [vmem:[%s8] sm:$0xf]
      %2760 = vset.pattern.permute.xlu0 0
      %2761 = vperm.xlu0 %2760, %v2758
      %v2762 = vpop.permute.xlu0 %2761
      %v2764 = vadd.f32 %v2756, %v2762
      %v2765 = vadd.f32 %v2757, %v2762
      %v2768 = vrot.slane %v2764, 4
      %v2769 = vrot.slane %v2765, 4
      %2772 = vst [vmem:[%s352] sm:$0xf0] %v2768
      %2773 = vst [vmem:[%s352 + $0x8] sm:$0xf0] %v2769
      %p2774 = scmp.lt.s32.totalorder %s20, 1
      %s2775 = scalar_select %p2774, %s20, 1
      %s2776 = smul.addr %s2775, 2
      %s2777 = smul.addr %s2776, 8
      %s2778 = scalar_lea.vmem %s9, %s2777
      // Predicated region
      $region57: #{dense_layer_forward.3} parent=55 // pred_check
        %p2779 = pneg %p237
      $region58: #{dense_layer_forward.3} parent=55 // pred_check_branch
        %2781 = sbr.rel (%p2779) target = $region60
      $region59: #{dense_layer_forward.3} parent=55 // pred_region
        _
      $region60: #{dense_layer_forward.3} parent=55 // pred_fallthru
        _
    $region56: #{dense_layer_forward.3} parent=5 // pred_fallthru
      _
    %p2782 = scmp.le.s32.totalorder 2, %s15
    // Predicated region
    $region61: #{dense_layer_forward.3} parent=5 // pred_check
      %p2783 = pneg %p2782
    $region62: #{dense_layer_forward.3} parent=5 // pred_check_branch
      %2785 = sbr.rel (%p2783) target = $region64
    $region63: #{dense_layer_forward.3} parent=5 // pred_region
      %s2786 = ssub.s32 %s15, 2
      // Predicated region
      $region65: #{dense_layer_forward.3} parent=63 // pred_check
        %p2787 = pneg %p243
      $region66: #{dense_layer_forward.3} parent=63 // pred_check_branch
        %2789 = sbr.rel (%p2787) target = $region68
      $region67: #{dense_layer_forward.3} parent=63 // pred_region
        %p2790 = scmp.lt.s32.totalorder %s21, 1
        %s2791 = scalar_select %p2790, %s21, 1
        %s2792 = smul.addr %s2791, 2
        %s2793 = smul.addr %s2792, 8
        %s2794 = scalar_lea.vmem %s9, %s2793
      $region68: #{dense_layer_forward.3} parent=63 // pred_fallthru
        _
    $region64: #{dense_layer_forward.3} parent=5 // pred_fallthru
      _
  $region6: #{dense_layer_forward.3} parent=0 // loop_footer
    %s19 = sadd.s32 1, %s15
  $region7: #{dense_layer_forward.3} parent=0 // loop_footer_branch
    %14 = sbr.rel target = $region3
  $region8: #{dense_layer_forward.3} parent=0 // loop_exit
    _

</llo_original>
